<compile_context>
chip_gen: v5e
topology: v5e:2x2
jax: 0.10.0
libtpu: 0.0.40
codegen_flags: <defaults>
</compile_context>

<pallas_src>
import jax
import jax.numpy as jnp
import numpy as np
from jax.experimental import pallas as pl
from jax.experimental.pallas import tpu as pltpu

# ----- static config (mirrors config.* fields used by the forward pass) -----
DEC_NUM_LAYERS = 2      # config.dec_num_layers
HIDDEN_SIZE    = 128    # config.hidden_size
EMB_SIZE       = 128    # config.emb_size
TGT_VOCAB      = 256    # config.tgt_vocab_size
BATCH          = 8
DECODE_STEPS   = 8      # decode steps fused into one kernel invocation
# config.cell='gru', config.attention='None', config.global_emb=False,
# config.mask=False, eval mode -> dropout is identity.


def _sigmoid(x):
    # 1/(1+exp(-x)): EUP exp + VPU; avoids relying on lax.logistic lowering.
    return 1.0 / (1.0 + jnp.exp(-x))


def decoder_kernel(ids_ref, h0_ref, embw0_ref, whh0_ref, w1_ref,
                   b0_ref, bhn0_ref, brz1_ref, bin1_ref, bhn1_ref,
                   wlin_ref, blin_ref, scores_ref, hout_ref):
    """Whole T-step decode in one invocation; weights stay VMEM-resident."""
    H, B, V = HIDDEN_SIZE, BATCH, TGT_VOCAB
    TB = ids_ref.shape[0]
    T = TB // B

    # ---- hoisted, loop-invariant work --------------------------------------
    # one-hot over the full (T*B) token block; embedding already folded into
    # layer-0's input weights on the host, so one K=256 matmul gives every
    # step's layer-0 input projection up front (off the recurrence chain).
    iota = jax.lax.broadcasted_iota(jnp.int32, (TB, V), 1)
    onehot = (ids_ref[...] == iota).astype(jnp.bfloat16)                # (T*B, V)
    gi0_all = (jnp.dot(onehot, embw0_ref[...],
                       preferred_element_type=jnp.float32)
               + b0_ref[...])                                           # (T*B, 3H) f32

    whh0 = whh0_ref[...]          # (H, 3H)   bf16
    w1   = w1_ref[...]            # (2H, 4H)  bf16
    bhn0 = bhn0_ref[...]          # (1, H)    f32
    brz1 = brz1_ref[...]          # (1, 2H)   f32
    bin1 = bin1_ref[...]          # (1, H)    f32
    bhn1 = bhn1_ref[...]          # (1, H)    f32

    h0 = h0_ref[0]                # (B, H) f32  layer-0 state
    h1 = h0_ref[1]                # (B, H) f32  layer-1 state

    h1_steps = []
    for t in range(T):            # static unroll: full visibility for the LLO scheduler
        # ---- layer 0 (nn.GRUCell, gate order r,z,n) ----
        gi0 = gi0_all[t * B:(t + 1) * B]                                # (B, 3H) static slice
        gh0 = jnp.dot(h0.astype(jnp.bfloat16), whh0,
                      preferred_element_type=jnp.float32)               # (B, 3H)
        rz0 = _sigmoid(gi0[:, :2 * H] + gh0[:, :2 * H])                 # biases pre-folded
        r0, z0 = rz0[:, :H], rz0[:, H:]
        n0 = jnp.tanh(gi0[:, 2 * H:] + r0 * (gh0[:, 2 * H:] + bhn0))
        h0 = (1.0 - z0) * n0 + z0 * h0
        # dropout(p) between layers is identity in eval mode.

        # ---- layer 1: one augmented K=2H=256 matmul ----
        #   g1 = [x | h] @ W1_aug = (gi_r+gh_r | gi_z+gh_z | gi_n | gh_n)
        lhs1 = jnp.concatenate([h0, h1], axis=1).astype(jnp.bfloat16)   # (B, 2H)
        g1 = jnp.dot(lhs1, w1, preferred_element_type=jnp.float32)      # (B, 4H)
        rz1 = _sigmoid(g1[:, :2 * H] + brz1)
        r1, z1 = rz1[:, :H], rz1[:, H:]
        n1 = jnp.tanh(g1[:, 2 * H:3 * H] + bin1 + r1 * (g1[:, 3 * H:] + bhn1))
        h1 = (1.0 - z1) * n1 + z1 * h1
        h1_steps.append(h1)

    # ---- compute_score: all T steps in one matmul + one lane-dense store ----
    h1_all = jnp.concatenate(h1_steps, axis=0).astype(jnp.bfloat16)     # (T*B, H)
    scores_ref[...] = (jnp.dot(h1_all, wlin_ref[...],
                               preferred_element_type=jnp.float32)
                       + blin_ref[...])                                 # (T*B, V)

    hout_ref[0] = h0
    hout_ref[1] = h1


def rnn_decoder_decode(token_ids, h0, params):
    """Runs T fused decode steps (step t consumes step t-1's state).
    T == 1 is exactly rnn_decoder.forward(input, state)."""
    T, B = token_ids.shape
    assert B == BATCH
    L, H, V = DEC_NUM_LAYERS, HIDDEN_SIZE, TGT_VOCAB
    ids = token_ids.astype(jnp.int32).reshape(T * B, 1)

    vmem = pl.BlockSpec(memory_space=pltpu.MemorySpace.VMEM)   # whole array, VMEM resident

    scores_flat, h_out = pl.pallas_call(
        decoder_kernel,
        out_shape=(jax.ShapeDtypeStruct((T * B, V), jnp.float32),
                   jax.ShapeDtypeStruct((L, B, H), jnp.float32)),
        in_specs=[vmem] * 12,
        out_specs=(vmem, vmem),
        # TODO(synk): on v7x with >=2 independent sequences/beams, add a parallel
        #             beam axis (or core_map) so the second TensorCore is used.
    )(ids, h0,
      params["emb_w_ih0"], params["w_hh0"], params["w1_aug"],
      params["b0"], params["b_hn0"], params["b_rz1"], params["b_in1"],
      params["b_hn1"], params["w_lin"], params["b_lin"])

    attn_weights = None            # config.attention == 'None'
    return scores_flat.reshape(T, B, V), h_out, attn_weights


def rnn_decoder_forward(token_ids, h0, params):
    """Mirrors rnn_decoder.forward(input, state) -> (scores, state, attn_weights)."""
    scores, h1, attn = rnn_decoder_decode(token_ids[None, :], h0, params)
    return scores[0], h1, attn


# ---------------------------------------------------------------------------
# Parameter construction
# ---------------------------------------------------------------------------
def init_reference_params(key):
    """f32 parameters in PyTorch-equivalent layout (weights pre-transposed to (in, 3H),
    gate order r,z,n), used both as the reference and as the source of kernel params."""
    H, E, V, L = HIDDEN_SIZE, EMB_SIZE, TGT_VOCAB, DEC_NUM_LAYERS
    ks = jax.random.split(key, 12)
    k = 1.0 / jnp.sqrt(jnp.float32(H))
    in_sizes = [E] + [H] * (L - 1)
    p = {
        "emb": jax.random.normal(ks[0], (V, E), jnp.float32),            # nn.Embedding.weight
        "w_ih": [jax.random.uniform(ks[1 + 4 * l], (in_sizes[l], 3 * H),
                                    jnp.float32, -k, k) for l in range(L)],
        "w_hh": [jax.random.uniform(ks[2 + 4 * l], (H, 3 * H),
                                    jnp.float32, -k, k) for l in range(L)],
        "b_ih": [jax.random.uniform(ks[3 + 4 * l], (3 * H,),
                                    jnp.float32, -k, k) for l in range(L)],
        "b_hh": [jax.random.uniform(ks[4 + 4 * l], (3 * H,),
                                    jnp.float32, -k, k) for l in range(L)],
        "w_lin": jax.random.uniform(ks[9], (H, V), jnp.float32, -k, k),   # linear.weight.T
        "b_lin": jax.random.uniform(ks[10], (V,), jnp.float32, -k, k),
    }
    return p


def prepare_kernel_params(ref):
    """Host-side folding / fusing of the reference params into kernel layout (bf16 weights)."""
    H, L = HIDDEN_SIZE, DEC_NUM_LAYERS
    assert L == 2, "kernel is specialized for 2 stacked GRU layers"
    w_ih0, w_hh0 = ref["w_ih"][0], ref["w_hh"][0]
    w_ih1, w_hh1 = ref["w_ih"][1], ref["w_hh"][1]
    b_ih0, b_hh0 = ref["b_ih"][0], ref["b_hh"][0]
    b_ih1, b_hh1 = ref["b_ih"][1], ref["b_hh"][1]

    # Embedding fold: onehot(ids) @ (emb @ W_ih0) == emb[ids] @ W_ih0.
    emb_w_ih0 = (ref["emb"] @ w_ih0).astype(jnp.bfloat16)                       # (V, 3H)

    # Layer-0 input-side bias row: r/z biases fully pre-folded (b_i + b_h), n keeps b_in.
    b0 = jnp.concatenate([b_ih0[:2 * H] + b_hh0[:2 * H], b_ih0[2 * H:]])[None]  # (1, 3H)
    b_hn0 = b_hh0[2 * H:][None]                                                 # (1, H)

    # Layer-1 augmented weight: [x | h] @ W1_aug -> (gi_r+gh_r | gi_z+gh_z | gi_n | gh_n).
    zeros = jnp.zeros((H, H), jnp.float32)
    top = jnp.concatenate([w_ih1[:, :2 * H], w_ih1[:, 2 * H:], zeros], axis=1)  # rows for x
    bot = jnp.concatenate([w_hh1[:, :2 * H], zeros, w_hh1[:, 2 * H:]], axis=1)  # rows for h
    w1_aug = jnp.concatenate([top, bot], axis=0).astype(jnp.bfloat16)           # (2H, 4H)

    return dict(
        emb_w_ih0=emb_w_ih0,
        w_hh0=w_hh0.astype(jnp.bfloat16),
        w1_aug=w1_aug,
        b0=b0,
        b_hn0=b_hn0,
        b_rz1=(b_ih1[:2 * H] + b_hh1[:2 * H])[None],
        b_in1=b_ih1[2 * H:][None],
        b_hn1=b_hh1[2 * H:][None],
        w_lin=ref["w_lin"].astype(jnp.bfloat16),
        b_lin=ref["b_lin"][None],
    )


def rnn_decoder_reference(token_ids, h0, ref):
    """Pure-JAX f32 reference of the PyTorch module (GRU cell, eval mode, no attention)."""
    H = HIDDEN_SIZE
    T, _ = token_ids.shape
    h = [h0[l] for l in range(DEC_NUM_LAYERS)]
    scores = []
    for t in range(T):
        x = ref["emb"][token_ids[t]]                                     # embedding lookup
        for l in range(DEC_NUM_LAYERS):
            gi = x @ ref["w_ih"][l] + ref["b_ih"][l]
            gh = h[l] @ ref["w_hh"][l] + ref["b_hh"][l]
            r = jax.nn.sigmoid(gi[:, :H] + gh[:, :H])
            z = jax.nn.sigmoid(gi[:, H:2 * H] + gh[:, H:2 * H])
            n = jnp.tanh(gi[:, 2 * H:] + r * gh[:, 2 * H:])
            h[l] = (1.0 - z) * n + z * h[l]
            x = h[l]                                                     # dropout identity
        scores.append(x @ ref["w_lin"] + ref["b_lin"])
    return jnp.stack(scores), jnp.stack(h)


if __name__ == "__main__":
    key = jax.random.PRNGKey(0)
    k_par, k_tok, k_h0 = jax.random.split(key, 3)

    ref_params = init_reference_params(k_par)
    params = prepare_kernel_params(ref_params)

    token_seq = jax.random.randint(k_tok, (DECODE_STEPS, BATCH), 0, TGT_VOCAB,
                                   dtype=jnp.int32)
    h0 = jax.random.normal(k_h0, (DEC_NUM_LAYERS, BATCH, HIDDEN_SIZE), jnp.float32)

    # Fused multi-step decode: one kernel launch, weights DMA'd to VMEM once.
    scores_seq, h_T, attn = jax.jit(rnn_decoder_decode)(token_seq, h0, params)
    jax.block_until_ready((scores_seq, h_T))
    assert scores_seq.shape == (DECODE_STEPS, BATCH, TGT_VOCAB)
    assert h_T.shape == (DEC_NUM_LAYERS, BATCH, HIDDEN_SIZE)
    assert attn is None

    # Single-step call matching the PyTorch module's forward signature.
    scores1, h1, attn1 = jax.jit(rnn_decoder_forward)(token_seq[0], h0, params)
    jax.block_until_ready((scores1, h1))
    assert scores1.shape == (BATCH, TGT_VOCAB)
    assert h1.shape == (DEC_NUM_LAYERS, BATCH, HIDDEN_SIZE)
    assert attn1 is None

    # Numerical check against a pure-JAX f32 reference of the PyTorch math
    # (kernel weights are bf16 -> loose tolerance).
    ref_scores, ref_h = rnn_decoder_reference(token_seq, h0, ref_params)
    np.testing.assert_allclose(np.asarray(scores_seq), np.asarray(ref_scores),
                               atol=5e-2, rtol=5e-2)
    np.testing.assert_allclose(np.asarray(h_T), np.asarray(ref_h),
                               atol=5e-2, rtol=5e-2)

    print("KERNEL_OK")
</pallas_src>

<mosaic_0001>
module attributes {stable_mosaic.version = 11 : i64} {
  func.func @decoder_kernel(%arg0: memref<64x1xi32, #tpu.memory_space<vmem>>, %arg1: memref<2x8x128xf32, #tpu.memory_space<vmem>>, %arg2: memref<256x384xbf16, #tpu.memory_space<vmem>>, %arg3: memref<128x384xbf16, #tpu.memory_space<vmem>>, %arg4: memref<256x512xbf16, #tpu.memory_space<vmem>>, %arg5: memref<1x384xf32, #tpu.memory_space<vmem>>, %arg6: memref<1x128xf32, #tpu.memory_space<vmem>>, %arg7: memref<1x256xf32, #tpu.memory_space<vmem>>, %arg8: memref<1x128xf32, #tpu.memory_space<vmem>>, %arg9: memref<1x128xf32, #tpu.memory_space<vmem>>, %arg10: memref<128x256xbf16, #tpu.memory_space<vmem>>, %arg11: memref<1x256xf32, #tpu.memory_space<vmem>>, %arg12: memref<64x256xf32, #tpu.memory_space<vmem>>, %arg13: memref<2x8x128xf32, #tpu.memory_space<vmem>>) attributes {dimension_semantics = [], scalar_prefetch = 0 : i64, scratch_operands = 0 : i64, tpu.core_type = #tpu.core_type<tc>} {
    %0 = tpu.iota {dimensions = array<i32: 1>} : vector<64x256xi32>
    %c0 = arith.constant 0 : index
    %c0_0 = arith.constant 0 : index
    %1 = vector.load %arg0[%c0, %c0_0] : memref<64x1xi32, #tpu.memory_space<vmem>>, vector<64x1xi32>
    %2 = vector.broadcast %1 : vector<64x1xi32> to vector<64x256xi32>
    %3 = arith.cmpi eq, %2, %0 : vector<64x256xi32>
    %4 = arith.extui %3 : vector<64x256xi1> to vector<64x256xi32>
    %5 = arith.sitofp %4 : vector<64x256xi32> to vector<64x256xf32>
    %6 = arith.truncf %5 : vector<64x256xf32> to vector<64x256xbf16>
    %c0_1 = arith.constant 0 : index
    %c0_2 = arith.constant 0 : index
    %7 = vector.load %arg2[%c0_1, %c0_2] : memref<256x384xbf16, #tpu.memory_space<vmem>>, vector<256x384xbf16>
    %cst = arith.constant dense<0.000000e+00> : vector<64x384xf32>
    %8 = tpu.matmul %6, %7, %cst {dimension_numbers = #tpu.dot_dimension_numbers<[1], [0], [0], [1], [0, 0, 1, 1], [], []>} : vector<64x256xbf16>, vector<256x384xbf16>, vector<64x384xf32> -> vector<64x384xf32>
    %c0_3 = arith.constant 0 : index
    %c0_4 = arith.constant 0 : index
    %9 = vector.load %arg5[%c0_3, %c0_4] : memref<1x384xf32, #tpu.memory_space<vmem>>, vector<1x384xf32>
    %10 = vector.broadcast %9 : vector<1x384xf32> to vector<64x384xf32>
    %11 = arith.addf %8, %10 : vector<64x384xf32>
    %c0_5 = arith.constant 0 : index
    %c0_6 = arith.constant 0 : index
    %12 = vector.load %arg3[%c0_5, %c0_6] : memref<128x384xbf16, #tpu.memory_space<vmem>>, vector<128x384xbf16>
    %c0_7 = arith.constant 0 : index
    %c0_8 = arith.constant 0 : index
    %13 = vector.load %arg4[%c0_7, %c0_8] : memref<256x512xbf16, #tpu.memory_space<vmem>>, vector<256x512xbf16>
    %c0_9 = arith.constant 0 : index
    %c0_10 = arith.constant 0 : index
    %14 = vector.load %arg6[%c0_9, %c0_10] : memref<1x128xf32, #tpu.memory_space<vmem>>, vector<1x128xf32>
    %c0_11 = arith.constant 0 : index
    %c0_12 = arith.constant 0 : index
    %15 = vector.load %arg7[%c0_11, %c0_12] : memref<1x256xf32, #tpu.memory_space<vmem>>, vector<1x256xf32>
    %c0_13 = arith.constant 0 : index
    %c0_14 = arith.constant 0 : index
    %16 = vector.load %arg8[%c0_13, %c0_14] : memref<1x128xf32, #tpu.memory_space<vmem>>, vector<1x128xf32>
    %c0_15 = arith.constant 0 : index
    %c0_16 = arith.constant 0 : index
    %17 = vector.load %arg9[%c0_15, %c0_16] : memref<1x128xf32, #tpu.memory_space<vmem>>, vector<1x128xf32>
    %c0_17 = arith.constant 0 : index
    %c0_18 = arith.constant 0 : index
    %c0_19 = arith.constant 0 : index
    %18 = vector.load %arg1[%c0_17, %c0_18, %c0_19] : memref<2x8x128xf32, #tpu.memory_space<vmem>>, vector<1x8x128xf32>
    %19 = vector.shape_cast %18 : vector<1x8x128xf32> to vector<8x128xf32>
    %c1 = arith.constant 1 : index
    %c0_20 = arith.constant 0 : index
    %c0_21 = arith.constant 0 : index
    %20 = vector.load %arg1[%c1, %c0_20, %c0_21] : memref<2x8x128xf32, #tpu.memory_space<vmem>>, vector<1x8x128xf32>
    %21 = vector.shape_cast %20 : vector<1x8x128xf32> to vector<8x128xf32>
    %22 = vector.extract_strided_slice %11 {offsets = [0, 0], sizes = [8, 384], strides = [1, 1]} : vector<64x384xf32> to vector<8x384xf32>
    %23 = arith.truncf %19 : vector<8x128xf32> to vector<8x128xbf16>
    %cst_22 = arith.constant dense<0.000000e+00> : vector<8x384xf32>
    %24 = tpu.matmul %23, %12, %cst_22 {dimension_numbers = #tpu.dot_dimension_numbers<[1], [0], [0], [1], [0, 0, 1, 1], [], []>} : vector<8x128xbf16>, vector<128x384xbf16>, vector<8x384xf32> -> vector<8x384xf32>
    %25 = vector.extract_strided_slice %22 {offsets = [0, 0], sizes = [8, 256], strides = [1, 1]} : vector<8x384xf32> to vector<8x256xf32>
    %26 = vector.extract_strided_slice %24 {offsets = [0, 0], sizes = [8, 256], strides = [1, 1]} : vector<8x384xf32> to vector<8x256xf32>
    %27 = arith.addf %25, %26 : vector<8x256xf32>
    %cst_23 = arith.constant 0.000000e+00 : f32
    %28 = vector.broadcast %cst_23 : f32 to vector<8x256xf32>
    %29 = arith.subf %28, %27 : vector<8x256xf32>
    %30 = math.exp %29 : vector<8x256xf32>
    %cst_24 = arith.constant 1.000000e+00 : f32
    %31 = vector.broadcast %cst_24 : f32 to vector<8x256xf32>
    %32 = arith.addf %31, %30 : vector<8x256xf32>
    %cst_25 = arith.constant 1.000000e+00 : f32
    %33 = vector.broadcast %cst_25 : f32 to vector<8x256xf32>
    %34 = arith.divf %33, %32 : vector<8x256xf32>
    %35 = vector.extract_strided_slice %34 {offsets = [0, 0], sizes = [8, 128], strides = [1, 1]} : vector<8x256xf32> to vector<8x128xf32>
    %36 = vector.extract_strided_slice %34 {offsets = [0, 128], sizes = [8, 128], strides = [1, 1]} : vector<8x256xf32> to vector<8x128xf32>
    %37 = vector.extract_strided_slice %22 {offsets = [0, 256], sizes = [8, 128], strides = [1, 1]} : vector<8x384xf32> to vector<8x128xf32>
    %38 = vector.extract_strided_slice %24 {offsets = [0, 256], sizes = [8, 128], strides = [1, 1]} : vector<8x384xf32> to vector<8x128xf32>
    %39 = vector.broadcast %14 : vector<1x128xf32> to vector<8x128xf32>
    %40 = arith.addf %38, %39 : vector<8x128xf32>
    %41 = arith.mulf %35, %40 : vector<8x128xf32>
    %42 = arith.addf %37, %41 : vector<8x128xf32>
    %43 = math.tanh %42 : vector<8x128xf32>
    %cst_26 = arith.constant 1.000000e+00 : f32
    %44 = vector.broadcast %cst_26 : f32 to vector<8x128xf32>
    %45 = arith.subf %44, %36 : vector<8x128xf32>
    %46 = arith.mulf %45, %43 : vector<8x128xf32>
    %47 = arith.mulf %36, %19 : vector<8x128xf32>
    %48 = arith.addf %46, %47 : vector<8x128xf32>
    %49 = tpu.concatenate %48, %21 in 1 : vector<8x128xf32>, vector<8x128xf32> -> vector<8x256xf32>
    %50 = arith.truncf %49 : vector<8x256xf32> to vector<8x256xbf16>
    %cst_27 = arith.constant dense<0.000000e+00> : vector<8x512xf32>
    %51 = tpu.matmul %50, %13, %cst_27 {dimension_numbers = #tpu.dot_dimension_numbers<[1], [0], [0], [1], [0, 0, 1, 1], [], []>} : vector<8x256xbf16>, vector<256x512xbf16>, vector<8x512xf32> -> vector<8x512xf32>
    %52 = vector.extract_strided_slice %51 {offsets = [0, 0], sizes = [8, 256], strides = [1, 1]} : vector<8x512xf32> to vector<8x256xf32>
    %53 = vector.broadcast %15 : vector<1x256xf32> to vector<8x256xf32>
    %54 = arith.addf %52, %53 : vector<8x256xf32>
    %cst_28 = arith.constant 0.000000e+00 : f32
    %55 = vector.broadcast %cst_28 : f32 to vector<8x256xf32>
    %56 = arith.subf %55, %54 : vector<8x256xf32>
    %57 = math.exp %56 : vector<8x256xf32>
    %cst_29 = arith.constant 1.000000e+00 : f32
    %58 = vector.broadcast %cst_29 : f32 to vector<8x256xf32>
    %59 = arith.addf %58, %57 : vector<8x256xf32>
    %cst_30 = arith.constant 1.000000e+00 : f32
    %60 = vector.broadcast %cst_30 : f32 to vector<8x256xf32>
    %61 = arith.divf %60, %59 : vector<8x256xf32>
    %62 = vector.extract_strided_slice %61 {offsets = [0, 0], sizes = [8, 128], strides = [1, 1]} : vector<8x256xf32> to vector<8x128xf32>
    %63 = vector.extract_strided_slice %61 {offsets = [0, 128], sizes = [8, 128], strides = [1, 1]} : vector<8x256xf32> to vector<8x128xf32>
    %64 = vector.extract_strided_slice %51 {offsets = [0, 256], sizes = [8, 128], strides = [1, 1]} : vector<8x512xf32> to vector<8x128xf32>
    %65 = vector.broadcast %16 : vector<1x128xf32> to vector<8x128xf32>
    %66 = arith.addf %64, %65 : vector<8x128xf32>
    %67 = vector.extract_strided_slice %51 {offsets = [0, 384], sizes = [8, 128], strides = [1, 1]} : vector<8x512xf32> to vector<8x128xf32>
    %68 = vector.broadcast %17 : vector<1x128xf32> to vector<8x128xf32>
    %69 = arith.addf %67, %68 : vector<8x128xf32>
    %70 = arith.mulf %62, %69 : vector<8x128xf32>
    %71 = arith.addf %66, %70 : vector<8x128xf32>
    %72 = math.tanh %71 : vector<8x128xf32>
    %cst_31 = arith.constant 1.000000e+00 : f32
    %73 = vector.broadcast %cst_31 : f32 to vector<8x128xf32>
    %74 = arith.subf %73, %63 : vector<8x128xf32>
    %75 = arith.mulf %74, %72 : vector<8x128xf32>
    %76 = arith.mulf %63, %21 : vector<8x128xf32>
    %77 = arith.addf %75, %76 : vector<8x128xf32>
    %78 = vector.extract_strided_slice %11 {offsets = [8, 0], sizes = [8, 384], strides = [1, 1]} : vector<64x384xf32> to vector<8x384xf32>
    %79 = arith.truncf %48 : vector<8x128xf32> to vector<8x128xbf16>
    %cst_32 = arith.constant dense<0.000000e+00> : vector<8x384xf32>
    %80 = tpu.matmul %79, %12, %cst_32 {dimension_numbers = #tpu.dot_dimension_numbers<[1], [0], [0], [1], [0, 0, 1, 1], [], []>} : vector<8x128xbf16>, vector<128x384xbf16>, vector<8x384xf32> -> vector<8x384xf32>
    %81 = vector.extract_strided_slice %78 {offsets = [0, 0], sizes = [8, 256], strides = [1, 1]} : vector<8x384xf32> to vector<8x256xf32>
    %82 = vector.extract_strided_slice %80 {offsets = [0, 0], sizes = [8, 256], strides = [1, 1]} : vector<8x384xf32> to vector<8x256xf32>
    %83 = arith.addf %81, %82 : vector<8x256xf32>
    %cst_33 = arith.constant 0.000000e+00 : f32
    %84 = vector.broadcast %cst_33 : f32 to vector<8x256xf32>
    %85 = arith.subf %84, %83 : vector<8x256xf32>
    %86 = math.exp %85 : vector<8x256xf32>
    %cst_34 = arith.constant 1.000000e+00 : f32
    %87 = vector.broadcast %cst_34 : f32 to vector<8x256xf32>
    %88 = arith.addf %87, %86 : vector<8x256xf32>
    %cst_35 = arith.constant 1.000000e+00 : f32
    %89 = vector.broadcast %cst_35 : f32 to vector<8x256xf32>
    %90 = arith.divf %89, %88 : vector<8x256xf32>
    %91 = vector.extract_strided_slice %90 {offsets = [0, 0], sizes = [8, 128], strides = [1, 1]} : vector<8x256xf32> to vector<8x128xf32>
    %92 = vector.extract_strided_slice %90 {offsets = [0, 128], sizes = [8, 128], strides = [1, 1]} : vector<8x256xf32> to vector<8x128xf32>
    %93 = vector.extract_strided_slice %78 {offsets = [0, 256], sizes = [8, 128], strides = [1, 1]} : vector<8x384xf32> to vector<8x128xf32>
    %94 = vector.extract_strided_slice %80 {offsets = [0, 256], sizes = [8, 128], strides = [1, 1]} : vector<8x384xf32> to vector<8x128xf32>
    %95 = vector.broadcast %14 : vector<1x128xf32> to vector<8x128xf32>
    %96 = arith.addf %94, %95 : vector<8x128xf32>
    %97 = arith.mulf %91, %96 : vector<8x128xf32>
    %98 = arith.addf %93, %97 : vector<8x128xf32>
    %99 = math.tanh %98 : vector<8x128xf32>
    %cst_36 = arith.constant 1.000000e+00 : f32
    %100 = vector.broadcast %cst_36 : f32 to vector<8x128xf32>
    %101 = arith.subf %100, %92 : vector<8x128xf32>
    %102 = arith.mulf %101, %99 : vector<8x128xf32>
    %103 = arith.mulf %92, %48 : vector<8x128xf32>
    %104 = arith.addf %102, %103 : vector<8x128xf32>
    %105 = tpu.concatenate %104, %77 in 1 : vector<8x128xf32>, vector<8x128xf32> -> vector<8x256xf32>
    %106 = arith.truncf %105 : vector<8x256xf32> to vector<8x256xbf16>
    %cst_37 = arith.constant dense<0.000000e+00> : vector<8x512xf32>
    %107 = tpu.matmul %106, %13, %cst_37 {dimension_numbers = #tpu.dot_dimension_numbers<[1], [0], [0], [1], [0, 0, 1, 1], [], []>} : vector<8x256xbf16>, vector<256x512xbf16>, vector<8x512xf32> -> vector<8x512xf32>
    %108 = vector.extract_strided_slice %107 {offsets = [0, 0], sizes = [8, 256], strides = [1, 1]} : vector<8x512xf32> to vector<8x256xf32>
    %109 = vector.broadcast %15 : vector<1x256xf32> to vector<8x256xf32>
    %110 = arith.addf %108, %109 : vector<8x256xf32>
    %cst_38 = arith.constant 0.000000e+00 : f32
    %111 = vector.broadcast %cst_38 : f32 to vector<8x256xf32>
    %112 = arith.subf %111, %110 : vector<8x256xf32>
    %113 = math.exp %112 : vector<8x256xf32>
    %cst_39 = arith.constant 1.000000e+00 : f32
    %114 = vector.broadcast %cst_39 : f32 to vector<8x256xf32>
    %115 = arith.addf %114, %113 : vector<8x256xf32>
    %cst_40 = arith.constant 1.000000e+00 : f32
    %116 = vector.broadcast %cst_40 : f32 to vector<8x256xf32>
    %117 = arith.divf %116, %115 : vector<8x256xf32>
    %118 = vector.extract_strided_slice %117 {offsets = [0, 0], sizes = [8, 128], strides = [1, 1]} : vector<8x256xf32> to vector<8x128xf32>
    %119 = vector.extract_strided_slice %117 {offsets = [0, 128], sizes = [8, 128], strides = [1, 1]} : vector<8x256xf32> to vector<8x128xf32>
    %120 = vector.extract_strided_slice %107 {offsets = [0, 256], sizes = [8, 128], strides = [1, 1]} : vector<8x512xf32> to vector<8x128xf32>
    %121 = vector.broadcast %16 : vector<1x128xf32> to vector<8x128xf32>
    %122 = arith.addf %120, %121 : vector<8x128xf32>
    %123 = vector.extract_strided_slice %107 {offsets = [0, 384], sizes = [8, 128], strides = [1, 1]} : vector<8x512xf32> to vector<8x128xf32>
    %124 = vector.broadcast %17 : vector<1x128xf32> to vector<8x128xf32>
    %125 = arith.addf %123, %124 : vector<8x128xf32>
    %126 = arith.mulf %118, %125 : vector<8x128xf32>
    %127 = arith.addf %122, %126 : vector<8x128xf32>
    %128 = math.tanh %127 : vector<8x128xf32>
    %cst_41 = arith.constant 1.000000e+00 : f32
    %129 = vector.broadcast %cst_41 : f32 to vector<8x128xf32>
    %130 = arith.subf %129, %119 : vector<8x128xf32>
    %131 = arith.mulf %130, %128 : vector<8x128xf32>
    %132 = arith.mulf %119, %77 : vector<8x128xf32>
    %133 = arith.addf %131, %132 : vector<8x128xf32>
    %134 = vector.extract_strided_slice %11 {offsets = [16, 0], sizes = [8, 384], strides = [1, 1]} : vector<64x384xf32> to vector<8x384xf32>
    %135 = arith.truncf %104 : vector<8x128xf32> to vector<8x128xbf16>
    %cst_42 = arith.constant dense<0.000000e+00> : vector<8x384xf32>
    %136 = tpu.matmul %135, %12, %cst_42 {dimension_numbers = #tpu.dot_dimension_numbers<[1], [0], [0], [1], [0, 0, 1, 1], [], []>} : vector<8x128xbf16>, vector<128x384xbf16>, vector<8x384xf32> -> vector<8x384xf32>
    %137 = vector.extract_strided_slice %134 {offsets = [0, 0], sizes = [8, 256], strides = [1, 1]} : vector<8x384xf32> to vector<8x256xf32>
    %138 = vector.extract_strided_slice %136 {offsets = [0, 0], sizes = [8, 256], strides = [1, 1]} : vector<8x384xf32> to vector<8x256xf32>
    %139 = arith.addf %137, %138 : vector<8x256xf32>
    %cst_43 = arith.constant 0.000000e+00 : f32
    %140 = vector.broadcast %cst_43 : f32 to vector<8x256xf32>
    %141 = arith.subf %140, %139 : vector<8x256xf32>
    %142 = math.exp %141 : vector<8x256xf32>
    %cst_44 = arith.constant 1.000000e+00 : f32
    %143 = vector.broadcast %cst_44 : f32 to vector<8x256xf32>
    %144 = arith.addf %143, %142 : vector<8x256xf32>
    %cst_45 = arith.constant 1.000000e+00 : f32
    %145 = vector.broadcast %cst_45 : f32 to vector<8x256xf32>
    %146 = arith.divf %145, %144 : vector<8x256xf32>
    %147 = vector.extract_strided_slice %146 {offsets = [0, 0], sizes = [8, 128], strides = [1, 1]} : vector<8x256xf32> to vector<8x128xf32>
    %148 = vector.extract_strided_slice %146 {offsets = [0, 128], sizes = [8, 128], strides = [1, 1]} : vector<8x256xf32> to vector<8x128xf32>
    %149 = vector.extract_strided_slice %134 {offsets = [0, 256], sizes = [8, 128], strides = [1, 1]} : vector<8x384xf32> to vector<8x128xf32>
    %150 = vector.extract_strided_slice %136 {offsets = [0, 256], sizes = [8, 128], strides = [1, 1]} : vector<8x384xf32> to vector<8x128xf32>
    %151 = vector.broadcast %14 : vector<1x128xf32> to vector<8x128xf32>
    %152 = arith.addf %150, %151 : vector<8x128xf32>
    %153 = arith.mulf %147, %152 : vector<8x128xf32>
    %154 = arith.addf %149, %153 : vector<8x128xf32>
    %155 = math.tanh %154 : vector<8x128xf32>
    %cst_46 = arith.constant 1.000000e+00 : f32
    %156 = vector.broadcast %cst_46 : f32 to vector<8x128xf32>
    %157 = arith.subf %156, %148 : vector<8x128xf32>
    %158 = arith.mulf %157, %155 : vector<8x128xf32>
    %159 = arith.mulf %148, %104 : vector<8x128xf32>
    %160 = arith.addf %158, %159 : vector<8x128xf32>
    %161 = tpu.concatenate %160, %133 in 1 : vector<8x128xf32>, vector<8x128xf32> -> vector<8x256xf32>
    %162 = arith.truncf %161 : vector<8x256xf32> to vector<8x256xbf16>
    %cst_47 = arith.constant dense<0.000000e+00> : vector<8x512xf32>
    %163 = tpu.matmul %162, %13, %cst_47 {dimension_numbers = #tpu.dot_dimension_numbers<[1], [0], [0], [1], [0, 0, 1, 1], [], []>} : vector<8x256xbf16>, vector<256x512xbf16>, vector<8x512xf32> -> vector<8x512xf32>
    %164 = vector.extract_strided_slice %163 {offsets = [0, 0], sizes = [8, 256], strides = [1, 1]} : vector<8x512xf32> to vector<8x256xf32>
    %165 = vector.broadcast %15 : vector<1x256xf32> to vector<8x256xf32>
    %166 = arith.addf %164, %165 : vector<8x256xf32>
    %cst_48 = arith.constant 0.000000e+00 : f32
    %167 = vector.broadcast %cst_48 : f32 to vector<8x256xf32>
    %168 = arith.subf %167, %166 : vector<8x256xf32>
    %169 = math.exp %168 : vector<8x256xf32>
    %cst_49 = arith.constant 1.000000e+00 : f32
    %170 = vector.broadcast %cst_49 : f32 to vector<8x256xf32>
    %171 = arith.addf %170, %169 : vector<8x256xf32>
    %cst_50 = arith.constant 1.000000e+00 : f32
    %172 = vector.broadcast %cst_50 : f32 to vector<8x256xf32>
    %173 = arith.divf %172, %171 : vector<8x256xf32>
    %174 = vector.extract_strided_slice %173 {offsets = [0, 0], sizes = [8, 128], strides = [1, 1]} : vector<8x256xf32> to vector<8x128xf32>
    %175 = vector.extract_strided_slice %173 {offsets = [0, 128], sizes = [8, 128], strides = [1, 1]} : vector<8x256xf32> to vector<8x128xf32>
    %176 = vector.extract_strided_slice %163 {offsets = [0, 256], sizes = [8, 128], strides = [1, 1]} : vector<8x512xf32> to vector<8x128xf32>
    %177 = vector.broadcast %16 : vector<1x128xf32> to vector<8x128xf32>
    %178 = arith.addf %176, %177 : vector<8x128xf32>
    %179 = vector.extract_strided_slice %163 {offsets = [0, 384], sizes = [8, 128], strides = [1, 1]} : vector<8x512xf32> to vector<8x128xf32>
    %180 = vector.broadcast %17 : vector<1x128xf32> to vector<8x128xf32>
    %181 = arith.addf %179, %180 : vector<8x128xf32>
    %182 = arith.mulf %174, %181 : vector<8x128xf32>
    %183 = arith.addf %178, %182 : vector<8x128xf32>
    %184 = math.tanh %183 : vector<8x128xf32>
    %cst_51 = arith.constant 1.000000e+00 : f32
    %185 = vector.broadcast %cst_51 : f32 to vector<8x128xf32>
    %186 = arith.subf %185, %175 : vector<8x128xf32>
    %187 = arith.mulf %186, %184 : vector<8x128xf32>
    %188 = arith.mulf %175, %133 : vector<8x128xf32>
    %189 = arith.addf %187, %188 : vector<8x128xf32>
    %190 = vector.extract_strided_slice %11 {offsets = [24, 0], sizes = [8, 384], strides = [1, 1]} : vector<64x384xf32> to vector<8x384xf32>
    %191 = arith.truncf %160 : vector<8x128xf32> to vector<8x128xbf16>
    %cst_52 = arith.constant dense<0.000000e+00> : vector<8x384xf32>
    %192 = tpu.matmul %191, %12, %cst_52 {dimension_numbers = #tpu.dot_dimension_numbers<[1], [0], [0], [1], [0, 0, 1, 1], [], []>} : vector<8x128xbf16>, vector<128x384xbf16>, vector<8x384xf32> -> vector<8x384xf32>
    %193 = vector.extract_strided_slice %190 {offsets = [0, 0], sizes = [8, 256], strides = [1, 1]} : vector<8x384xf32> to vector<8x256xf32>
    %194 = vector.extract_strided_slice %192 {offsets = [0, 0], sizes = [8, 256], strides = [1, 1]} : vector<8x384xf32> to vector<8x256xf32>
    %195 = arith.addf %193, %194 : vector<8x256xf32>
    %cst_53 = arith.constant 0.000000e+00 : f32
    %196 = vector.broadcast %cst_53 : f32 to vector<8x256xf32>
    %197 = arith.subf %196, %195 : vector<8x256xf32>
    %198 = math.exp %197 : vector<8x256xf32>
    %cst_54 = arith.constant 1.000000e+00 : f32
    %199 = vector.broadcast %cst_54 : f32 to vector<8x256xf32>
    %200 = arith.addf %199, %198 : vector<8x256xf32>
    %cst_55 = arith.constant 1.000000e+00 : f32
    %201 = vector.broadcast %cst_55 : f32 to vector<8x256xf32>
    %202 = arith.divf %201, %200 : vector<8x256xf32>
    %203 = vector.extract_strided_slice %202 {offsets = [0, 0], sizes = [8, 128], strides = [1, 1]} : vector<8x256xf32> to vector<8x128xf32>
    %204 = vector.extract_strided_slice %202 {offsets = [0, 128], sizes = [8, 128], strides = [1, 1]} : vector<8x256xf32> to vector<8x128xf32>
    %205 = vector.extract_strided_slice %190 {offsets = [0, 256], sizes = [8, 128], strides = [1, 1]} : vector<8x384xf32> to vector<8x128xf32>
    %206 = vector.extract_strided_slice %192 {offsets = [0, 256], sizes = [8, 128], strides = [1, 1]} : vector<8x384xf32> to vector<8x128xf32>
    %207 = vector.broadcast %14 : vector<1x128xf32> to vector<8x128xf32>
    %208 = arith.addf %206, %207 : vector<8x128xf32>
    %209 = arith.mulf %203, %208 : vector<8x128xf32>
    %210 = arith.addf %205, %209 : vector<8x128xf32>
    %211 = math.tanh %210 : vector<8x128xf32>
    %cst_56 = arith.constant 1.000000e+00 : f32
    %212 = vector.broadcast %cst_56 : f32 to vector<8x128xf32>
    %213 = arith.subf %212, %204 : vector<8x128xf32>
    %214 = arith.mulf %213, %211 : vector<8x128xf32>
    %215 = arith.mulf %204, %160 : vector<8x128xf32>
    %216 = arith.addf %214, %215 : vector<8x128xf32>
    %217 = tpu.concatenate %216, %189 in 1 : vector<8x128xf32>, vector<8x128xf32> -> vector<8x256xf32>
    %218 = arith.truncf %217 : vector<8x256xf32> to vector<8x256xbf16>
    %cst_57 = arith.constant dense<0.000000e+00> : vector<8x512xf32>
    %219 = tpu.matmul %218, %13, %cst_57 {dimension_numbers = #tpu.dot_dimension_numbers<[1], [0], [0], [1], [0, 0, 1, 1], [], []>} : vector<8x256xbf16>, vector<256x512xbf16>, vector<8x512xf32> -> vector<8x512xf32>
    %220 = vector.extract_strided_slice %219 {offsets = [0, 0], sizes = [8, 256], strides = [1, 1]} : vector<8x512xf32> to vector<8x256xf32>
    %221 = vector.broadcast %15 : vector<1x256xf32> to vector<8x256xf32>
    %222 = arith.addf %220, %221 : vector<8x256xf32>
    %cst_58 = arith.constant 0.000000e+00 : f32
    %223 = vector.broadcast %cst_58 : f32 to vector<8x256xf32>
    %224 = arith.subf %223, %222 : vector<8x256xf32>
    %225 = math.exp %224 : vector<8x256xf32>
    %cst_59 = arith.constant 1.000000e+00 : f32
    %226 = vector.broadcast %cst_59 : f32 to vector<8x256xf32>
    %227 = arith.addf %226, %225 : vector<8x256xf32>
    %cst_60 = arith.constant 1.000000e+00 : f32
    %228 = vector.broadcast %cst_60 : f32 to vector<8x256xf32>
    %229 = arith.divf %228, %227 : vector<8x256xf32>
    %230 = vector.extract_strided_slice %229 {offsets = [0, 0], sizes = [8, 128], strides = [1, 1]} : vector<8x256xf32> to vector<8x128xf32>
    %231 = vector.extract_strided_slice %229 {offsets = [0, 128], sizes = [8, 128], strides = [1, 1]} : vector<8x256xf32> to vector<8x128xf32>
    %232 = vector.extract_strided_slice %219 {offsets = [0, 256], sizes = [8, 128], strides = [1, 1]} : vector<8x512xf32> to vector<8x128xf32>
    %233 = vector.broadcast %16 : vector<1x128xf32> to vector<8x128xf32>
    %234 = arith.addf %232, %233 : vector<8x128xf32>
    %235 = vector.extract_strided_slice %219 {offsets = [0, 384], sizes = [8, 128], strides = [1, 1]} : vector<8x512xf32> to vector<8x128xf32>
    %236 = vector.broadcast %17 : vector<1x128xf32> to vector<8x128xf32>
    %237 = arith.addf %235, %236 : vector<8x128xf32>
    %238 = arith.mulf %230, %237 : vector<8x128xf32>
    %239 = arith.addf %234, %238 : vector<8x128xf32>
    %240 = math.tanh %239 : vector<8x128xf32>
    %cst_61 = arith.constant 1.000000e+00 : f32
    %241 = vector.broadcast %cst_61 : f32 to vector<8x128xf32>
    %242 = arith.subf %241, %231 : vector<8x128xf32>
    %243 = arith.mulf %242, %240 : vector<8x128xf32>
    %244 = arith.mulf %231, %189 : vector<8x128xf32>
    %245 = arith.addf %243, %244 : vector<8x128xf32>
    %246 = vector.extract_strided_slice %11 {offsets = [32, 0], sizes = [8, 384], strides = [1, 1]} : vector<64x384xf32> to vector<8x384xf32>
    %247 = arith.truncf %216 : vector<8x128xf32> to vector<8x128xbf16>
    %cst_62 = arith.constant dense<0.000000e+00> : vector<8x384xf32>
    %248 = tpu.matmul %247, %12, %cst_62 {dimension_numbers = #tpu.dot_dimension_numbers<[1], [0], [0], [1], [0, 0, 1, 1], [], []>} : vector<8x128xbf16>, vector<128x384xbf16>, vector<8x384xf32> -> vector<8x384xf32>
    %249 = vector.extract_strided_slice %246 {offsets = [0, 0], sizes = [8, 256], strides = [1, 1]} : vector<8x384xf32> to vector<8x256xf32>
    %250 = vector.extract_strided_slice %248 {offsets = [0, 0], sizes = [8, 256], strides = [1, 1]} : vector<8x384xf32> to vector<8x256xf32>
    %251 = arith.addf %249, %250 : vector<8x256xf32>
    %cst_63 = arith.constant 0.000000e+00 : f32
    %252 = vector.broadcast %cst_63 : f32 to vector<8x256xf32>
    %253 = arith.subf %252, %251 : vector<8x256xf32>
    %254 = math.exp %253 : vector<8x256xf32>
    %cst_64 = arith.constant 1.000000e+00 : f32
    %255 = vector.broadcast %cst_64 : f32 to vector<8x256xf32>
    %256 = arith.addf %255, %254 : vector<8x256xf32>
    %cst_65 = arith.constant 1.000000e+00 : f32
    %257 = vector.broadcast %cst_65 : f32 to vector<8x256xf32>
    %258 = arith.divf %257, %256 : vector<8x256xf32>
    %259 = vector.extract_strided_slice %258 {offsets = [0, 0], sizes = [8, 128], strides = [1, 1]} : vector<8x256xf32> to vector<8x128xf32>
    %260 = vector.extract_strided_slice %258 {offsets = [0, 128], sizes = [8, 128], strides = [1, 1]} : vector<8x256xf32> to vector<8x128xf32>
    %261 = vector.extract_strided_slice %246 {offsets = [0, 256], sizes = [8, 128], strides = [1, 1]} : vector<8x384xf32> to vector<8x128xf32>
    %262 = vector.extract_strided_slice %248 {offsets = [0, 256], sizes = [8, 128], strides = [1, 1]} : vector<8x384xf32> to vector<8x128xf32>
    %263 = vector.broadcast %14 : vector<1x128xf32> to vector<8x128xf32>
    %264 = arith.addf %262, %263 : vector<8x128xf32>
    %265 = arith.mulf %259, %264 : vector<8x128xf32>
    %266 = arith.addf %261, %265 : vector<8x128xf32>
    %267 = math.tanh %266 : vector<8x128xf32>
    %cst_66 = arith.constant 1.000000e+00 : f32
    %268 = vector.broadcast %cst_66 : f32 to vector<8x128xf32>
    %269 = arith.subf %268, %260 : vector<8x128xf32>
    %270 = arith.mulf %269, %267 : vector<8x128xf32>
    %271 = arith.mulf %260, %216 : vector<8x128xf32>
    %272 = arith.addf %270, %271 : vector<8x128xf32>
    %273 = tpu.concatenate %272, %245 in 1 : vector<8x128xf32>, vector<8x128xf32> -> vector<8x256xf32>
    %274 = arith.truncf %273 : vector<8x256xf32> to vector<8x256xbf16>
    %cst_67 = arith.constant dense<0.000000e+00> : vector<8x512xf32>
    %275 = tpu.matmul %274, %13, %cst_67 {dimension_numbers = #tpu.dot_dimension_numbers<[1], [0], [0], [1], [0, 0, 1, 1], [], []>} : vector<8x256xbf16>, vector<256x512xbf16>, vector<8x512xf32> -> vector<8x512xf32>
    %276 = vector.extract_strided_slice %275 {offsets = [0, 0], sizes = [8, 256], strides = [1, 1]} : vector<8x512xf32> to vector<8x256xf32>
    %277 = vector.broadcast %15 : vector<1x256xf32> to vector<8x256xf32>
    %278 = arith.addf %276, %277 : vector<8x256xf32>
    %cst_68 = arith.constant 0.000000e+00 : f32
    %279 = vector.broadcast %cst_68 : f32 to vector<8x256xf32>
    %280 = arith.subf %279, %278 : vector<8x256xf32>
    %281 = math.exp %280 : vector<8x256xf32>
    %cst_69 = arith.constant 1.000000e+00 : f32
    %282 = vector.broadcast %cst_69 : f32 to vector<8x256xf32>
    %283 = arith.addf %282, %281 : vector<8x256xf32>
    %cst_70 = arith.constant 1.000000e+00 : f32
    %284 = vector.broadcast %cst_70 : f32 to vector<8x256xf32>
    %285 = arith.divf %284, %283 : vector<8x256xf32>
    %286 = vector.extract_strided_slice %285 {offsets = [0, 0], sizes = [8, 128], strides = [1, 1]} : vector<8x256xf32> to vector<8x128xf32>
    %287 = vector.extract_strided_slice %285 {offsets = [0, 128], sizes = [8, 128], strides = [1, 1]} : vector<8x256xf32> to vector<8x128xf32>
    %288 = vector.extract_strided_slice %275 {offsets = [0, 256], sizes = [8, 128], strides = [1, 1]} : vector<8x512xf32> to vector<8x128xf32>
    %289 = vector.broadcast %16 : vector<1x128xf32> to vector<8x128xf32>
    %290 = arith.addf %288, %289 : vector<8x128xf32>
    %291 = vector.extract_strided_slice %275 {offsets = [0, 384], sizes = [8, 128], strides = [1, 1]} : vector<8x512xf32> to vector<8x128xf32>
    %292 = vector.broadcast %17 : vector<1x128xf32> to vector<8x128xf32>
    %293 = arith.addf %291, %292 : vector<8x128xf32>
    %294 = arith.mulf %286, %293 : vector<8x128xf32>
    %295 = arith.addf %290, %294 : vector<8x128xf32>
    %296 = math.tanh %295 : vector<8x128xf32>
    %cst_71 = arith.constant 1.000000e+00 : f32
    %297 = vector.broadcast %cst_71 : f32 to vector<8x128xf32>
    %298 = arith.subf %297, %287 : vector<8x128xf32>
    %299 = arith.mulf %298, %296 : vector<8x128xf32>
    %300 = arith.mulf %287, %245 : vector<8x128xf32>
    %301 = arith.addf %299, %300 : vector<8x128xf32>
    %302 = vector.extract_strided_slice %11 {offsets = [40, 0], sizes = [8, 384], strides = [1, 1]} : vector<64x384xf32> to vector<8x384xf32>
    %303 = arith.truncf %272 : vector<8x128xf32> to vector<8x128xbf16>
    %cst_72 = arith.constant dense<0.000000e+00> : vector<8x384xf32>
    %304 = tpu.matmul %303, %12, %cst_72 {dimension_numbers = #tpu.dot_dimension_numbers<[1], [0], [0], [1], [0, 0, 1, 1], [], []>} : vector<8x128xbf16>, vector<128x384xbf16>, vector<8x384xf32> -> vector<8x384xf32>
    %305 = vector.extract_strided_slice %302 {offsets = [0, 0], sizes = [8, 256], strides = [1, 1]} : vector<8x384xf32> to vector<8x256xf32>
    %306 = vector.extract_strided_slice %304 {offsets = [0, 0], sizes = [8, 256], strides = [1, 1]} : vector<8x384xf32> to vector<8x256xf32>
    %307 = arith.addf %305, %306 : vector<8x256xf32>
    %cst_73 = arith.constant 0.000000e+00 : f32
    %308 = vector.broadcast %cst_73 : f32 to vector<8x256xf32>
    %309 = arith.subf %308, %307 : vector<8x256xf32>
    %310 = math.exp %309 : vector<8x256xf32>
    %cst_74 = arith.constant 1.000000e+00 : f32
    %311 = vector.broadcast %cst_74 : f32 to vector<8x256xf32>
    %312 = arith.addf %311, %310 : vector<8x256xf32>
    %cst_75 = arith.constant 1.000000e+00 : f32
    %313 = vector.broadcast %cst_75 : f32 to vector<8x256xf32>
    %314 = arith.divf %313, %312 : vector<8x256xf32>
    %315 = vector.extract_strided_slice %314 {offsets = [0, 0], sizes = [8, 128], strides = [1, 1]} : vector<8x256xf32> to vector<8x128xf32>
    %316 = vector.extract_strided_slice %314 {offsets = [0, 128], sizes = [8, 128], strides = [1, 1]} : vector<8x256xf32> to vector<8x128xf32>
    %317 = vector.extract_strided_slice %302 {offsets = [0, 256], sizes = [8, 128], strides = [1, 1]} : vector<8x384xf32> to vector<8x128xf32>
    %318 = vector.extract_strided_slice %304 {offsets = [0, 256], sizes = [8, 128], strides = [1, 1]} : vector<8x384xf32> to vector<8x128xf32>
    %319 = vector.broadcast %14 : vector<1x128xf32> to vector<8x128xf32>
    %320 = arith.addf %318, %319 : vector<8x128xf32>
    %321 = arith.mulf %315, %320 : vector<8x128xf32>
    %322 = arith.addf %317, %321 : vector<8x128xf32>
    %323 = math.tanh %322 : vector<8x128xf32>
    %cst_76 = arith.constant 1.000000e+00 : f32
    %324 = vector.broadcast %cst_76 : f32 to vector<8x128xf32>
    %325 = arith.subf %324, %316 : vector<8x128xf32>
    %326 = arith.mulf %325, %323 : vector<8x128xf32>
    %327 = arith.mulf %316, %272 : vector<8x128xf32>
    %328 = arith.addf %326, %327 : vector<8x128xf32>
    %329 = tpu.concatenate %328, %301 in 1 : vector<8x128xf32>, vector<8x128xf32> -> vector<8x256xf32>
    %330 = arith.truncf %329 : vector<8x256xf32> to vector<8x256xbf16>
    %cst_77 = arith.constant dense<0.000000e+00> : vector<8x512xf32>
    %331 = tpu.matmul %330, %13, %cst_77 {dimension_numbers = #tpu.dot_dimension_numbers<[1], [0], [0], [1], [0, 0, 1, 1], [], []>} : vector<8x256xbf16>, vector<256x512xbf16>, vector<8x512xf32> -> vector<8x512xf32>
    %332 = vector.extract_strided_slice %331 {offsets = [0, 0], sizes = [8, 256], strides = [1, 1]} : vector<8x512xf32> to vector<8x256xf32>
    %333 = vector.broadcast %15 : vector<1x256xf32> to vector<8x256xf32>
    %334 = arith.addf %332, %333 : vector<8x256xf32>
    %cst_78 = arith.constant 0.000000e+00 : f32
    %335 = vector.broadcast %cst_78 : f32 to vector<8x256xf32>
    %336 = arith.subf %335, %334 : vector<8x256xf32>
    %337 = math.exp %336 : vector<8x256xf32>
    %cst_79 = arith.constant 1.000000e+00 : f32
    %338 = vector.broadcast %cst_79 : f32 to vector<8x256xf32>
    %339 = arith.addf %338, %337 : vector<8x256xf32>
    %cst_80 = arith.constant 1.000000e+00 : f32
    %340 = vector.broadcast %cst_80 : f32 to vector<8x256xf32>
    %341 = arith.divf %340, %339 : vector<8x256xf32>
    %342 = vector.extract_strided_slice %341 {offsets = [0, 0], sizes = [8, 128], strides = [1, 1]} : vector<8x256xf32> to vector<8x128xf32>
    %343 = vector.extract_strided_slice %341 {offsets = [0, 128], sizes = [8, 128], strides = [1, 1]} : vector<8x256xf32> to vector<8x128xf32>
    %344 = vector.extract_strided_slice %331 {offsets = [0, 256], sizes = [8, 128], strides = [1, 1]} : vector<8x512xf32> to vector<8x128xf32>
    %345 = vector.broadcast %16 : vector<1x128xf32> to vector<8x128xf32>
    %346 = arith.addf %344, %345 : vector<8x128xf32>
    %347 = vector.extract_strided_slice %331 {offsets = [0, 384], sizes = [8, 128], strides = [1, 1]} : vector<8x512xf32> to vector<8x128xf32>
    %348 = vector.broadcast %17 : vector<1x128xf32> to vector<8x128xf32>
    %349 = arith.addf %347, %348 : vector<8x128xf32>
    %350 = arith.mulf %342, %349 : vector<8x128xf32>
    %351 = arith.addf %346, %350 : vector<8x128xf32>
    %352 = math.tanh %351 : vector<8x128xf32>
    %cst_81 = arith.constant 1.000000e+00 : f32
    %353 = vector.broadcast %cst_81 : f32 to vector<8x128xf32>
    %354 = arith.subf %353, %343 : vector<8x128xf32>
    %355 = arith.mulf %354, %352 : vector<8x128xf32>
    %356 = arith.mulf %343, %301 : vector<8x128xf32>
    %357 = arith.addf %355, %356 : vector<8x128xf32>
    %358 = vector.extract_strided_slice %11 {offsets = [48, 0], sizes = [8, 384], strides = [1, 1]} : vector<64x384xf32> to vector<8x384xf32>
    %359 = arith.truncf %328 : vector<8x128xf32> to vector<8x128xbf16>
    %cst_82 = arith.constant dense<0.000000e+00> : vector<8x384xf32>
    %360 = tpu.matmul %359, %12, %cst_82 {dimension_numbers = #tpu.dot_dimension_numbers<[1], [0], [0], [1], [0, 0, 1, 1], [], []>} : vector<8x128xbf16>, vector<128x384xbf16>, vector<8x384xf32> -> vector<8x384xf32>
    %361 = vector.extract_strided_slice %358 {offsets = [0, 0], sizes = [8, 256], strides = [1, 1]} : vector<8x384xf32> to vector<8x256xf32>
    %362 = vector.extract_strided_slice %360 {offsets = [0, 0], sizes = [8, 256], strides = [1, 1]} : vector<8x384xf32> to vector<8x256xf32>
    %363 = arith.addf %361, %362 : vector<8x256xf32>
    %cst_83 = arith.constant 0.000000e+00 : f32
    %364 = vector.broadcast %cst_83 : f32 to vector<8x256xf32>
    %365 = arith.subf %364, %363 : vector<8x256xf32>
    %366 = math.exp %365 : vector<8x256xf32>
    %cst_84 = arith.constant 1.000000e+00 : f32
    %367 = vector.broadcast %cst_84 : f32 to vector<8x256xf32>
    %368 = arith.addf %367, %366 : vector<8x256xf32>
    %cst_85 = arith.constant 1.000000e+00 : f32
    %369 = vector.broadcast %cst_85 : f32 to vector<8x256xf32>
    %370 = arith.divf %369, %368 : vector<8x256xf32>
    %371 = vector.extract_strided_slice %370 {offsets = [0, 0], sizes = [8, 128], strides = [1, 1]} : vector<8x256xf32> to vector<8x128xf32>
    %372 = vector.extract_strided_slice %370 {offsets = [0, 128], sizes = [8, 128], strides = [1, 1]} : vector<8x256xf32> to vector<8x128xf32>
    %373 = vector.extract_strided_slice %358 {offsets = [0, 256], sizes = [8, 128], strides = [1, 1]} : vector<8x384xf32> to vector<8x128xf32>
    %374 = vector.extract_strided_slice %360 {offsets = [0, 256], sizes = [8, 128], strides = [1, 1]} : vector<8x384xf32> to vector<8x128xf32>
    %375 = vector.broadcast %14 : vector<1x128xf32> to vector<8x128xf32>
    %376 = arith.addf %374, %375 : vector<8x128xf32>
    %377 = arith.mulf %371, %376 : vector<8x128xf32>
    %378 = arith.addf %373, %377 : vector<8x128xf32>
    %379 = math.tanh %378 : vector<8x128xf32>
    %cst_86 = arith.constant 1.000000e+00 : f32
    %380 = vector.broadcast %cst_86 : f32 to vector<8x128xf32>
    %381 = arith.subf %380, %372 : vector<8x128xf32>
    %382 = arith.mulf %381, %379 : vector<8x128xf32>
    %383 = arith.mulf %372, %328 : vector<8x128xf32>
    %384 = arith.addf %382, %383 : vector<8x128xf32>
    %385 = tpu.concatenate %384, %357 in 1 : vector<8x128xf32>, vector<8x128xf32> -> vector<8x256xf32>
    %386 = arith.truncf %385 : vector<8x256xf32> to vector<8x256xbf16>
    %cst_87 = arith.constant dense<0.000000e+00> : vector<8x512xf32>
    %387 = tpu.matmul %386, %13, %cst_87 {dimension_numbers = #tpu.dot_dimension_numbers<[1], [0], [0], [1], [0, 0, 1, 1], [], []>} : vector<8x256xbf16>, vector<256x512xbf16>, vector<8x512xf32> -> vector<8x512xf32>
    %388 = vector.extract_strided_slice %387 {offsets = [0, 0], sizes = [8, 256], strides = [1, 1]} : vector<8x512xf32> to vector<8x256xf32>
    %389 = vector.broadcast %15 : vector<1x256xf32> to vector<8x256xf32>
    %390 = arith.addf %388, %389 : vector<8x256xf32>
    %cst_88 = arith.constant 0.000000e+00 : f32
    %391 = vector.broadcast %cst_88 : f32 to vector<8x256xf32>
    %392 = arith.subf %391, %390 : vector<8x256xf32>
    %393 = math.exp %392 : vector<8x256xf32>
    %cst_89 = arith.constant 1.000000e+00 : f32
    %394 = vector.broadcast %cst_89 : f32 to vector<8x256xf32>
    %395 = arith.addf %394, %393 : vector<8x256xf32>
    %cst_90 = arith.constant 1.000000e+00 : f32
    %396 = vector.broadcast %cst_90 : f32 to vector<8x256xf32>
    %397 = arith.divf %396, %395 : vector<8x256xf32>
    %398 = vector.extract_strided_slice %397 {offsets = [0, 0], sizes = [8, 128], strides = [1, 1]} : vector<8x256xf32> to vector<8x128xf32>
    %399 = vector.extract_strided_slice %397 {offsets = [0, 128], sizes = [8, 128], strides = [1, 1]} : vector<8x256xf32> to vector<8x128xf32>
    %400 = vector.extract_strided_slice %387 {offsets = [0, 256], sizes = [8, 128], strides = [1, 1]} : vector<8x512xf32> to vector<8x128xf32>
    %401 = vector.broadcast %16 : vector<1x128xf32> to vector<8x128xf32>
    %402 = arith.addf %400, %401 : vector<8x128xf32>
    %403 = vector.extract_strided_slice %387 {offsets = [0, 384], sizes = [8, 128], strides = [1, 1]} : vector<8x512xf32> to vector<8x128xf32>
    %404 = vector.broadcast %17 : vector<1x128xf32> to vector<8x128xf32>
    %405 = arith.addf %403, %404 : vector<8x128xf32>
    %406 = arith.mulf %398, %405 : vector<8x128xf32>
    %407 = arith.addf %402, %406 : vector<8x128xf32>
    %408 = math.tanh %407 : vector<8x128xf32>
    %cst_91 = arith.constant 1.000000e+00 : f32
    %409 = vector.broadcast %cst_91 : f32 to vector<8x128xf32>
    %410 = arith.subf %409, %399 : vector<8x128xf32>
    %411 = arith.mulf %410, %408 : vector<8x128xf32>
    %412 = arith.mulf %399, %357 : vector<8x128xf32>
    %413 = arith.addf %411, %412 : vector<8x128xf32>
    %414 = vector.extract_strided_slice %11 {offsets = [56, 0], sizes = [8, 384], strides = [1, 1]} : vector<64x384xf32> to vector<8x384xf32>
    %415 = arith.truncf %384 : vector<8x128xf32> to vector<8x128xbf16>
    %cst_92 = arith.constant dense<0.000000e+00> : vector<8x384xf32>
    %416 = tpu.matmul %415, %12, %cst_92 {dimension_numbers = #tpu.dot_dimension_numbers<[1], [0], [0], [1], [0, 0, 1, 1], [], []>} : vector<8x128xbf16>, vector<128x384xbf16>, vector<8x384xf32> -> vector<8x384xf32>
    %417 = vector.extract_strided_slice %414 {offsets = [0, 0], sizes = [8, 256], strides = [1, 1]} : vector<8x384xf32> to vector<8x256xf32>
    %418 = vector.extract_strided_slice %416 {offsets = [0, 0], sizes = [8, 256], strides = [1, 1]} : vector<8x384xf32> to vector<8x256xf32>
    %419 = arith.addf %417, %418 : vector<8x256xf32>
    %cst_93 = arith.constant 0.000000e+00 : f32
    %420 = vector.broadcast %cst_93 : f32 to vector<8x256xf32>
    %421 = arith.subf %420, %419 : vector<8x256xf32>
    %422 = math.exp %421 : vector<8x256xf32>
    %cst_94 = arith.constant 1.000000e+00 : f32
    %423 = vector.broadcast %cst_94 : f32 to vector<8x256xf32>
    %424 = arith.addf %423, %422 : vector<8x256xf32>
    %cst_95 = arith.constant 1.000000e+00 : f32
    %425 = vector.broadcast %cst_95 : f32 to vector<8x256xf32>
    %426 = arith.divf %425, %424 : vector<8x256xf32>
    %427 = vector.extract_strided_slice %426 {offsets = [0, 0], sizes = [8, 128], strides = [1, 1]} : vector<8x256xf32> to vector<8x128xf32>
    %428 = vector.extract_strided_slice %426 {offsets = [0, 128], sizes = [8, 128], strides = [1, 1]} : vector<8x256xf32> to vector<8x128xf32>
    %429 = vector.extract_strided_slice %414 {offsets = [0, 256], sizes = [8, 128], strides = [1, 1]} : vector<8x384xf32> to vector<8x128xf32>
    %430 = vector.extract_strided_slice %416 {offsets = [0, 256], sizes = [8, 128], strides = [1, 1]} : vector<8x384xf32> to vector<8x128xf32>
    %431 = vector.broadcast %14 : vector<1x128xf32> to vector<8x128xf32>
    %432 = arith.addf %430, %431 : vector<8x128xf32>
    %433 = arith.mulf %427, %432 : vector<8x128xf32>
    %434 = arith.addf %429, %433 : vector<8x128xf32>
    %435 = math.tanh %434 : vector<8x128xf32>
    %cst_96 = arith.constant 1.000000e+00 : f32
    %436 = vector.broadcast %cst_96 : f32 to vector<8x128xf32>
    %437 = arith.subf %436, %428 : vector<8x128xf32>
    %438 = arith.mulf %437, %435 : vector<8x128xf32>
    %439 = arith.mulf %428, %384 : vector<8x128xf32>
    %440 = arith.addf %438, %439 : vector<8x128xf32>
    %441 = tpu.concatenate %440, %413 in 1 : vector<8x128xf32>, vector<8x128xf32> -> vector<8x256xf32>
    %442 = arith.truncf %441 : vector<8x256xf32> to vector<8x256xbf16>
    %cst_97 = arith.constant dense<0.000000e+00> : vector<8x512xf32>
    %443 = tpu.matmul %442, %13, %cst_97 {dimension_numbers = #tpu.dot_dimension_numbers<[1], [0], [0], [1], [0, 0, 1, 1], [], []>} : vector<8x256xbf16>, vector<256x512xbf16>, vector<8x512xf32> -> vector<8x512xf32>
    %444 = vector.extract_strided_slice %443 {offsets = [0, 0], sizes = [8, 256], strides = [1, 1]} : vector<8x512xf32> to vector<8x256xf32>
    %445 = vector.broadcast %15 : vector<1x256xf32> to vector<8x256xf32>
    %446 = arith.addf %444, %445 : vector<8x256xf32>
    %cst_98 = arith.constant 0.000000e+00 : f32
    %447 = vector.broadcast %cst_98 : f32 to vector<8x256xf32>
    %448 = arith.subf %447, %446 : vector<8x256xf32>
    %449 = math.exp %448 : vector<8x256xf32>
    %cst_99 = arith.constant 1.000000e+00 : f32
    %450 = vector.broadcast %cst_99 : f32 to vector<8x256xf32>
    %451 = arith.addf %450, %449 : vector<8x256xf32>
    %cst_100 = arith.constant 1.000000e+00 : f32
    %452 = vector.broadcast %cst_100 : f32 to vector<8x256xf32>
    %453 = arith.divf %452, %451 : vector<8x256xf32>
    %454 = vector.extract_strided_slice %453 {offsets = [0, 0], sizes = [8, 128], strides = [1, 1]} : vector<8x256xf32> to vector<8x128xf32>
    %455 = vector.extract_strided_slice %453 {offsets = [0, 128], sizes = [8, 128], strides = [1, 1]} : vector<8x256xf32> to vector<8x128xf32>
    %456 = vector.extract_strided_slice %443 {offsets = [0, 256], sizes = [8, 128], strides = [1, 1]} : vector<8x512xf32> to vector<8x128xf32>
    %457 = vector.broadcast %16 : vector<1x128xf32> to vector<8x128xf32>
    %458 = arith.addf %456, %457 : vector<8x128xf32>
    %459 = vector.extract_strided_slice %443 {offsets = [0, 384], sizes = [8, 128], strides = [1, 1]} : vector<8x512xf32> to vector<8x128xf32>
    %460 = vector.broadcast %17 : vector<1x128xf32> to vector<8x128xf32>
    %461 = arith.addf %459, %460 : vector<8x128xf32>
    %462 = arith.mulf %454, %461 : vector<8x128xf32>
    %463 = arith.addf %458, %462 : vector<8x128xf32>
    %464 = math.tanh %463 : vector<8x128xf32>
    %cst_101 = arith.constant 1.000000e+00 : f32
    %465 = vector.broadcast %cst_101 : f32 to vector<8x128xf32>
    %466 = arith.subf %465, %455 : vector<8x128xf32>
    %467 = arith.mulf %466, %464 : vector<8x128xf32>
    %468 = arith.mulf %455, %413 : vector<8x128xf32>
    %469 = arith.addf %467, %468 : vector<8x128xf32>
    %470 = tpu.concatenate %77, %133, %189, %245, %301, %357, %413, %469 in 0 : vector<8x128xf32>, vector<8x128xf32>, vector<8x128xf32>, vector<8x128xf32>, vector<8x128xf32>, vector<8x128xf32>, vector<8x128xf32>, vector<8x128xf32> -> vector<64x128xf32>
    %471 = arith.truncf %470 : vector<64x128xf32> to vector<64x128xbf16>
    %c0_102 = arith.constant 0 : index
    %c0_103 = arith.constant 0 : index
    %472 = vector.load %arg10[%c0_102, %c0_103] : memref<128x256xbf16, #tpu.memory_space<vmem>>, vector<128x256xbf16>
    %cst_104 = arith.constant dense<0.000000e+00> : vector<64x256xf32>
    %473 = tpu.matmul %471, %472, %cst_104 {dimension_numbers = #tpu.dot_dimension_numbers<[1], [0], [0], [1], [0, 0, 1, 1], [], []>} : vector<64x128xbf16>, vector<128x256xbf16>, vector<64x256xf32> -> vector<64x256xf32>
    %c0_105 = arith.constant 0 : index
    %c0_106 = arith.constant 0 : index
    %474 = vector.load %arg11[%c0_105, %c0_106] : memref<1x256xf32, #tpu.memory_space<vmem>>, vector<1x256xf32>
    %475 = vector.broadcast %474 : vector<1x256xf32> to vector<64x256xf32>
    %476 = arith.addf %473, %475 : vector<64x256xf32>
    %c0_107 = arith.constant 0 : index
    %c0_108 = arith.constant 0 : index
    %477 = vector.load %arg12[%c0_107, %c0_108] : memref<64x256xf32, #tpu.memory_space<vmem>>, vector<64x256xf32>
    tpu.vector_store %arg12[%c0_107, %c0_108], %476 {strides = array<i32>} : memref<64x256xf32, #tpu.memory_space<vmem>>, vector<64x256xf32>,
    %c0_109 = arith.constant 0 : index
    %c0_110 = arith.constant 0 : index
    %c0_111 = arith.constant 0 : index
    %478 = vector.load %arg13[%c0_109, %c0_110, %c0_111] : memref<2x8x128xf32, #tpu.memory_space<vmem>>, vector<1x8x128xf32>
    %479 = vector.shape_cast %478 : vector<1x8x128xf32> to vector<8x128xf32>
    %480 = vector.shape_cast %440 : vector<8x128xf32> to vector<1x8x128xf32>
    tpu.vector_store %arg13[%c0_109, %c0_110, %c0_111], %480 {strides = array<i32>} : memref<2x8x128xf32, #tpu.memory_space<vmem>>, vector<1x8x128xf32>,
    %c1_112 = arith.constant 1 : index
    %c0_113 = arith.constant 0 : index
    %c0_114 = arith.constant 0 : index
    %481 = vector.load %arg13[%c1_112, %c0_113, %c0_114] : memref<2x8x128xf32, #tpu.memory_space<vmem>>, vector<1x8x128xf32>
    %482 = vector.shape_cast %481 : vector<1x8x128xf32> to vector<8x128xf32>
    %483 = vector.shape_cast %469 : vector<8x128xf32> to vector<1x8x128xf32>
    tpu.vector_store %arg13[%c1_112, %c0_113, %c0_114], %483 {strides = array<i32>} : memref<2x8x128xf32, #tpu.memory_space<vmem>>, vector<1x8x128xf32>,
    return
  }
}

</mosaic_0001>

<llo_original>
// kernel: rnn_decoder_decode.1
$region0: #{rnn_decoder_decode.1}
  #allocation0 [shape = 'u32[]', space=smem, size = 0x4, offset = 0x4, fixed_abs, tag = 'smem constant byte address 0x4 - core index']
  #allocation1 [shape = 'u32[72,128]{1,0:T(1,128)}', space=vmem, size = 0x9000, scoped, tag = 'internal scratch']
  %s0 = inlined_call_operand.vmem [shape: s32[64,1], index: 0, kind: input, shape index: {}]
  %s1 = inlined_call_operand.vmem [shape: f32[2,8,128], index: 1, kind: input, shape index: {}]
  %s2 = inlined_call_operand.hbm [shape: bf16[256,384], index: 2, kind: input, shape index: {}]
  %s3 = inlined_call_operand.hbm [shape: bf16[128,384], index: 3, kind: input, shape index: {}]
  %s4 = inlined_call_operand.hbm [shape: bf16[256,512], index: 4, kind: input, shape index: {}]
  %s5 = inlined_call_operand.vmem [shape: f32[1,384], index: 5, kind: input, shape index: {}]
  %s6 = inlined_call_operand.vmem [shape: f32[1,128], index: 6, kind: input, shape index: {}]
  %s7 = inlined_call_operand.vmem [shape: f32[1,256], index: 7, kind: input, shape index: {}]
  %s8 = inlined_call_operand.vmem [shape: f32[1,128], index: 8, kind: input, shape index: {}]
  %s9 = inlined_call_operand.vmem [shape: f32[1,128], index: 9, kind: input, shape index: {}]
  %s10 = inlined_call_operand.hbm [shape: bf16[128,256], index: 10, kind: input, shape index: {}]
  %s11 = inlined_call_operand.vmem [shape: f32[1,256], index: 11, kind: input, shape index: {}]
  %s12 = inlined_call_operand.hbm [shape: f32[64,256], index: 12, kind: output, shape index: {0}]
  %s13 = inlined_call_operand.hbm [shape: f32[2,8,128], index: 13, kind: output, shape index: {1}]
  %14 = xla_tuple %s12, %s13
  %s15 = sld [smem:[#allocation0]]
  $region82: #{rnn_decoder_decode.1} parent=0
    _
  %s17 = ssub.s32 1, %s15
  %s18 = scalar_select 0, %s17, %s15
  $region1: #{rnn_decoder_decode.1} parent=0
    #allocation2 [shape = 'u8[196608]{0}', space=vmem, size = 0x30000, scoped, tag = 'input window, operand 2, single buffered']
    #allocation3 [shape = 's32[1]{0}', space=sflag, size = 0x4, scoped, tag = 'scoped memory for rnn_decoder_decode.1']
    #allocation4 [shape = 's32[1]{0}', space=sflag, size = 0x4, scoped, tag = 'scoped memory for rnn_decoder_decode.1']
    #allocation5 [shape = 'u8[98304]{0}', space=vmem, size = 0x18000, scoped, tag = 'input window, operand 3, single buffered']
    #allocation6 [shape = 's32[1]{0}', space=sflag, size = 0x4, scoped, tag = 'scoped memory for rnn_decoder_decode.1']
    #allocation7 [shape = 'u8[262144]{0}', space=vmem, size = 0x40000, scoped, tag = 'input window, operand 4, single buffered']
    #allocation8 [shape = 'u8[65536]{0}', space=vmem, size = 0x10000, scoped, tag = 'input window, operand 10, single buffered']
    #allocation9 [shape = 's32[1]{0}', space=sflag, size = 0x4, scoped, tag = 'scoped memory for rnn_decoder_decode.1']
    #allocation10 [shape = 'u8[65536]{0}', space=vmem, size = 0x10000, scoped, tag = 'output window, operand 0, single buffered']
    #allocation11 [shape = 'u8[8192]{0}', space=vmem, size = 0x2000, scoped, tag = 'output window, operand 1, single buffered']
    #allocation12 [shape = 's32[1]{0}', space=sflag, size = 0x4, scoped, tag = 'scoped memory for rnn_decoder_decode.1']
    %19 = vsyncpa [#allocation3], 0
    %20 = vsyncpa [#allocation6], 0
    %21 = vsyncpa [#allocation9], 0
    %22 = vsyncpa [#allocation4], 0
    %23 = vsyncpa [#allocation12], 0
    // Predicated region
    $region2: #{rnn_decoder_decode.1} parent=1 // pred_check
      _
    $region3: #{rnn_decoder_decode.1} parent=1 // pred_check_branch
      %25 = sbr.rel (0) target = $region5
    $region4: #{rnn_decoder_decode.1} parent=1 // pred_region
      _
    $region5: #{rnn_decoder_decode.1} parent=1 // pred_fallthru
      _
    // Predicated region
    $region6: #{rnn_decoder_decode.1} parent=1 // pred_check
      _
    $region7: #{rnn_decoder_decode.1} parent=1 // pred_check_branch
      %27 = sbr.rel (0) target = $region9
    $region8: #{rnn_decoder_decode.1} parent=1 // pred_region
      _
    $region9: #{rnn_decoder_decode.1} parent=1 // pred_fallthru
      _
    // Predicated region
    $region10: #{rnn_decoder_decode.1} parent=1 // pred_check
      _
    $region11: #{rnn_decoder_decode.1} parent=1 // pred_check_branch
      %29 = sbr.rel (0) target = $region13
    $region12: #{rnn_decoder_decode.1} parent=1 // pred_region
      %31 = vsyncadd [#allocation3], 0
      %s32 = sshll.u32 %s2, 4
      %s33 = int_to_ptr.hbm [resolvable:$true] %s32
      %s34 = sshll.u32 [#allocation2], 4
      %s35 = int_to_ptr.vmem [resolvable:$true] %s34
      %40 = dma.hbm_to_vmem [thread:$0]  %s33, 6144, %s35, [#allocation3], 192, 192, 12
    $region13: #{rnn_decoder_decode.1} parent=1 // pred_fallthru
      _
    // Predicated region
    $region14: #{rnn_decoder_decode.1} parent=1 // pred_check
      _
    $region15: #{rnn_decoder_decode.1} parent=1 // pred_check_branch
      %42 = sbr.rel (0) target = $region17
    $region16: #{rnn_decoder_decode.1} parent=1 // pred_region
      %44 = vsyncadd [#allocation6], 0
      %s45 = sshll.u32 %s3, 4
      %s46 = int_to_ptr.hbm [resolvable:$true] %s45
      %s47 = sshll.u32 [#allocation5], 4
      %s48 = int_to_ptr.vmem [resolvable:$true] %s47
      %53 = dma.hbm_to_vmem [thread:$0]  %s46, 3072, %s48, [#allocation6], 192, 192, 12
    $region17: #{rnn_decoder_decode.1} parent=1 // pred_fallthru
      _
    // Predicated region
    $region18: #{rnn_decoder_decode.1} parent=1 // pred_check
      _
    $region19: #{rnn_decoder_decode.1} parent=1 // pred_check_branch
      %55 = sbr.rel (0) target = $region21
    $region20: #{rnn_decoder_decode.1} parent=1 // pred_region
      %57 = vsyncadd [#allocation6], 0
      %s58 = sshll.u32 %s4, 4
      %s59 = int_to_ptr.hbm [resolvable:$true] %s58
      %s60 = sshll.u32 [#allocation7], 4
      %s61 = int_to_ptr.vmem [resolvable:$true] %s60
      %66 = dma.hbm_to_vmem [thread:$0]  %s59, 8192, %s61, [#allocation6], 256, 256, 16
    $region21: #{rnn_decoder_decode.1} parent=1 // pred_fallthru
      _
    // Predicated region
    $region22: #{rnn_decoder_decode.1} parent=1 // pred_check
      _
    $region23: #{rnn_decoder_decode.1} parent=1 // pred_check_branch
      %68 = sbr.rel (0) target = $region25
    $region24: #{rnn_decoder_decode.1} parent=1 // pred_region
      _
    $region25: #{rnn_decoder_decode.1} parent=1 // pred_fallthru
      _
    // Predicated region
    $region26: #{rnn_decoder_decode.1} parent=1 // pred_check
      _
    $region27: #{rnn_decoder_decode.1} parent=1 // pred_check_branch
      %70 = sbr.rel (0) target = $region29
    $region28: #{rnn_decoder_decode.1} parent=1 // pred_region
      _
    $region29: #{rnn_decoder_decode.1} parent=1 // pred_fallthru
      _
    // Predicated region
    $region30: #{rnn_decoder_decode.1} parent=1 // pred_check
      _
    $region31: #{rnn_decoder_decode.1} parent=1 // pred_check_branch
      %72 = sbr.rel (0) target = $region33
    $region32: #{rnn_decoder_decode.1} parent=1 // pred_region
      _
    $region33: #{rnn_decoder_decode.1} parent=1 // pred_fallthru
      _
    // Predicated region
    $region34: #{rnn_decoder_decode.1} parent=1 // pred_check
      _
    $region35: #{rnn_decoder_decode.1} parent=1 // pred_check_branch
      %74 = sbr.rel (0) target = $region37
    $region36: #{rnn_decoder_decode.1} parent=1 // pred_region
      _
    $region37: #{rnn_decoder_decode.1} parent=1 // pred_fallthru
      _
    // Predicated region
    $region38: #{rnn_decoder_decode.1} parent=1 // pred_check
      _
    $region39: #{rnn_decoder_decode.1} parent=1 // pred_check_branch
      %76 = sbr.rel (0) target = $region41
    $region40: #{rnn_decoder_decode.1} parent=1 // pred_region
      _
    $region41: #{rnn_decoder_decode.1} parent=1 // pred_fallthru
      _
    // Predicated region
    $region42: #{rnn_decoder_decode.1} parent=1 // pred_check
      _
    $region43: #{rnn_decoder_decode.1} parent=1 // pred_check_branch
      %78 = sbr.rel (0) target = $region45
    $region44: #{rnn_decoder_decode.1} parent=1 // pred_region
      %80 = vsyncadd [#allocation9], 0
      %s81 = sshll.u32 %s10, 4
      %s82 = int_to_ptr.hbm [resolvable:$true] %s81
      %s83 = sshll.u32 [#allocation8], 4
      %s84 = int_to_ptr.vmem [resolvable:$true] %s83
      %89 = dma.hbm_to_vmem [thread:$0]  %s82, 2048, %s84, [#allocation9], 128, 128, 8
    $region45: #{rnn_decoder_decode.1} parent=1 // pred_fallthru
      _
    // Predicated region
    $region46: #{rnn_decoder_decode.1} parent=1 // pred_check
      _
    $region47: #{rnn_decoder_decode.1} parent=1 // pred_check_branch
      %91 = sbr.rel (0) target = $region49
    $region48: #{rnn_decoder_decode.1} parent=1 // pred_region
      _
    $region49: #{rnn_decoder_decode.1} parent=1 // pred_fallthru
      _
    // Predicated region
    $region50: #{rnn_decoder_decode.1} parent=1 // pred_check
      _
    $region51: #{rnn_decoder_decode.1} parent=1 // pred_check_branch
      %93 = sbr.rel (0) target = $region53
    $region52: #{rnn_decoder_decode.1} parent=1 // pred_region
      %95 = dma.done [#allocation3], 6144
    $region53: #{rnn_decoder_decode.1} parent=1 // pred_fallthru
      _
    // Predicated region
    $region54: #{rnn_decoder_decode.1} parent=1 // pred_check
      _
    $region55: #{rnn_decoder_decode.1} parent=1 // pred_check_branch
      %97 = sbr.rel (0) target = $region57
    $region56: #{rnn_decoder_decode.1} parent=1 // pred_region
      %99 = dma.done [#allocation6], 3072
    $region57: #{rnn_decoder_decode.1} parent=1 // pred_fallthru
      _
    // Predicated region
    $region58: #{rnn_decoder_decode.1} parent=1 // pred_check
      _
    $region59: #{rnn_decoder_decode.1} parent=1 // pred_check_branch
      %101 = sbr.rel (0) target = $region61
    $region60: #{rnn_decoder_decode.1} parent=1 // pred_region
      %103 = dma.done [#allocation6], 8192
    $region61: #{rnn_decoder_decode.1} parent=1 // pred_fallthru
      _
    // Predicated region
    $region62: #{rnn_decoder_decode.1} parent=1 // pred_check
      _
    $region63: #{rnn_decoder_decode.1} parent=1 // pred_check_branch
      %105 = sbr.rel (0) target = $region65
    $region64: #{rnn_decoder_decode.1} parent=1 // pred_region
      %107 = dma.done [#allocation9], 2048
    $region65: #{rnn_decoder_decode.1} parent=1 // pred_fallthru
      _
    %v108 = vlaneseq
    %v109 = vand.u32 %v108, 127
    %v110 = vadd.s32 %v109, 128
    %v111 = vld [vmem:[%s0] sm:$0xff]
    %v112 = vld [vmem:[%s0 + $0x8] sm:$0xff]
    %v113 = vld [vmem:[%s0 + $0x10] sm:$0xff]
    %v114 = vld [vmem:[%s0 + $0x18] sm:$0xff]
    %v115 = vld [vmem:[%s0 + $0x20] sm:$0xff]
    %v116 = vld [vmem:[%s0 + $0x28] sm:$0xff]
    %v117 = vld [vmem:[%s0 + $0x30] sm:$0xff]
    %v118 = vld [vmem:[%s0 + $0x38] sm:$0xff]
    %119 = vset.pattern.permute.xlu0 0
    %120 = vperm.xlu0 %119, %v111
    %v121 = vpop.permute.xlu0 %120
    %122 = vset.pattern.permute.xlu0 0
    %123 = vperm.xlu0 %122, %v112
    %v124 = vpop.permute.xlu0 %123
    %125 = vset.pattern.permute.xlu0 0
    %126 = vperm.xlu0 %125, %v113
    %v127 = vpop.permute.xlu0 %126
    %128 = vset.pattern.permute.xlu0 0
    %129 = vperm.xlu0 %128, %v114
    %v130 = vpop.permute.xlu0 %129
    %131 = vset.pattern.permute.xlu0 0
    %132 = vperm.xlu0 %131, %v115
    %v133 = vpop.permute.xlu0 %132
    %134 = vset.pattern.permute.xlu0 0
    %135 = vperm.xlu0 %134, %v116
    %v136 = vpop.permute.xlu0 %135
    %137 = vset.pattern.permute.xlu0 0
    %138 = vperm.xlu0 %137, %v117
    %v139 = vpop.permute.xlu0 %138
    %140 = vset.pattern.permute.xlu0 0
    %141 = vperm.xlu0 %140, %v118
    %v142 = vpop.permute.xlu0 %141
    %vm143 = vcmp.eq.s32.totalorder %v121, %v109
    %vm144 = vcmp.eq.s32.totalorder %v121, %v110
    %vm145 = vcmp.eq.s32.totalorder %v124, %v109
    %vm146 = vcmp.eq.s32.totalorder %v124, %v110
    %vm147 = vcmp.eq.s32.totalorder %v127, %v109
    %vm148 = vcmp.eq.s32.totalorder %v127, %v110
    %vm149 = vcmp.eq.s32.totalorder %v130, %v109
    %vm150 = vcmp.eq.s32.totalorder %v130, %v110
    %vm151 = vcmp.eq.s32.totalorder %v133, %v109
    %vm152 = vcmp.eq.s32.totalorder %v133, %v110
    %vm153 = vcmp.eq.s32.totalorder %v136, %v109
    %vm154 = vcmp.eq.s32.totalorder %v136, %v110
    %vm155 = vcmp.eq.s32.totalorder %v139, %v109
    %vm156 = vcmp.eq.s32.totalorder %v139, %v110
    %vm157 = vcmp.eq.s32.totalorder %v142, %v109
    %vm158 = vcmp.eq.s32.totalorder %v142, %v110
    %v159 = vsel %vm143, 1, 0
    %v160 = vsel %vm144, 1, 0
    %v161 = vsel %vm145, 1, 0
    %v162 = vsel %vm146, 1, 0
    %v163 = vsel %vm147, 1, 0
    %v164 = vsel %vm148, 1, 0
    %v165 = vsel %vm149, 1, 0
    %v166 = vsel %vm150, 1, 0
    %v167 = vsel %vm151, 1, 0
    %v168 = vsel %vm152, 1, 0
    %v169 = vsel %vm153, 1, 0
    %v170 = vsel %vm154, 1, 0
    %v171 = vsel %vm155, 1, 0
    %v172 = vsel %vm156, 1, 0
    %v173 = vsel %vm157, 1, 0
    %v174 = vsel %vm158, 1, 0
    %v175 = vcvt.s32.f32 %v159
    %v176 = vcvt.s32.f32 %v160
    %v177 = vcvt.s32.f32 %v161
    %v178 = vcvt.s32.f32 %v162
    %v179 = vcvt.s32.f32 %v163
    %v180 = vcvt.s32.f32 %v164
    %v181 = vcvt.s32.f32 %v165
    %v182 = vcvt.s32.f32 %v166
    %v183 = vcvt.s32.f32 %v167
    %v184 = vcvt.s32.f32 %v168
    %v185 = vcvt.s32.f32 %v169
    %v186 = vcvt.s32.f32 %v170
    %v187 = vcvt.s32.f32 %v171
    %v188 = vcvt.s32.f32 %v172
    %v189 = vcvt.s32.f32 %v173
    %v190 = vcvt.s32.f32 %v174
    %v191 = vpack.c.bf16 %v177, %v175
    %v192 = vpack.c.bf16 %v178, %v176
    %v193 = vpack.c.bf16 %v181, %v179
    %v194 = vpack.c.bf16 %v182, %v180
    %v195 = vpack.c.bf16 %v185, %v183
    %v196 = vpack.c.bf16 %v186, %v184
    %v197 = vpack.c.bf16 %v189, %v187
    %v198 = vpack.c.bf16 %v190, %v188
    %v199 = vld [vmem:[#allocation2] sm:$0xff]
    %v200 = vld [vmem:[#allocation2 + $0x8] sm:$0xf]
    %v201 = vld [vmem:[#allocation2 + $0xc] sm:$0xff]
    %v202 = vld [vmem:[#allocation2 + $0x14] sm:$0xf]
    %v203 = vld [vmem:[#allocation2 + $0x18] sm:$0xff]
    %v204 = vld [vmem:[#allocation2 + $0x20] sm:$0xf]
    %v205 = vld [vmem:[#allocation2 + $0x24] sm:$0xff]
    %v206 = vld [vmem:[#allocation2 + $0x2c] sm:$0xf]
    %v207 = vld [vmem:[#allocation2 + $0x30] sm:$0xff]
    %v208 = vld [vmem:[#allocation2 + $0x38] sm:$0xf]
    %v209 = vld [vmem:[#allocation2 + $0x3c] sm:$0xff]
    %v210 = vld [vmem:[#allocation2 + $0x44] sm:$0xf]
    %v211 = vld [vmem:[#allocation2 + $0x48] sm:$0xff]
    %v212 = vld [vmem:[#allocation2 + $0x50] sm:$0xf]
    %v213 = vld [vmem:[#allocation2 + $0x54] sm:$0xff]
    %v214 = vld [vmem:[#allocation2 + $0x5c] sm:$0xf]
    %v215 = vld [vmem:[#allocation2 + $0x60] sm:$0xff]
    %v216 = vld [vmem:[#allocation2 + $0x68] sm:$0xf]
    %v217 = vld [vmem:[#allocation2 + $0x6c] sm:$0xff]
    %v218 = vld [vmem:[#allocation2 + $0x74] sm:$0xf]
    %v219 = vld [vmem:[#allocation2 + $0x78] sm:$0xff]
    %v220 = vld [vmem:[#allocation2 + $0x80] sm:$0xf]
    %v221 = vld [vmem:[#allocation2 + $0x84] sm:$0xff]
    %v222 = vld [vmem:[#allocation2 + $0x8c] sm:$0xf]
    %v223 = vld [vmem:[#allocation2 + $0x90] sm:$0xff]
    %v224 = vld [vmem:[#allocation2 + $0x98] sm:$0xf]
    %v225 = vld [vmem:[#allocation2 + $0x9c] sm:$0xff]
    %v226 = vld [vmem:[#allocation2 + $0xa4] sm:$0xf]
    %v227 = vld [vmem:[#allocation2 + $0xa8] sm:$0xff]
    %v228 = vld [vmem:[#allocation2 + $0xb0] sm:$0xf]
    %v229 = vld [vmem:[#allocation2 + $0xb4] sm:$0xff]
    %v230 = vld [vmem:[#allocation2 + $0xbc] sm:$0xf]
    %v231 = vld [vmem:[#allocation2 + $0xc0] sm:$0xff]
    %v232 = vld [vmem:[#allocation2 + $0xc8] sm:$0xf]
    %v233 = vld [vmem:[#allocation2 + $0xcc] sm:$0xff]
    %v234 = vld [vmem:[#allocation2 + $0xd4] sm:$0xf]
    %v235 = vld [vmem:[#allocation2 + $0xd8] sm:$0xff]
    %v236 = vld [vmem:[#allocation2 + $0xe0] sm:$0xf]
    %v237 = vld [vmem:[#allocation2 + $0xe4] sm:$0xff]
    %v238 = vld [vmem:[#allocation2 + $0xec] sm:$0xf]
    %v239 = vld [vmem:[#allocation2 + $0xf0] sm:$0xff]
    %v240 = vld [vmem:[#allocation2 + $0xf8] sm:$0xf]
    %v241 = vld [vmem:[#allocation2 + $0xfc] sm:$0xff]
    %v242 = vld [vmem:[#allocation2 + $0x104] sm:$0xf]
    %v243 = vld [vmem:[#allocation2 + $0x108] sm:$0xff]
    %v244 = vld [vmem:[#allocation2 + $0x110] sm:$0xf]
    %v245 = vld [vmem:[#allocation2 + $0x114] sm:$0xff]
    %v246 = vld [vmem:[#allocation2 + $0x11c] sm:$0xf]
    %v247 = vld [vmem:[#allocation2 + $0x120] sm:$0xff]
    %v248 = vld [vmem:[#allocation2 + $0x128] sm:$0xf]
    %v249 = vld [vmem:[#allocation2 + $0x12c] sm:$0xff]
    %v250 = vld [vmem:[#allocation2 + $0x134] sm:$0xf]
    %v251 = vld [vmem:[#allocation2 + $0x138] sm:$0xff]
    %v252 = vld [vmem:[#allocation2 + $0x140] sm:$0xf]
    %v253 = vld [vmem:[#allocation2 + $0x144] sm:$0xff]
    %v254 = vld [vmem:[#allocation2 + $0x14c] sm:$0xf]
    %v255 = vld [vmem:[#allocation2 + $0x150] sm:$0xff]
    %v256 = vld [vmem:[#allocation2 + $0x158] sm:$0xf]
    %v257 = vld [vmem:[#allocation2 + $0x15c] sm:$0xff]
    %v258 = vld [vmem:[#allocation2 + $0x164] sm:$0xf]
    %v259 = vld [vmem:[#allocation2 + $0x168] sm:$0xff]
    %v260 = vld [vmem:[#allocation2 + $0x170] sm:$0xf]
    %v261 = vld [vmem:[#allocation2 + $0x174] sm:$0xff]
    %v262 = vld [vmem:[#allocation2 + $0x17c] sm:$0xf]
    %v263 = vld [vmem:[%s5] sm:$0x7]
    %v265 = vperm.slane %v263, 0
    %v266 = vperm.slane %v263, 1
    %v267 = vperm.slane %v263, 2
    %v335 = vunpack.c.l.b16 %v199
    %v336 = vunpack.c.h.b16 %v199
    %v337 = vunpack.c.l.b16 %v200
    %v338 = vunpack.c.l.b16 %v201
    %v339 = vunpack.c.h.b16 %v201
    %v340 = vunpack.c.l.b16 %v202
    %v341 = vunpack.c.l.b16 %v203
    %v342 = vunpack.c.h.b16 %v203
    %v343 = vunpack.c.l.b16 %v204
    %v344 = vunpack.c.l.b16 %v205
    %v345 = vunpack.c.h.b16 %v205
    %v346 = vunpack.c.l.b16 %v206
    %v347 = vunpack.c.l.b16 %v207
    %v348 = vunpack.c.h.b16 %v207
    %v349 = vunpack.c.l.b16 %v208
    %v350 = vunpack.c.l.b16 %v209
    %v351 = vunpack.c.h.b16 %v209
    %v352 = vunpack.c.l.b16 %v210
    %v353 = vunpack.c.l.b16 %v211
    %v354 = vunpack.c.h.b16 %v211
    %v355 = vunpack.c.l.b16 %v212
    %v356 = vunpack.c.l.b16 %v213
    %v357 = vunpack.c.h.b16 %v213
    %v358 = vunpack.c.l.b16 %v214
    %v359 = vunpack.c.l.b16 %v215
    %v360 = vunpack.c.h.b16 %v215
    %v361 = vunpack.c.l.b16 %v216
    %v362 = vunpack.c.l.b16 %v217
    %v363 = vunpack.c.h.b16 %v217
    %v364 = vunpack.c.l.b16 %v218
    %v365 = vunpack.c.l.b16 %v219
    %v366 = vunpack.c.h.b16 %v219
    %v367 = vunpack.c.l.b16 %v220
    %v368 = vunpack.c.l.b16 %v221
    %v369 = vunpack.c.h.b16 %v221
    %v370 = vunpack.c.l.b16 %v222
    %v371 = vunpack.c.l.b16 %v223
    %v372 = vunpack.c.h.b16 %v223
    %v373 = vunpack.c.l.b16 %v224
    %v374 = vunpack.c.l.b16 %v225
    %v375 = vunpack.c.h.b16 %v225
    %v376 = vunpack.c.l.b16 %v226
    %v377 = vunpack.c.l.b16 %v227
    %v378 = vunpack.c.h.b16 %v227
    %v379 = vunpack.c.l.b16 %v228
    %v380 = vunpack.c.l.b16 %v229
    %v381 = vunpack.c.h.b16 %v229
    %v382 = vunpack.c.l.b16 %v230
    %v383 = vunpack.c.l.b16 %v231
    %v384 = vunpack.c.h.b16 %v231
    %v385 = vunpack.c.l.b16 %v232
    %v386 = vunpack.c.l.b16 %v233
    %v387 = vunpack.c.h.b16 %v233
    %v388 = vunpack.c.l.b16 %v234
    %v389 = vunpack.c.l.b16 %v235
    %v390 = vunpack.c.h.b16 %v235
    %v391 = vunpack.c.l.b16 %v236
    %v392 = vunpack.c.l.b16 %v237
    %v393 = vunpack.c.h.b16 %v237
    %v394 = vunpack.c.l.b16 %v238
    %v395 = vunpack.c.l.b16 %v239
    %v396 = vunpack.c.h.b16 %v239
    %v397 = vunpack.c.l.b16 %v240
    %v398 = vunpack.c.l.b16 %v241
    %v399 = vunpack.c.h.b16 %v241
    %v400 = vunpack.c.l.b16 %v242
    %v401 = vunpack.c.l.b16 %v243
    %v402 = vunpack.c.h.b16 %v243
    %v403 = vunpack.c.l.b16 %v244
    %v404 = vunpack.c.l.b16 %v245
    %v405 = vunpack.c.h.b16 %v245
    %v406 = vunpack.c.l.b16 %v246
    %v407 = vunpack.c.l.b16 %v247
    %v408 = vunpack.c.h.b16 %v247
    %v409 = vunpack.c.l.b16 %v248
    %v410 = vunpack.c.l.b16 %v249
    %v411 = vunpack.c.h.b16 %v249
    %v412 = vunpack.c.l.b16 %v250
    %v413 = vunpack.c.l.b16 %v251
    %v414 = vunpack.c.h.b16 %v251
    %v415 = vunpack.c.l.b16 %v252
    %v416 = vunpack.c.l.b16 %v253
    %v417 = vunpack.c.h.b16 %v253
    %v418 = vunpack.c.l.b16 %v254
    %v419 = vunpack.c.l.b16 %v255
    %v420 = vunpack.c.h.b16 %v255
    %v421 = vunpack.c.l.b16 %v256
    %v422 = vunpack.c.l.b16 %v257
    %v423 = vunpack.c.h.b16 %v257
    %v424 = vunpack.c.l.b16 %v258
    %v425 = vunpack.c.l.b16 %v259
    %v426 = vunpack.c.h.b16 %v259
    %v427 = vunpack.c.l.b16 %v260
    %v428 = vunpack.c.l.b16 %v261
    %v429 = vunpack.c.h.b16 %v261
    %v430 = vunpack.c.l.b16 %v262
    %v431 = vpack.c.b16 %v338, %v335
    %v432 = vpack.c.b16 %v339, %v336
    %v433 = vpack.c.b16 %v340, %v337
    %v434 = vpack.c.b16 %v344, %v341
    %v435 = vpack.c.b16 %v345, %v342
    %v436 = vpack.c.b16 %v346, %v343
    %v437 = vpack.c.b16 %v350, %v347
    %v438 = vpack.c.b16 %v351, %v348
    %v439 = vpack.c.b16 %v352, %v349
    %v440 = vpack.c.b16 %v356, %v353
    %v441 = vpack.c.b16 %v357, %v354
    %v442 = vpack.c.b16 %v358, %v355
    %v443 = vpack.c.b16 %v362, %v359
    %v444 = vpack.c.b16 %v363, %v360
    %v445 = vpack.c.b16 %v364, %v361
    %v446 = vpack.c.b16 %v368, %v365
    %v447 = vpack.c.b16 %v369, %v366
    %v448 = vpack.c.b16 %v370, %v367
    %v449 = vpack.c.b16 %v374, %v371
    %v450 = vpack.c.b16 %v375, %v372
    %v451 = vpack.c.b16 %v376, %v373
    %v452 = vpack.c.b16 %v380, %v377
    %v453 = vpack.c.b16 %v381, %v378
    %v454 = vpack.c.b16 %v382, %v379
    %v455 = vpack.c.b16 %v386, %v383
    %v456 = vpack.c.b16 %v387, %v384
    %v457 = vpack.c.b16 %v388, %v385
    %v458 = vpack.c.b16 %v392, %v389
    %v459 = vpack.c.b16 %v393, %v390
    %v460 = vpack.c.b16 %v394, %v391
    %v461 = vpack.c.b16 %v398, %v395
    %v462 = vpack.c.b16 %v399, %v396
    %v463 = vpack.c.b16 %v400, %v397
    %v464 = vpack.c.b16 %v404, %v401
    %v465 = vpack.c.b16 %v405, %v402
    %v466 = vpack.c.b16 %v406, %v403
    %v467 = vpack.c.b16 %v410, %v407
    %v468 = vpack.c.b16 %v411, %v408
    %v469 = vpack.c.b16 %v412, %v409
    %v470 = vpack.c.b16 %v416, %v413
    %v471 = vpack.c.b16 %v417, %v414
    %v472 = vpack.c.b16 %v418, %v415
    %v473 = vpack.c.b16 %v422, %v419
    %v474 = vpack.c.b16 %v423, %v420
    %v475 = vpack.c.b16 %v424, %v421
    %v476 = vpack.c.b16 %v428, %v425
    %v477 = vpack.c.b16 %v429, %v426
    %v478 = vpack.c.b16 %v430, %v427
    %527 = vmatpush.bf16.msra.mxu0 %v452
    %528 = vmatpush.bf16.msra.mxu0 %v449
    %529 = vmatpush.bf16.msra.mxu0 %v446
    %530 = vmatpush.bf16.msra.mxu0 %v443
    %531 = vmatpush.bf16.msra.mxu0 %v440
    %532 = vmatpush.bf16.msra.mxu0 %v437
    %533 = vmatpush.bf16.msra.mxu0 %v434
    %534 = vmatpush.bf16.msra.mxu0 %v431
    %535 = vmatmul.bf16.gmra.mxu0 %v191
    %v536 = vpop.f32.mrf.mxu0
    %v537 = vadd.f32 %v265, %v536
    %v538 = vpop.f32.mrf.mxu0
    %v539 = vadd.f32 %v265, %v538
    %540 = vmatmul.bf16.gmra.mxu0 %v193
    %v541 = vpop.f32.mrf.mxu0
    %v542 = vadd.f32 %v265, %v541
    %v543 = vpop.f32.mrf.mxu0
    %v544 = vadd.f32 %v265, %v543
    %545 = vmatmul.bf16.gmra.mxu0 %v195
    %v546 = vpop.f32.mrf.mxu0
    %v547 = vadd.f32 %v265, %v546
    %v548 = vpop.f32.mrf.mxu0
    %v549 = vadd.f32 %v265, %v548
    %550 = vmatmul.bf16.gmra.mxu0 %v197
    %v551 = vpop.f32.mrf.mxu0
    %v552 = vadd.f32 %v265, %v551
    %v553 = vpop.f32.mrf.mxu0
    %v554 = vadd.f32 %v265, %v553
    %555 = vdwg.mxu0
    %556 = vmatpush.bf16.msra.mxu0 %v476
    %557 = vmatpush.bf16.msra.mxu0 %v473
    %558 = vmatpush.bf16.msra.mxu0 %v470
    %559 = vmatpush.bf16.msra.mxu0 %v467
    %560 = vmatpush.bf16.msra.mxu0 %v464
    %561 = vmatpush.bf16.msra.mxu0 %v461
    %562 = vmatpush.bf16.msra.mxu0 %v458
    %563 = vmatpush.bf16.msra.mxu0 %v455
    %564 = vmatmul.bf16.gmra.mxu0 %v192
    %v565 = vpop.f32.mrf.mxu0
    %v566 = vadd.f32 %v537, %v565
    %v567 = vpop.f32.mrf.mxu0
    %v568 = vadd.f32 %v539, %v567
    %569 = vmatmul.bf16.gmra.mxu0 %v194
    %v570 = vpop.f32.mrf.mxu0
    %v571 = vadd.f32 %v542, %v570
    %v572 = vpop.f32.mrf.mxu0
    %v573 = vadd.f32 %v544, %v572
    %574 = vmatmul.bf16.gmra.mxu0 %v196
    %v575 = vpop.f32.mrf.mxu0
    %v576 = vadd.f32 %v547, %v575
    %v577 = vpop.f32.mrf.mxu0
    %v578 = vadd.f32 %v549, %v577
    %579 = vmatmul.bf16.gmra.mxu0 %v198
    %v580 = vpop.f32.mrf.mxu0
    %v581 = vadd.f32 %v552, %v580
    %v582 = vpop.f32.mrf.mxu0
    %v583 = vadd.f32 %v554, %v582
    %584 = vdwg.mxu0
    %585 = vmatpush.bf16.msra.mxu0 %v453
    %586 = vmatpush.bf16.msra.mxu0 %v450
    %587 = vmatpush.bf16.msra.mxu0 %v447
    %588 = vmatpush.bf16.msra.mxu0 %v444
    %589 = vmatpush.bf16.msra.mxu0 %v441
    %590 = vmatpush.bf16.msra.mxu0 %v438
    %591 = vmatpush.bf16.msra.mxu0 %v435
    %592 = vmatpush.bf16.msra.mxu0 %v432
    %593 = vmatmul.bf16.gmra.mxu0 %v191
    %v594 = vpop.f32.mrf.mxu0
    %v595 = vadd.f32 %v266, %v594
    %v596 = vpop.f32.mrf.mxu0
    %v597 = vadd.f32 %v266, %v596
    %598 = vmatmul.bf16.gmra.mxu0 %v193
    %v599 = vpop.f32.mrf.mxu0
    %v600 = vadd.f32 %v266, %v599
    %v601 = vpop.f32.mrf.mxu0
    %v602 = vadd.f32 %v266, %v601
    %603 = vmatmul.bf16.gmra.mxu0 %v195
    %v604 = vpop.f32.mrf.mxu0
    %v605 = vadd.f32 %v266, %v604
    %v606 = vpop.f32.mrf.mxu0
    %v607 = vadd.f32 %v266, %v606
    %608 = vmatmul.bf16.gmra.mxu0 %v197
    %v609 = vpop.f32.mrf.mxu0
    %v610 = vadd.f32 %v266, %v609
    %v611 = vpop.f32.mrf.mxu0
    %v612 = vadd.f32 %v266, %v611
    %613 = vdwg.mxu0
    %614 = vmatpush.bf16.msra.mxu0 %v477
    %615 = vmatpush.bf16.msra.mxu0 %v474
    %616 = vmatpush.bf16.msra.mxu0 %v471
    %617 = vmatpush.bf16.msra.mxu0 %v468
    %618 = vmatpush.bf16.msra.mxu0 %v465
    %619 = vmatpush.bf16.msra.mxu0 %v462
    %620 = vmatpush.bf16.msra.mxu0 %v459
    %621 = vmatpush.bf16.msra.mxu0 %v456
    %622 = vmatmul.bf16.gmra.mxu0 %v192
    %v623 = vpop.f32.mrf.mxu0
    %v624 = vadd.f32 %v595, %v623
    %v625 = vpop.f32.mrf.mxu0
    %v626 = vadd.f32 %v597, %v625
    %627 = vmatmul.bf16.gmra.mxu0 %v194
    %v628 = vpop.f32.mrf.mxu0
    %v629 = vadd.f32 %v600, %v628
    %v630 = vpop.f32.mrf.mxu0
    %v631 = vadd.f32 %v602, %v630
    %632 = vmatmul.bf16.gmra.mxu0 %v196
    %v633 = vpop.f32.mrf.mxu0
    %v634 = vadd.f32 %v605, %v633
    %v635 = vpop.f32.mrf.mxu0
    %v636 = vadd.f32 %v607, %v635
    %637 = vmatmul.bf16.gmra.mxu0 %v198
    %v638 = vpop.f32.mrf.mxu0
    %v639 = vadd.f32 %v610, %v638
    %v640 = vpop.f32.mrf.mxu0
    %v641 = vadd.f32 %v612, %v640
    %642 = vdwg.mxu0
    %643 = vmatpush.bf16.msra.mxu0 %v454
    %644 = vmatpush.bf16.msra.mxu0 %v451
    %645 = vmatpush.bf16.msra.mxu0 %v448
    %646 = vmatpush.bf16.msra.mxu0 %v445
    %647 = vmatpush.bf16.msra.mxu0 %v442
    %648 = vmatpush.bf16.msra.mxu0 %v439
    %649 = vmatpush.bf16.msra.mxu0 %v436
    %650 = vmatpush.bf16.msra.mxu0 %v433
    %651 = vmatmul.bf16.gmra.mxu0 %v191
    %v652 = vpop.f32.mrf.mxu0
    %v653 = vadd.f32 %v267, %v652
    %v654 = vpop.f32.mrf.mxu0
    %v655 = vadd.f32 %v267, %v654
    %656 = vmatmul.bf16.gmra.mxu0 %v193
    %v657 = vpop.f32.mrf.mxu0
    %v658 = vadd.f32 %v267, %v657
    %v659 = vpop.f32.mrf.mxu0
    %v660 = vadd.f32 %v267, %v659
    %661 = vmatmul.bf16.gmra.mxu0 %v195
    %v662 = vpop.f32.mrf.mxu0
    %v663 = vadd.f32 %v267, %v662
    %v664 = vpop.f32.mrf.mxu0
    %v665 = vadd.f32 %v267, %v664
    %666 = vmatmul.bf16.gmra.mxu0 %v197
    %v667 = vpop.f32.mrf.mxu0
    %v668 = vadd.f32 %v267, %v667
    %v669 = vpop.f32.mrf.mxu0
    %v670 = vadd.f32 %v267, %v669
    %671 = vdwg.mxu0
    %672 = vmatpush.bf16.msra.mxu0 %v478
    %673 = vmatpush.bf16.msra.mxu0 %v475
    %674 = vmatpush.bf16.msra.mxu0 %v472
    %675 = vmatpush.bf16.msra.mxu0 %v469
    %676 = vmatpush.bf16.msra.mxu0 %v466
    %677 = vmatpush.bf16.msra.mxu0 %v463
    %678 = vmatpush.bf16.msra.mxu0 %v460
    %679 = vmatpush.bf16.msra.mxu0 %v457
    %680 = vmatmul.bf16.gmra.mxu0 %v192
    %v681 = vpop.f32.mrf.mxu0
    %v682 = vadd.f32 %v653, %v681
    %v683 = vpop.f32.mrf.mxu0
    %v684 = vadd.f32 %v655, %v683
    %685 = vmatmul.bf16.gmra.mxu0 %v194
    %v686 = vpop.f32.mrf.mxu0
    %v687 = vadd.f32 %v658, %v686
    %v688 = vpop.f32.mrf.mxu0
    %v689 = vadd.f32 %v660, %v688
    %690 = vmatmul.bf16.gmra.mxu0 %v196
    %v691 = vpop.f32.mrf.mxu0
    %v692 = vadd.f32 %v663, %v691
    %v693 = vpop.f32.mrf.mxu0
    %v694 = vadd.f32 %v665, %v693
    %695 = vmatmul.bf16.gmra.mxu0 %v198
    %v696 = vpop.f32.mrf.mxu0
    %v697 = vadd.f32 %v668, %v696
    %v698 = vpop.f32.mrf.mxu0
    %v699 = vadd.f32 %v670, %v698
    %700 = vdwg.mxu0
    %v701 = vld [vmem:[#allocation5] sm:$0xff]
    %v702 = vld [vmem:[#allocation5 + $0x8] sm:$0xf]
    %v703 = vld [vmem:[#allocation5 + $0xc] sm:$0xff]
    %v704 = vld [vmem:[#allocation5 + $0x14] sm:$0xf]
    %v705 = vld [vmem:[#allocation5 + $0x18] sm:$0xff]
    %v706 = vld [vmem:[#allocation5 + $0x20] sm:$0xf]
    %v707 = vld [vmem:[#allocation5 + $0x24] sm:$0xff]
    %v708 = vld [vmem:[#allocation5 + $0x2c] sm:$0xf]
    %v709 = vld [vmem:[#allocation5 + $0x30] sm:$0xff]
    %v710 = vld [vmem:[#allocation5 + $0x38] sm:$0xf]
    %v711 = vld [vmem:[#allocation5 + $0x3c] sm:$0xff]
    %v712 = vld [vmem:[#allocation5 + $0x44] sm:$0xf]
    %v713 = vld [vmem:[#allocation5 + $0x48] sm:$0xff]
    %v714 = vld [vmem:[#allocation5 + $0x50] sm:$0xf]
    %v715 = vld [vmem:[#allocation5 + $0x54] sm:$0xff]
    %v716 = vld [vmem:[#allocation5 + $0x5c] sm:$0xf]
    %v717 = vld [vmem:[#allocation5 + $0x60] sm:$0xff]
    %v718 = vld [vmem:[#allocation5 + $0x68] sm:$0xf]
    %v719 = vld [vmem:[#allocation5 + $0x6c] sm:$0xff]
    %v720 = vld [vmem:[#allocation5 + $0x74] sm:$0xf]
    %v721 = vld [vmem:[#allocation5 + $0x78] sm:$0xff]
    %v722 = vld [vmem:[#allocation5 + $0x80] sm:$0xf]
    %v723 = vld [vmem:[#allocation5 + $0x84] sm:$0xff]
    %v724 = vld [vmem:[#allocation5 + $0x8c] sm:$0xf]
    %v725 = vld [vmem:[#allocation5 + $0x90] sm:$0xff]
    %v726 = vld [vmem:[#allocation5 + $0x98] sm:$0xf]
    %v727 = vld [vmem:[#allocation5 + $0x9c] sm:$0xff]
    %v728 = vld [vmem:[#allocation5 + $0xa4] sm:$0xf]
    %v729 = vld [vmem:[#allocation5 + $0xa8] sm:$0xff]
    %v730 = vld [vmem:[#allocation5 + $0xb0] sm:$0xf]
    %v731 = vld [vmem:[#allocation5 + $0xb4] sm:$0xff]
    %v732 = vld [vmem:[#allocation5 + $0xbc] sm:$0xf]
    %v733 = vld [vmem:[#allocation7] sm:$0xff]
    %v734 = vld [vmem:[#allocation7 + $0x8] sm:$0xff]
    %v735 = vld [vmem:[#allocation7 + $0x10] sm:$0xff]
    %v736 = vld [vmem:[#allocation7 + $0x18] sm:$0xff]
    %v737 = vld [vmem:[#allocation7 + $0x20] sm:$0xff]
    %v738 = vld [vmem:[#allocation7 + $0x28] sm:$0xff]
    %v739 = vld [vmem:[#allocation7 + $0x30] sm:$0xff]
    %v740 = vld [vmem:[#allocation7 + $0x38] sm:$0xff]
    %v741 = vld [vmem:[#allocation7 + $0x40] sm:$0xff]
    %v742 = vld [vmem:[#allocation7 + $0x48] sm:$0xff]
    %v743 = vld [vmem:[#allocation7 + $0x50] sm:$0xff]
    %v744 = vld [vmem:[#allocation7 + $0x58] sm:$0xff]
    %v745 = vld [vmem:[#allocation7 + $0x60] sm:$0xff]
    %v746 = vld [vmem:[#allocation7 + $0x68] sm:$0xff]
    %v747 = vld [vmem:[#allocation7 + $0x70] sm:$0xff]
    %v748 = vld [vmem:[#allocation7 + $0x78] sm:$0xff]
    %v749 = vld [vmem:[#allocation7 + $0x80] sm:$0xff]
    %v750 = vld [vmem:[#allocation7 + $0x88] sm:$0xff]
    %v751 = vld [vmem:[#allocation7 + $0x90] sm:$0xff]
    %v752 = vld [vmem:[#allocation7 + $0x98] sm:$0xff]
    %v753 = vld [vmem:[#allocation7 + $0xa0] sm:$0xff]
    %v754 = vld [vmem:[#allocation7 + $0xa8] sm:$0xff]
    %v755 = vld [vmem:[#allocation7 + $0xb0] sm:$0xff]
    %v756 = vld [vmem:[#allocation7 + $0xb8] sm:$0xff]
    %v757 = vld [vmem:[#allocation7 + $0xc0] sm:$0xff]
    %v758 = vld [vmem:[#allocation7 + $0xc8] sm:$0xff]
    %v759 = vld [vmem:[#allocation7 + $0xd0] sm:$0xff]
    %v760 = vld [vmem:[#allocation7 + $0xd8] sm:$0xff]
    %v761 = vld [vmem:[#allocation7 + $0xe0] sm:$0xff]
    %v762 = vld [vmem:[#allocation7 + $0xe8] sm:$0xff]
    %v763 = vld [vmem:[#allocation7 + $0xf0] sm:$0xff]
    %v764 = vld [vmem:[#allocation7 + $0xf8] sm:$0xff]
    %v765 = vld [vmem:[#allocation7 + $0x100] sm:$0xff]
    %v766 = vld [vmem:[#allocation7 + $0x108] sm:$0xff]
    %v767 = vld [vmem:[#allocation7 + $0x110] sm:$0xff]
    %v768 = vld [vmem:[#allocation7 + $0x118] sm:$0xff]
    %v769 = vld [vmem:[#allocation7 + $0x120] sm:$0xff]
    %v770 = vld [vmem:[#allocation7 + $0x128] sm:$0xff]
    %v771 = vld [vmem:[#allocation7 + $0x130] sm:$0xff]
    %v772 = vld [vmem:[#allocation7 + $0x138] sm:$0xff]
    %v773 = vld [vmem:[#allocation7 + $0x140] sm:$0xff]
    %v774 = vld [vmem:[#allocation7 + $0x148] sm:$0xff]
    %v775 = vld [vmem:[#allocation7 + $0x150] sm:$0xff]
    %v776 = vld [vmem:[#allocation7 + $0x158] sm:$0xff]
    %v777 = vld [vmem:[#allocation7 + $0x160] sm:$0xff]
    %v778 = vld [vmem:[#allocation7 + $0x168] sm:$0xff]
    %v779 = vld [vmem:[#allocation7 + $0x170] sm:$0xff]
    %v780 = vld [vmem:[#allocation7 + $0x178] sm:$0xff]
    %v781 = vld [vmem:[#allocation7 + $0x180] sm:$0xff]
    %v782 = vld [vmem:[#allocation7 + $0x188] sm:$0xff]
    %v783 = vld [vmem:[#allocation7 + $0x190] sm:$0xff]
    %v784 = vld [vmem:[#allocation7 + $0x198] sm:$0xff]
    %v785 = vld [vmem:[#allocation7 + $0x1a0] sm:$0xff]
    %v786 = vld [vmem:[#allocation7 + $0x1a8] sm:$0xff]
    %v787 = vld [vmem:[#allocation7 + $0x1b0] sm:$0xff]
    %v788 = vld [vmem:[#allocation7 + $0x1b8] sm:$0xff]
    %v789 = vld [vmem:[#allocation7 + $0x1c0] sm:$0xff]
    %v790 = vld [vmem:[#allocation7 + $0x1c8] sm:$0xff]
    %v791 = vld [vmem:[#allocation7 + $0x1d0] sm:$0xff]
    %v792 = vld [vmem:[#allocation7 + $0x1d8] sm:$0xff]
    %v793 = vld [vmem:[#allocation7 + $0x1e0] sm:$0xff]
    %v794 = vld [vmem:[#allocation7 + $0x1e8] sm:$0xff]
    %v795 = vld [vmem:[#allocation7 + $0x1f0] sm:$0xff]
    %v796 = vld [vmem:[#allocation7 + $0x1f8] sm:$0xff]
    %v797 = vld [vmem:[%s6] sm:$0x1]
    %v798 = vld [vmem:[%s7] sm:$0x3]
    %v799 = vld [vmem:[%s8] sm:$0x1]
    %v800 = vld [vmem:[%s9] sm:$0x1]
    %v801 = vld [vmem:[%s1] sm:$0xff]
    %s802 = scalar_lea.vmem %s1, 8
    %v803 = vld [vmem:[%s802] sm:$0xff]
    %v804 = vpack.c.bf16 %v801, %v801
    %v837 = vunpack.c.l.b16 %v701
    %v838 = vunpack.c.h.b16 %v701
    %v839 = vunpack.c.l.b16 %v702
    %v840 = vunpack.c.l.b16 %v703
    %v841 = vunpack.c.h.b16 %v703
    %v842 = vunpack.c.l.b16 %v704
    %v843 = vunpack.c.l.b16 %v705
    %v844 = vunpack.c.h.b16 %v705
    %v845 = vunpack.c.l.b16 %v706
    %v846 = vunpack.c.l.b16 %v707
    %v847 = vunpack.c.h.b16 %v707
    %v848 = vunpack.c.l.b16 %v708
    %v849 = vunpack.c.l.b16 %v709
    %v850 = vunpack.c.h.b16 %v709
    %v851 = vunpack.c.l.b16 %v710
    %v852 = vunpack.c.l.b16 %v711
    %v853 = vunpack.c.h.b16 %v711
    %v854 = vunpack.c.l.b16 %v712
    %v855 = vunpack.c.l.b16 %v713
    %v856 = vunpack.c.h.b16 %v713
    %v857 = vunpack.c.l.b16 %v714
    %v858 = vunpack.c.l.b16 %v715
    %v859 = vunpack.c.h.b16 %v715
    %v860 = vunpack.c.l.b16 %v716
    %v861 = vunpack.c.l.b16 %v717
    %v862 = vunpack.c.h.b16 %v717
    %v863 = vunpack.c.l.b16 %v718
    %v864 = vunpack.c.l.b16 %v719
    %v865 = vunpack.c.h.b16 %v719
    %v866 = vunpack.c.l.b16 %v720
    %v867 = vunpack.c.l.b16 %v721
    %v868 = vunpack.c.h.b16 %v721
    %v869 = vunpack.c.l.b16 %v722
    %v870 = vunpack.c.l.b16 %v723
    %v871 = vunpack.c.h.b16 %v723
    %v872 = vunpack.c.l.b16 %v724
    %v873 = vunpack.c.l.b16 %v725
    %v874 = vunpack.c.h.b16 %v725
    %v875 = vunpack.c.l.b16 %v726
    %v876 = vunpack.c.l.b16 %v727
    %v877 = vunpack.c.h.b16 %v727
    %v878 = vunpack.c.l.b16 %v728
    %v879 = vunpack.c.l.b16 %v729
    %v880 = vunpack.c.h.b16 %v729
    %v881 = vunpack.c.l.b16 %v730
    %v882 = vunpack.c.l.b16 %v731
    %v883 = vunpack.c.h.b16 %v731
    %v884 = vunpack.c.l.b16 %v732
    %v885 = vpack.c.b16 %v840, %v837
    %v886 = vpack.c.b16 %v841, %v838
    %v887 = vpack.c.b16 %v842, %v839
    %v888 = vpack.c.b16 %v846, %v843
    %v889 = vpack.c.b16 %v847, %v844
    %v890 = vpack.c.b16 %v848, %v845
    %v891 = vpack.c.b16 %v852, %v849
    %v892 = vpack.c.b16 %v853, %v850
    %v893 = vpack.c.b16 %v854, %v851
    %v894 = vpack.c.b16 %v858, %v855
    %v895 = vpack.c.b16 %v859, %v856
    %v896 = vpack.c.b16 %v860, %v857
    %v897 = vpack.c.b16 %v864, %v861
    %v898 = vpack.c.b16 %v865, %v862
    %v899 = vpack.c.b16 %v866, %v863
    %v900 = vpack.c.b16 %v870, %v867
    %v901 = vpack.c.b16 %v871, %v868
    %v902 = vpack.c.b16 %v872, %v869
    %v903 = vpack.c.b16 %v876, %v873
    %v904 = vpack.c.b16 %v877, %v874
    %v905 = vpack.c.b16 %v878, %v875
    %v906 = vpack.c.b16 %v882, %v879
    %v907 = vpack.c.b16 %v883, %v880
    %v908 = vpack.c.b16 %v884, %v881
    %933 = vmatpush.bf16.msra.mxu0 %v906
    %934 = vmatpush.bf16.msra.mxu0 %v903
    %935 = vmatpush.bf16.msra.mxu0 %v900
    %936 = vmatpush.bf16.msra.mxu0 %v897
    %937 = vmatpush.bf16.msra.mxu0 %v894
    %938 = vmatpush.bf16.msra.mxu0 %v891
    %939 = vmatpush.bf16.msra.mxu0 %v888
    %940 = vmatpush.bf16.msra.mxu0 %v885
    %941 = vmatmul.bf16.gmra.mxu0 %v804
    %v942 = vpop.f32.mrf.mxu0
    %v943 = vadd.f32 0.0, %v942
    %v944 = vpop.f32.mrf.mxu0
    %945 = vdwg.mxu0
    %946 = vmatpush.bf16.msra.mxu0 %v907
    %947 = vmatpush.bf16.msra.mxu0 %v904
    %948 = vmatpush.bf16.msra.mxu0 %v901
    %949 = vmatpush.bf16.msra.mxu0 %v898
    %950 = vmatpush.bf16.msra.mxu0 %v895
    %951 = vmatpush.bf16.msra.mxu0 %v892
    %952 = vmatpush.bf16.msra.mxu0 %v889
    %953 = vmatpush.bf16.msra.mxu0 %v886
    %954 = vmatmul.bf16.gmra.mxu0 %v804
    %v955 = vpop.f32.mrf.mxu0
    %v956 = vadd.f32 0.0, %v955
    %v957 = vpop.f32.mrf.mxu0
    %958 = vdwg.mxu0
    %959 = vmatpush.bf16.msra.mxu0 %v908
    %960 = vmatpush.bf16.msra.mxu0 %v905
    %961 = vmatpush.bf16.msra.mxu0 %v902
    %962 = vmatpush.bf16.msra.mxu0 %v899
    %963 = vmatpush.bf16.msra.mxu0 %v896
    %964 = vmatpush.bf16.msra.mxu0 %v893
    %965 = vmatpush.bf16.msra.mxu0 %v890
    %966 = vmatpush.bf16.msra.mxu0 %v887
    %967 = vmatmul.bf16.gmra.mxu0 %v804
    %v968 = vpop.f32.mrf.mxu0
    %v969 = vadd.f32 0.0, %v968
    %v970 = vpop.f32.mrf.mxu0
    %971 = vdwg.mxu0
    %v972 = vadd.f32 %v566, %v943
    %v973 = vadd.f32 %v624, %v956
    %v974 = vsub.f32 0.0, %v972
    %v975 = vsub.f32 0.0, %v973
    %v976 = vmul.f32 %v974, 1.442695
    %v977 = vpow.pop %v976
    %v978 = vmul.f32 %v975, 1.442695
    %v979 = vpow.pop %v978
    %v980 = vadd.f32 %v977, 1.0
    %v981 = vadd.f32 %v979, 1.0
    %v982 = vrcp.pop %v980
    %v983 = vmul.f32 %v980, %v982
    %v984 = vsub.f32 1.0, %v983
    %v985 = vmul.f32 %v982, %v984
    %v986 = vadd.f32 %v982, %v985
    %vm987 = vweird.f32 %v980
    %vm988 = vweird.f32 %v982
    %vm989 = vmor %vm987, %vm988
    %v990 = vsel %vm989, %v982, %v986
    %v991 = vand.u32 2147483647, %v980
    %vm992 = vcmp.eq.f32.partialorder %v991, 8.507059e+37
    %v993 = vand.u32 %v980, 2147483648
    %v994 = vor.u32 1.1754944e-38, %v993
    %v995 = vsel %vm992, %v994, %v990
    %v996 = vmul.f32 1.0, %v995
    %v997 = vrcp.pop %v981
    %v998 = vmul.f32 %v981, %v997
    %v999 = vsub.f32 1.0, %v998
    %v1000 = vmul.f32 %v997, %v999
    %v1001 = vadd.f32 %v997, %v1000
    %vm1002 = vweird.f32 %v981
    %vm1003 = vweird.f32 %v997
    %vm1004 = vmor %vm1002, %vm1003
    %v1005 = vsel %vm1004, %v997, %v1001
    %v1006 = vand.u32 2147483647, %v981
    %vm1007 = vcmp.eq.f32.partialorder %v1006, 8.507059e+37
    %v1008 = vand.u32 %v981, 2147483648
    %v1009 = vor.u32 1.1754944e-38, %v1008
    %v1010 = vsel %vm1007, %v1009, %v1005
    %v1011 = vmul.f32 1.0, %v1010
    %v1013 = vperm.slane %v797, 0
    %v1015 = vadd.f32 %v969, %v1013
    %v1016 = vmul.f32 %v996, %v1015
    %v1017 = vadd.f32 %v682, %v1016
    %v1018 = vtanh.pop %v1017
    %v1019 = vsub.f32 1.0, %v1011
    %v1020 = vmul.f32 %v1019, %v1018
    %v1021 = vmul.f32 %v1011, %v801
    %v1022 = vadd.f32 %v1020, %v1021
    %v1023 = vpack.c.bf16 %v1022, %v1022
    %v1024 = vpack.c.bf16 %v803, %v803
    %v1089 = vunpack.c.l.b16 %v733
    %v1090 = vunpack.c.h.b16 %v733
    %v1091 = vunpack.c.l.b16 %v734
    %v1092 = vunpack.c.h.b16 %v734
    %v1093 = vunpack.c.l.b16 %v735
    %v1094 = vunpack.c.h.b16 %v735
    %v1095 = vunpack.c.l.b16 %v736
    %v1096 = vunpack.c.h.b16 %v736
    %v1097 = vunpack.c.l.b16 %v737
    %v1098 = vunpack.c.h.b16 %v737
    %v1099 = vunpack.c.l.b16 %v738
    %v1100 = vunpack.c.h.b16 %v738
    %v1101 = vunpack.c.l.b16 %v739
    %v1102 = vunpack.c.h.b16 %v739
    %v1103 = vunpack.c.l.b16 %v740
    %v1104 = vunpack.c.h.b16 %v740
    %v1105 = vunpack.c.l.b16 %v741
    %v1106 = vunpack.c.h.b16 %v741
    %v1107 = vunpack.c.l.b16 %v742
    %v1108 = vunpack.c.h.b16 %v742
    %v1109 = vunpack.c.l.b16 %v743
    %v1110 = vunpack.c.h.b16 %v743
    %v1111 = vunpack.c.l.b16 %v744
    %v1112 = vunpack.c.h.b16 %v744
    %v1113 = vunpack.c.l.b16 %v745
    %v1114 = vunpack.c.h.b16 %v745
    %v1115 = vunpack.c.l.b16 %v746
    %v1116 = vunpack.c.h.b16 %v746
    %v1117 = vunpack.c.l.b16 %v747
    %v1118 = vunpack.c.h.b16 %v747
    %v1119 = vunpack.c.l.b16 %v748
    %v1120 = vunpack.c.h.b16 %v748
    %v1121 = vunpack.c.l.b16 %v749
    %v1122 = vunpack.c.h.b16 %v749
    %v1123 = vunpack.c.l.b16 %v750
    %v1124 = vunpack.c.h.b16 %v750
    %v1125 = vunpack.c.l.b16 %v751
    %v1126 = vunpack.c.h.b16 %v751
    %v1127 = vunpack.c.l.b16 %v752
    %v1128 = vunpack.c.h.b16 %v752
    %v1129 = vunpack.c.l.b16 %v753
    %v1130 = vunpack.c.h.b16 %v753
    %v1131 = vunpack.c.l.b16 %v754
    %v1132 = vunpack.c.h.b16 %v754
    %v1133 = vunpack.c.l.b16 %v755
    %v1134 = vunpack.c.h.b16 %v755
    %v1135 = vunpack.c.l.b16 %v756
    %v1136 = vunpack.c.h.b16 %v756
    %v1137 = vunpack.c.l.b16 %v757
    %v1138 = vunpack.c.h.b16 %v757
    %v1139 = vunpack.c.l.b16 %v758
    %v1140 = vunpack.c.h.b16 %v758
    %v1141 = vunpack.c.l.b16 %v759
    %v1142 = vunpack.c.h.b16 %v759
    %v1143 = vunpack.c.l.b16 %v760
    %v1144 = vunpack.c.h.b16 %v760
    %v1145 = vunpack.c.l.b16 %v761
    %v1146 = vunpack.c.h.b16 %v761
    %v1147 = vunpack.c.l.b16 %v762
    %v1148 = vunpack.c.h.b16 %v762
    %v1149 = vunpack.c.l.b16 %v763
    %v1150 = vunpack.c.h.b16 %v763
    %v1151 = vunpack.c.l.b16 %v764
    %v1152 = vunpack.c.h.b16 %v764
    %v1153 = vunpack.c.l.b16 %v765
    %v1154 = vunpack.c.h.b16 %v765
    %v1155 = vunpack.c.l.b16 %v766
    %v1156 = vunpack.c.h.b16 %v766
    %v1157 = vunpack.c.l.b16 %v767
    %v1158 = vunpack.c.h.b16 %v767
    %v1159 = vunpack.c.l.b16 %v768
    %v1160 = vunpack.c.h.b16 %v768
    %v1161 = vunpack.c.l.b16 %v769
    %v1162 = vunpack.c.h.b16 %v769
    %v1163 = vunpack.c.l.b16 %v770
    %v1164 = vunpack.c.h.b16 %v770
    %v1165 = vunpack.c.l.b16 %v771
    %v1166 = vunpack.c.h.b16 %v771
    %v1167 = vunpack.c.l.b16 %v772
    %v1168 = vunpack.c.h.b16 %v772
    %v1169 = vunpack.c.l.b16 %v773
    %v1170 = vunpack.c.h.b16 %v773
    %v1171 = vunpack.c.l.b16 %v774
    %v1172 = vunpack.c.h.b16 %v774
    %v1173 = vunpack.c.l.b16 %v775
    %v1174 = vunpack.c.h.b16 %v775
    %v1175 = vunpack.c.l.b16 %v776
    %v1176 = vunpack.c.h.b16 %v776
    %v1177 = vunpack.c.l.b16 %v777
    %v1178 = vunpack.c.h.b16 %v777
    %v1179 = vunpack.c.l.b16 %v778
    %v1180 = vunpack.c.h.b16 %v778
    %v1181 = vunpack.c.l.b16 %v779
    %v1182 = vunpack.c.h.b16 %v779
    %v1183 = vunpack.c.l.b16 %v780
    %v1184 = vunpack.c.h.b16 %v780
    %v1185 = vunpack.c.l.b16 %v781
    %v1186 = vunpack.c.h.b16 %v781
    %v1187 = vunpack.c.l.b16 %v782
    %v1188 = vunpack.c.h.b16 %v782
    %v1189 = vunpack.c.l.b16 %v783
    %v1190 = vunpack.c.h.b16 %v783
    %v1191 = vunpack.c.l.b16 %v784
    %v1192 = vunpack.c.h.b16 %v784
    %v1193 = vunpack.c.l.b16 %v785
    %v1194 = vunpack.c.h.b16 %v785
    %v1195 = vunpack.c.l.b16 %v786
    %v1196 = vunpack.c.h.b16 %v786
    %v1197 = vunpack.c.l.b16 %v787
    %v1198 = vunpack.c.h.b16 %v787
    %v1199 = vunpack.c.l.b16 %v788
    %v1200 = vunpack.c.h.b16 %v788
    %v1201 = vunpack.c.l.b16 %v789
    %v1202 = vunpack.c.h.b16 %v789
    %v1203 = vunpack.c.l.b16 %v790
    %v1204 = vunpack.c.h.b16 %v790
    %v1205 = vunpack.c.l.b16 %v791
    %v1206 = vunpack.c.h.b16 %v791
    %v1207 = vunpack.c.l.b16 %v792
    %v1208 = vunpack.c.h.b16 %v792
    %v1209 = vunpack.c.l.b16 %v793
    %v1210 = vunpack.c.h.b16 %v793
    %v1211 = vunpack.c.l.b16 %v794
    %v1212 = vunpack.c.h.b16 %v794
    %v1213 = vunpack.c.l.b16 %v795
    %v1214 = vunpack.c.h.b16 %v795
    %v1215 = vunpack.c.l.b16 %v796
    %v1216 = vunpack.c.h.b16 %v796
    %v1217 = vpack.c.b16 %v1093, %v1089
    %v1218 = vpack.c.b16 %v1094, %v1090
    %v1219 = vpack.c.b16 %v1095, %v1091
    %v1220 = vpack.c.b16 %v1096, %v1092
    %v1221 = vpack.c.b16 %v1101, %v1097
    %v1222 = vpack.c.b16 %v1102, %v1098
    %v1223 = vpack.c.b16 %v1103, %v1099
    %v1224 = vpack.c.b16 %v1104, %v1100
    %v1225 = vpack.c.b16 %v1109, %v1105
    %v1226 = vpack.c.b16 %v1110, %v1106
    %v1227 = vpack.c.b16 %v1111, %v1107
    %v1228 = vpack.c.b16 %v1112, %v1108
    %v1229 = vpack.c.b16 %v1117, %v1113
    %v1230 = vpack.c.b16 %v1118, %v1114
    %v1231 = vpack.c.b16 %v1119, %v1115
    %v1232 = vpack.c.b16 %v1120, %v1116
    %v1233 = vpack.c.b16 %v1125, %v1121
    %v1234 = vpack.c.b16 %v1126, %v1122
    %v1235 = vpack.c.b16 %v1127, %v1123
    %v1236 = vpack.c.b16 %v1128, %v1124
    %v1237 = vpack.c.b16 %v1133, %v1129
    %v1238 = vpack.c.b16 %v1134, %v1130
    %v1239 = vpack.c.b16 %v1135, %v1131
    %v1240 = vpack.c.b16 %v1136, %v1132
    %v1241 = vpack.c.b16 %v1141, %v1137
    %v1242 = vpack.c.b16 %v1142, %v1138
    %v1243 = vpack.c.b16 %v1143, %v1139
    %v1244 = vpack.c.b16 %v1144, %v1140
    %v1245 = vpack.c.b16 %v1149, %v1145
    %v1246 = vpack.c.b16 %v1150, %v1146
    %v1247 = vpack.c.b16 %v1151, %v1147
    %v1248 = vpack.c.b16 %v1152, %v1148
    %v1249 = vpack.c.b16 %v1157, %v1153
    %v1250 = vpack.c.b16 %v1158, %v1154
    %v1251 = vpack.c.b16 %v1159, %v1155
    %v1252 = vpack.c.b16 %v1160, %v1156
    %v1253 = vpack.c.b16 %v1165, %v1161
    %v1254 = vpack.c.b16 %v1166, %v1162
    %v1255 = vpack.c.b16 %v1167, %v1163
    %v1256 = vpack.c.b16 %v1168, %v1164
    %v1257 = vpack.c.b16 %v1173, %v1169
    %v1258 = vpack.c.b16 %v1174, %v1170
    %v1259 = vpack.c.b16 %v1175, %v1171
    %v1260 = vpack.c.b16 %v1176, %v1172
    %v1261 = vpack.c.b16 %v1181, %v1177
    %v1262 = vpack.c.b16 %v1182, %v1178
    %v1263 = vpack.c.b16 %v1183, %v1179
    %v1264 = vpack.c.b16 %v1184, %v1180
    %v1265 = vpack.c.b16 %v1189, %v1185
    %v1266 = vpack.c.b16 %v1190, %v1186
    %v1267 = vpack.c.b16 %v1191, %v1187
    %v1268 = vpack.c.b16 %v1192, %v1188
    %v1269 = vpack.c.b16 %v1197, %v1193
    %v1270 = vpack.c.b16 %v1198, %v1194
    %v1271 = vpack.c.b16 %v1199, %v1195
    %v1272 = vpack.c.b16 %v1200, %v1196
    %v1273 = vpack.c.b16 %v1205, %v1201
    %v1274 = vpack.c.b16 %v1206, %v1202
    %v1275 = vpack.c.b16 %v1207, %v1203
    %v1276 = vpack.c.b16 %v1208, %v1204
    %v1277 = vpack.c.b16 %v1213, %v1209
    %v1278 = vpack.c.b16 %v1214, %v1210
    %v1279 = vpack.c.b16 %v1215, %v1211
    %v1280 = vpack.c.b16 %v1216, %v1212
    %1345 = vmatpush.bf16.msra.mxu0 %v1245
    %1346 = vmatpush.bf16.msra.mxu0 %v1241
    %1347 = vmatpush.bf16.msra.mxu0 %v1237
    %1348 = vmatpush.bf16.msra.mxu0 %v1233
    %1349 = vmatpush.bf16.msra.mxu0 %v1229
    %1350 = vmatpush.bf16.msra.mxu0 %v1225
    %1351 = vmatpush.bf16.msra.mxu0 %v1221
    %1352 = vmatpush.bf16.msra.mxu0 %v1217
    %1353 = vmatmul.bf16.gmra.mxu0 %v1023
    %v1354 = vpop.f32.mrf.mxu0
    %v1355 = vadd.f32 0.0, %v1354
    %v1356 = vpop.f32.mrf.mxu0
    %1357 = vdwg.mxu0
    %1358 = vmatpush.bf16.msra.mxu0 %v1277
    %1359 = vmatpush.bf16.msra.mxu0 %v1273
    %1360 = vmatpush.bf16.msra.mxu0 %v1269
    %1361 = vmatpush.bf16.msra.mxu0 %v1265
    %1362 = vmatpush.bf16.msra.mxu0 %v1261
    %1363 = vmatpush.bf16.msra.mxu0 %v1257
    %1364 = vmatpush.bf16.msra.mxu0 %v1253
    %1365 = vmatpush.bf16.msra.mxu0 %v1249
    %1366 = vmatmul.bf16.gmra.mxu0 %v1024
    %v1367 = vpop.f32.mrf.mxu0
    %v1368 = vadd.f32 %v1355, %v1367
    %v1369 = vpop.f32.mrf.mxu0
    %1370 = vdwg.mxu0
    %1371 = vmatpush.bf16.msra.mxu0 %v1246
    %1372 = vmatpush.bf16.msra.mxu0 %v1242
    %1373 = vmatpush.bf16.msra.mxu0 %v1238
    %1374 = vmatpush.bf16.msra.mxu0 %v1234
    %1375 = vmatpush.bf16.msra.mxu0 %v1230
    %1376 = vmatpush.bf16.msra.mxu0 %v1226
    %1377 = vmatpush.bf16.msra.mxu0 %v1222
    %1378 = vmatpush.bf16.msra.mxu0 %v1218
    %1379 = vmatmul.bf16.gmra.mxu0 %v1023
    %v1380 = vpop.f32.mrf.mxu0
    %v1381 = vadd.f32 0.0, %v1380
    %v1382 = vpop.f32.mrf.mxu0
    %1383 = vdwg.mxu0
    %1384 = vmatpush.bf16.msra.mxu0 %v1278
    %1385 = vmatpush.bf16.msra.mxu0 %v1274
    %1386 = vmatpush.bf16.msra.mxu0 %v1270
    %1387 = vmatpush.bf16.msra.mxu0 %v1266
    %1388 = vmatpush.bf16.msra.mxu0 %v1262
    %1389 = vmatpush.bf16.msra.mxu0 %v1258
    %1390 = vmatpush.bf16.msra.mxu0 %v1254
    %1391 = vmatpush.bf16.msra.mxu0 %v1250
    %1392 = vmatmul.bf16.gmra.mxu0 %v1024
    %v1393 = vpop.f32.mrf.mxu0
    %v1394 = vadd.f32 %v1381, %v1393
    %v1395 = vpop.f32.mrf.mxu0
    %1396 = vdwg.mxu0
    %1397 = vmatpush.bf16.msra.mxu0 %v1247
    %1398 = vmatpush.bf16.msra.mxu0 %v1243
    %1399 = vmatpush.bf16.msra.mxu0 %v1239
    %1400 = vmatpush.bf16.msra.mxu0 %v1235
    %1401 = vmatpush.bf16.msra.mxu0 %v1231
    %1402 = vmatpush.bf16.msra.mxu0 %v1227
    %1403 = vmatpush.bf16.msra.mxu0 %v1223
    %1404 = vmatpush.bf16.msra.mxu0 %v1219
    %1405 = vmatmul.bf16.gmra.mxu0 %v1023
    %v1406 = vpop.f32.mrf.mxu0
    %v1407 = vadd.f32 0.0, %v1406
    %v1408 = vpop.f32.mrf.mxu0
    %1409 = vdwg.mxu0
    %1410 = vmatpush.bf16.msra.mxu0 %v1279
    %1411 = vmatpush.bf16.msra.mxu0 %v1275
    %1412 = vmatpush.bf16.msra.mxu0 %v1271
    %1413 = vmatpush.bf16.msra.mxu0 %v1267
    %1414 = vmatpush.bf16.msra.mxu0 %v1263
    %1415 = vmatpush.bf16.msra.mxu0 %v1259
    %1416 = vmatpush.bf16.msra.mxu0 %v1255
    %1417 = vmatpush.bf16.msra.mxu0 %v1251
    %1418 = vmatmul.bf16.gmra.mxu0 %v1024
    %v1419 = vpop.f32.mrf.mxu0
    %v1420 = vadd.f32 %v1407, %v1419
    %v1421 = vpop.f32.mrf.mxu0
    %1422 = vdwg.mxu0
    %1423 = vmatpush.bf16.msra.mxu0 %v1248
    %1424 = vmatpush.bf16.msra.mxu0 %v1244
    %1425 = vmatpush.bf16.msra.mxu0 %v1240
    %1426 = vmatpush.bf16.msra.mxu0 %v1236
    %1427 = vmatpush.bf16.msra.mxu0 %v1232
    %1428 = vmatpush.bf16.msra.mxu0 %v1228
    %1429 = vmatpush.bf16.msra.mxu0 %v1224
    %1430 = vmatpush.bf16.msra.mxu0 %v1220
    %1431 = vmatmul.bf16.gmra.mxu0 %v1023
    %v1432 = vpop.f32.mrf.mxu0
    %v1433 = vadd.f32 0.0, %v1432
    %v1434 = vpop.f32.mrf.mxu0
    %1435 = vdwg.mxu0
    %1436 = vmatpush.bf16.msra.mxu0 %v1280
    %1437 = vmatpush.bf16.msra.mxu0 %v1276
    %1438 = vmatpush.bf16.msra.mxu0 %v1272
    %1439 = vmatpush.bf16.msra.mxu0 %v1268
    %1440 = vmatpush.bf16.msra.mxu0 %v1264
    %1441 = vmatpush.bf16.msra.mxu0 %v1260
    %1442 = vmatpush.bf16.msra.mxu0 %v1256
    %1443 = vmatpush.bf16.msra.mxu0 %v1252
    %1444 = vmatmul.bf16.gmra.mxu0 %v1024
    %v1445 = vpop.f32.mrf.mxu0
    %v1446 = vadd.f32 %v1433, %v1445
    %v1447 = vpop.f32.mrf.mxu0
    %1448 = vdwg.mxu0
    %v1450 = vperm.slane %v798, 0
    %v1451 = vperm.slane %v798, 1
    %v1454 = vadd.f32 %v1368, %v1450
    %v1455 = vadd.f32 %v1394, %v1451
    %v1456 = vsub.f32 0.0, %v1454
    %v1457 = vsub.f32 0.0, %v1455
    %v1458 = vmul.f32 %v1456, 1.442695
    %v1459 = vpow.pop %v1458
    %v1460 = vmul.f32 %v1457, 1.442695
    %v1461 = vpow.pop %v1460
    %v1462 = vadd.f32 %v1459, 1.0
    %v1463 = vadd.f32 %v1461, 1.0
    %v1464 = vrcp.pop %v1462
    %v1465 = vmul.f32 %v1462, %v1464
    %v1466 = vsub.f32 1.0, %v1465
    %v1467 = vmul.f32 %v1464, %v1466
    %v1468 = vadd.f32 %v1464, %v1467
    %vm1469 = vweird.f32 %v1462
    %vm1470 = vweird.f32 %v1464
    %vm1471 = vmor %vm1469, %vm1470
    %v1472 = vsel %vm1471, %v1464, %v1468
    %v1473 = vand.u32 2147483647, %v1462
    %vm1474 = vcmp.eq.f32.partialorder %v1473, 8.507059e+37
    %v1475 = vand.u32 %v1462, 2147483648
    %v1476 = vor.u32 1.1754944e-38, %v1475
    %v1477 = vsel %vm1474, %v1476, %v1472
    %v1478 = vmul.f32 1.0, %v1477
    %v1479 = vrcp.pop %v1463
    %v1480 = vmul.f32 %v1463, %v1479
    %v1481 = vsub.f32 1.0, %v1480
    %v1482 = vmul.f32 %v1479, %v1481
    %v1483 = vadd.f32 %v1479, %v1482
    %vm1484 = vweird.f32 %v1463
    %vm1485 = vweird.f32 %v1479
    %vm1486 = vmor %vm1484, %vm1485
    %v1487 = vsel %vm1486, %v1479, %v1483
    %v1488 = vand.u32 2147483647, %v1463
    %vm1489 = vcmp.eq.f32.partialorder %v1488, 8.507059e+37
    %v1490 = vand.u32 %v1463, 2147483648
    %v1491 = vor.u32 1.1754944e-38, %v1490
    %v1492 = vsel %vm1489, %v1491, %v1487
    %v1493 = vmul.f32 1.0, %v1492
    %v1495 = vperm.slane %v799, 0
    %v1497 = vadd.f32 %v1420, %v1495
    %v1499 = vperm.slane %v800, 0
    %v1501 = vadd.f32 %v1446, %v1499
    %v1502 = vmul.f32 %v1478, %v1501
    %v1503 = vadd.f32 %v1497, %v1502
    %v1504 = vtanh.pop %v1503
    %v1505 = vsub.f32 1.0, %v1493
    %v1506 = vmul.f32 %v1505, %v1504
    %v1507 = vmul.f32 %v1493, %v803
    %v1508 = vadd.f32 %v1506, %v1507
    %1509 = vmatpush.bf16.msra.mxu0 %v906
    %1510 = vmatpush.bf16.msra.mxu0 %v903
    %1511 = vmatpush.bf16.msra.mxu0 %v900
    %1512 = vmatpush.bf16.msra.mxu0 %v897
    %1513 = vmatpush.bf16.msra.mxu0 %v894
    %1514 = vmatpush.bf16.msra.mxu0 %v891
    %1515 = vmatpush.bf16.msra.mxu0 %v888
    %1516 = vmatpush.bf16.msra.mxu0 %v885
    %1517 = vmatmul.bf16.gmra.mxu0 %v1023
    %v1518 = vpop.f32.mrf.mxu0
    %v1519 = vadd.f32 0.0, %v1518
    %v1520 = vpop.f32.mrf.mxu0
    %1521 = vdwg.mxu0
    %1522 = vmatpush.bf16.msra.mxu0 %v907
    %1523 = vmatpush.bf16.msra.mxu0 %v904
    %1524 = vmatpush.bf16.msra.mxu0 %v901
    %1525 = vmatpush.bf16.msra.mxu0 %v898
    %1526 = vmatpush.bf16.msra.mxu0 %v895
    %1527 = vmatpush.bf16.msra.mxu0 %v892
    %1528 = vmatpush.bf16.msra.mxu0 %v889
    %1529 = vmatpush.bf16.msra.mxu0 %v886
    %1530 = vmatmul.bf16.gmra.mxu0 %v1023
    %v1531 = vpop.f32.mrf.mxu0
    %v1532 = vadd.f32 0.0, %v1531
    %v1533 = vpop.f32.mrf.mxu0
    %1534 = vdwg.mxu0
    %1535 = vmatpush.bf16.msra.mxu0 %v908
    %1536 = vmatpush.bf16.msra.mxu0 %v905
    %1537 = vmatpush.bf16.msra.mxu0 %v902
    %1538 = vmatpush.bf16.msra.mxu0 %v899
    %1539 = vmatpush.bf16.msra.mxu0 %v896
    %1540 = vmatpush.bf16.msra.mxu0 %v893
    %1541 = vmatpush.bf16.msra.mxu0 %v890
    %1542 = vmatpush.bf16.msra.mxu0 %v887
    %1543 = vmatmul.bf16.gmra.mxu0 %v1023
    %v1544 = vpop.f32.mrf.mxu0
    %v1545 = vadd.f32 0.0, %v1544
    %v1546 = vpop.f32.mrf.mxu0
    %1547 = vdwg.mxu0
    %v1548 = vadd.f32 %v568, %v1519
    %v1549 = vadd.f32 %v626, %v1532
    %v1550 = vsub.f32 0.0, %v1548
    %v1551 = vsub.f32 0.0, %v1549
    %v1552 = vmul.f32 %v1550, 1.442695
    %v1553 = vpow.pop %v1552
    %v1554 = vmul.f32 %v1551, 1.442695
    %v1555 = vpow.pop %v1554
    %v1556 = vadd.f32 %v1553, 1.0
    %v1557 = vadd.f32 %v1555, 1.0
    %v1558 = vrcp.pop %v1556
    %v1559 = vmul.f32 %v1556, %v1558
    %v1560 = vsub.f32 1.0, %v1559
    %v1561 = vmul.f32 %v1558, %v1560
    %v1562 = vadd.f32 %v1558, %v1561
    %vm1563 = vweird.f32 %v1556
    %vm1564 = vweird.f32 %v1558
    %vm1565 = vmor %vm1563, %vm1564
    %v1566 = vsel %vm1565, %v1558, %v1562
    %v1567 = vand.u32 2147483647, %v1556
    %vm1568 = vcmp.eq.f32.partialorder %v1567, 8.507059e+37
    %v1569 = vand.u32 %v1556, 2147483648
    %v1570 = vor.u32 1.1754944e-38, %v1569
    %v1571 = vsel %vm1568, %v1570, %v1566
    %v1572 = vmul.f32 1.0, %v1571
    %v1573 = vrcp.pop %v1557
    %v1574 = vmul.f32 %v1557, %v1573
    %v1575 = vsub.f32 1.0, %v1574
    %v1576 = vmul.f32 %v1573, %v1575
    %v1577 = vadd.f32 %v1573, %v1576
    %vm1578 = vweird.f32 %v1557
    %vm1579 = vweird.f32 %v1573
    %vm1580 = vmor %vm1578, %vm1579
    %v1581 = vsel %vm1580, %v1573, %v1577
    %v1582 = vand.u32 2147483647, %v1557
    %vm1583 = vcmp.eq.f32.partialorder %v1582, 8.507059e+37
    %v1584 = vand.u32 %v1557, 2147483648
    %v1585 = vor.u32 1.1754944e-38, %v1584
    %v1586 = vsel %vm1583, %v1585, %v1581
    %v1587 = vmul.f32 1.0, %v1586
    %v1588 = vadd.f32 %v1545, %v1013
    %v1589 = vmul.f32 %v1572, %v1588
    %v1590 = vadd.f32 %v684, %v1589
    %v1591 = vtanh.pop %v1590
    %v1592 = vsub.f32 1.0, %v1587
    %v1593 = vmul.f32 %v1592, %v1591
    %v1594 = vmul.f32 %v1587, %v1022
    %v1595 = vadd.f32 %v1593, %v1594
    %v1596 = vpack.c.bf16 %v1595, %v1595
    %v1597 = vpack.c.bf16 %v1508, %v1508
    %1598 = vmatpush.bf16.msra.mxu0 %v1245
    %1599 = vmatpush.bf16.msra.mxu0 %v1241
    %1600 = vmatpush.bf16.msra.mxu0 %v1237
    %1601 = vmatpush.bf16.msra.mxu0 %v1233
    %1602 = vmatpush.bf16.msra.mxu0 %v1229
    %1603 = vmatpush.bf16.msra.mxu0 %v1225
    %1604 = vmatpush.bf16.msra.mxu0 %v1221
    %1605 = vmatpush.bf16.msra.mxu0 %v1217
    %1606 = vmatmul.bf16.gmra.mxu0 %v1596
    %v1607 = vpop.f32.mrf.mxu0
    %v1608 = vadd.f32 0.0, %v1607
    %v1609 = vpop.f32.mrf.mxu0
    %1610 = vdwg.mxu0
    %1611 = vmatpush.bf16.msra.mxu0 %v1277
    %1612 = vmatpush.bf16.msra.mxu0 %v1273
    %1613 = vmatpush.bf16.msra.mxu0 %v1269
    %1614 = vmatpush.bf16.msra.mxu0 %v1265
    %1615 = vmatpush.bf16.msra.mxu0 %v1261
    %1616 = vmatpush.bf16.msra.mxu0 %v1257
    %1617 = vmatpush.bf16.msra.mxu0 %v1253
    %1618 = vmatpush.bf16.msra.mxu0 %v1249
    %1619 = vmatmul.bf16.gmra.mxu0 %v1597
    %v1620 = vpop.f32.mrf.mxu0
    %v1621 = vadd.f32 %v1608, %v1620
    %v1622 = vpop.f32.mrf.mxu0
    %1623 = vdwg.mxu0
    %1624 = vmatpush.bf16.msra.mxu0 %v1246
    %1625 = vmatpush.bf16.msra.mxu0 %v1242
    %1626 = vmatpush.bf16.msra.mxu0 %v1238
    %1627 = vmatpush.bf16.msra.mxu0 %v1234
    %1628 = vmatpush.bf16.msra.mxu0 %v1230
    %1629 = vmatpush.bf16.msra.mxu0 %v1226
    %1630 = vmatpush.bf16.msra.mxu0 %v1222
    %1631 = vmatpush.bf16.msra.mxu0 %v1218
    %1632 = vmatmul.bf16.gmra.mxu0 %v1596
    %v1633 = vpop.f32.mrf.mxu0
    %v1634 = vadd.f32 0.0, %v1633
    %v1635 = vpop.f32.mrf.mxu0
    %1636 = vdwg.mxu0
    %1637 = vmatpush.bf16.msra.mxu0 %v1278
    %1638 = vmatpush.bf16.msra.mxu0 %v1274
    %1639 = vmatpush.bf16.msra.mxu0 %v1270
    %1640 = vmatpush.bf16.msra.mxu0 %v1266
    %1641 = vmatpush.bf16.msra.mxu0 %v1262
    %1642 = vmatpush.bf16.msra.mxu0 %v1258
    %1643 = vmatpush.bf16.msra.mxu0 %v1254
    %1644 = vmatpush.bf16.msra.mxu0 %v1250
    %1645 = vmatmul.bf16.gmra.mxu0 %v1597
    %v1646 = vpop.f32.mrf.mxu0
    %v1647 = vadd.f32 %v1634, %v1646
    %v1648 = vpop.f32.mrf.mxu0
    %1649 = vdwg.mxu0
    %1650 = vmatpush.bf16.msra.mxu0 %v1247
    %1651 = vmatpush.bf16.msra.mxu0 %v1243
    %1652 = vmatpush.bf16.msra.mxu0 %v1239
    %1653 = vmatpush.bf16.msra.mxu0 %v1235
    %1654 = vmatpush.bf16.msra.mxu0 %v1231
    %1655 = vmatpush.bf16.msra.mxu0 %v1227
    %1656 = vmatpush.bf16.msra.mxu0 %v1223
    %1657 = vmatpush.bf16.msra.mxu0 %v1219
    %1658 = vmatmul.bf16.gmra.mxu0 %v1596
    %v1659 = vpop.f32.mrf.mxu0
    %v1660 = vadd.f32 0.0, %v1659
    %v1661 = vpop.f32.mrf.mxu0
    %1662 = vdwg.mxu0
    %1663 = vmatpush.bf16.msra.mxu0 %v1279
    %1664 = vmatpush.bf16.msra.mxu0 %v1275
    %1665 = vmatpush.bf16.msra.mxu0 %v1271
    %1666 = vmatpush.bf16.msra.mxu0 %v1267
    %1667 = vmatpush.bf16.msra.mxu0 %v1263
    %1668 = vmatpush.bf16.msra.mxu0 %v1259
    %1669 = vmatpush.bf16.msra.mxu0 %v1255
    %1670 = vmatpush.bf16.msra.mxu0 %v1251
    %1671 = vmatmul.bf16.gmra.mxu0 %v1597
    %v1672 = vpop.f32.mrf.mxu0
    %v1673 = vadd.f32 %v1660, %v1672
    %v1674 = vpop.f32.mrf.mxu0
    %1675 = vdwg.mxu0
    %1676 = vmatpush.bf16.msra.mxu0 %v1248
    %1677 = vmatpush.bf16.msra.mxu0 %v1244
    %1678 = vmatpush.bf16.msra.mxu0 %v1240
    %1679 = vmatpush.bf16.msra.mxu0 %v1236
    %1680 = vmatpush.bf16.msra.mxu0 %v1232
    %1681 = vmatpush.bf16.msra.mxu0 %v1228
    %1682 = vmatpush.bf16.msra.mxu0 %v1224
    %1683 = vmatpush.bf16.msra.mxu0 %v1220
    %1684 = vmatmul.bf16.gmra.mxu0 %v1596
    %v1685 = vpop.f32.mrf.mxu0
    %v1686 = vadd.f32 0.0, %v1685
    %v1687 = vpop.f32.mrf.mxu0
    %1688 = vdwg.mxu0
    %1689 = vmatpush.bf16.msra.mxu0 %v1280
    %1690 = vmatpush.bf16.msra.mxu0 %v1276
    %1691 = vmatpush.bf16.msra.mxu0 %v1272
    %1692 = vmatpush.bf16.msra.mxu0 %v1268
    %1693 = vmatpush.bf16.msra.mxu0 %v1264
    %1694 = vmatpush.bf16.msra.mxu0 %v1260
    %1695 = vmatpush.bf16.msra.mxu0 %v1256
    %1696 = vmatpush.bf16.msra.mxu0 %v1252
    %1697 = vmatmul.bf16.gmra.mxu0 %v1597
    %v1698 = vpop.f32.mrf.mxu0
    %v1699 = vadd.f32 %v1686, %v1698
    %v1700 = vpop.f32.mrf.mxu0
    %1701 = vdwg.mxu0
    %v1702 = vadd.f32 %v1621, %v1450
    %v1703 = vadd.f32 %v1647, %v1451
    %v1704 = vsub.f32 0.0, %v1702
    %v1705 = vsub.f32 0.0, %v1703
    %v1706 = vmul.f32 %v1704, 1.442695
    %v1707 = vpow.pop %v1706
    %v1708 = vmul.f32 %v1705, 1.442695
    %v1709 = vpow.pop %v1708
    %v1710 = vadd.f32 %v1707, 1.0
    %v1711 = vadd.f32 %v1709, 1.0
    %v1712 = vrcp.pop %v1710
    %v1713 = vmul.f32 %v1710, %v1712
    %v1714 = vsub.f32 1.0, %v1713
    %v1715 = vmul.f32 %v1712, %v1714
    %v1716 = vadd.f32 %v1712, %v1715
    %vm1717 = vweird.f32 %v1710
    %vm1718 = vweird.f32 %v1712
    %vm1719 = vmor %vm1717, %vm1718
    %v1720 = vsel %vm1719, %v1712, %v1716
    %v1721 = vand.u32 2147483647, %v1710
    %vm1722 = vcmp.eq.f32.partialorder %v1721, 8.507059e+37
    %v1723 = vand.u32 %v1710, 2147483648
    %v1724 = vor.u32 1.1754944e-38, %v1723
    %v1725 = vsel %vm1722, %v1724, %v1720
    %v1726 = vmul.f32 1.0, %v1725
    %v1727 = vrcp.pop %v1711
    %v1728 = vmul.f32 %v1711, %v1727
    %v1729 = vsub.f32 1.0, %v1728
    %v1730 = vmul.f32 %v1727, %v1729
    %v1731 = vadd.f32 %v1727, %v1730
    %vm1732 = vweird.f32 %v1711
    %vm1733 = vweird.f32 %v1727
    %vm1734 = vmor %vm1732, %vm1733
    %v1735 = vsel %vm1734, %v1727, %v1731
    %v1736 = vand.u32 2147483647, %v1711
    %vm1737 = vcmp.eq.f32.partialorder %v1736, 8.507059e+37
    %v1738 = vand.u32 %v1711, 2147483648
    %v1739 = vor.u32 1.1754944e-38, %v1738
    %v1740 = vsel %vm1737, %v1739, %v1735
    %v1741 = vmul.f32 1.0, %v1740
    %v1742 = vadd.f32 %v1673, %v1495
    %v1743 = vadd.f32 %v1699, %v1499
    %v1744 = vmul.f32 %v1726, %v1743
    %v1745 = vadd.f32 %v1742, %v1744
    %v1746 = vtanh.pop %v1745
    %v1747 = vsub.f32 1.0, %v1741
    %v1748 = vmul.f32 %v1747, %v1746
    %v1749 = vmul.f32 %v1741, %v1508
    %v1750 = vadd.f32 %v1748, %v1749
    %1751 = vmatpush.bf16.msra.mxu0 %v906
    %1752 = vmatpush.bf16.msra.mxu0 %v903
    %1753 = vmatpush.bf16.msra.mxu0 %v900
    %1754 = vmatpush.bf16.msra.mxu0 %v897
    %1755 = vmatpush.bf16.msra.mxu0 %v894
    %1756 = vmatpush.bf16.msra.mxu0 %v891
    %1757 = vmatpush.bf16.msra.mxu0 %v888
    %1758 = vmatpush.bf16.msra.mxu0 %v885
    %1759 = vmatmul.bf16.gmra.mxu0 %v1596
    %v1760 = vpop.f32.mrf.mxu0
    %v1761 = vadd.f32 0.0, %v1760
    %v1762 = vpop.f32.mrf.mxu0
    %1763 = vdwg.mxu0
    %1764 = vmatpush.bf16.msra.mxu0 %v907
    %1765 = vmatpush.bf16.msra.mxu0 %v904
    %1766 = vmatpush.bf16.msra.mxu0 %v901
    %1767 = vmatpush.bf16.msra.mxu0 %v898
    %1768 = vmatpush.bf16.msra.mxu0 %v895
    %1769 = vmatpush.bf16.msra.mxu0 %v892
    %1770 = vmatpush.bf16.msra.mxu0 %v889
    %1771 = vmatpush.bf16.msra.mxu0 %v886
    %1772 = vmatmul.bf16.gmra.mxu0 %v1596
    %v1773 = vpop.f32.mrf.mxu0
    %v1774 = vadd.f32 0.0, %v1773
    %v1775 = vpop.f32.mrf.mxu0
    %1776 = vdwg.mxu0
    %1777 = vmatpush.bf16.msra.mxu0 %v908
    %1778 = vmatpush.bf16.msra.mxu0 %v905
    %1779 = vmatpush.bf16.msra.mxu0 %v902
    %1780 = vmatpush.bf16.msra.mxu0 %v899
    %1781 = vmatpush.bf16.msra.mxu0 %v896
    %1782 = vmatpush.bf16.msra.mxu0 %v893
    %1783 = vmatpush.bf16.msra.mxu0 %v890
    %1784 = vmatpush.bf16.msra.mxu0 %v887
    %1785 = vmatmul.bf16.gmra.mxu0 %v1596
    %v1786 = vpop.f32.mrf.mxu0
    %v1787 = vadd.f32 0.0, %v1786
    %v1788 = vpop.f32.mrf.mxu0
    %1789 = vdwg.mxu0
    %v1790 = vadd.f32 %v571, %v1761
    %v1791 = vadd.f32 %v629, %v1774
    %v1792 = vsub.f32 0.0, %v1790
    %v1793 = vsub.f32 0.0, %v1791
    %v1794 = vmul.f32 %v1792, 1.442695
    %v1795 = vpow.pop %v1794
    %v1796 = vmul.f32 %v1793, 1.442695
    %v1797 = vpow.pop %v1796
    %v1798 = vadd.f32 %v1795, 1.0
    %v1799 = vadd.f32 %v1797, 1.0
    %v1800 = vrcp.pop %v1798
    %v1801 = vmul.f32 %v1798, %v1800
    %v1802 = vsub.f32 1.0, %v1801
    %v1803 = vmul.f32 %v1800, %v1802
    %v1804 = vadd.f32 %v1800, %v1803
    %vm1805 = vweird.f32 %v1798
    %vm1806 = vweird.f32 %v1800
    %vm1807 = vmor %vm1805, %vm1806
    %v1808 = vsel %vm1807, %v1800, %v1804
    %v1809 = vand.u32 2147483647, %v1798
    %vm1810 = vcmp.eq.f32.partialorder %v1809, 8.507059e+37
    %v1811 = vand.u32 %v1798, 2147483648
    %v1812 = vor.u32 1.1754944e-38, %v1811
    %v1813 = vsel %vm1810, %v1812, %v1808
    %v1814 = vmul.f32 1.0, %v1813
    %v1815 = vrcp.pop %v1799
    %v1816 = vmul.f32 %v1799, %v1815
    %v1817 = vsub.f32 1.0, %v1816
    %v1818 = vmul.f32 %v1815, %v1817
    %v1819 = vadd.f32 %v1815, %v1818
    %vm1820 = vweird.f32 %v1799
    %vm1821 = vweird.f32 %v1815
    %vm1822 = vmor %vm1820, %vm1821
    %v1823 = vsel %vm1822, %v1815, %v1819
    %v1824 = vand.u32 2147483647, %v1799
    %vm1825 = vcmp.eq.f32.partialorder %v1824, 8.507059e+37
    %v1826 = vand.u32 %v1799, 2147483648
    %v1827 = vor.u32 1.1754944e-38, %v1826
    %v1828 = vsel %vm1825, %v1827, %v1823
    %v1829 = vmul.f32 1.0, %v1828
    %v1830 = vadd.f32 %v1787, %v1013
    %v1831 = vmul.f32 %v1814, %v1830
    %v1832 = vadd.f32 %v687, %v1831
    %v1833 = vtanh.pop %v1832
    %v1834 = vsub.f32 1.0, %v1829
    %v1835 = vmul.f32 %v1834, %v1833
    %v1836 = vmul.f32 %v1829, %v1595
    %v1837 = vadd.f32 %v1835, %v1836
    %v1838 = vpack.c.bf16 %v1837, %v1837
    %v1839 = vpack.c.bf16 %v1750, %v1750
    %1840 = vmatpush.bf16.msra.mxu0 %v1245
    %1841 = vmatpush.bf16.msra.mxu0 %v1241
    %1842 = vmatpush.bf16.msra.mxu0 %v1237
    %1843 = vmatpush.bf16.msra.mxu0 %v1233
    %1844 = vmatpush.bf16.msra.mxu0 %v1229
    %1845 = vmatpush.bf16.msra.mxu0 %v1225
    %1846 = vmatpush.bf16.msra.mxu0 %v1221
    %1847 = vmatpush.bf16.msra.mxu0 %v1217
    %1848 = vmatmul.bf16.gmra.mxu0 %v1838
    %v1849 = vpop.f32.mrf.mxu0
    %v1850 = vadd.f32 0.0, %v1849
    %v1851 = vpop.f32.mrf.mxu0
    %1852 = vdwg.mxu0
    %1853 = vmatpush.bf16.msra.mxu0 %v1277
    %1854 = vmatpush.bf16.msra.mxu0 %v1273
    %1855 = vmatpush.bf16.msra.mxu0 %v1269
    %1856 = vmatpush.bf16.msra.mxu0 %v1265
    %1857 = vmatpush.bf16.msra.mxu0 %v1261
    %1858 = vmatpush.bf16.msra.mxu0 %v1257
    %1859 = vmatpush.bf16.msra.mxu0 %v1253
    %1860 = vmatpush.bf16.msra.mxu0 %v1249
    %1861 = vmatmul.bf16.gmra.mxu0 %v1839
    %v1862 = vpop.f32.mrf.mxu0
    %v1863 = vadd.f32 %v1850, %v1862
    %v1864 = vpop.f32.mrf.mxu0
    %1865 = vdwg.mxu0
    %1866 = vmatpush.bf16.msra.mxu0 %v1246
    %1867 = vmatpush.bf16.msra.mxu0 %v1242
    %1868 = vmatpush.bf16.msra.mxu0 %v1238
    %1869 = vmatpush.bf16.msra.mxu0 %v1234
    %1870 = vmatpush.bf16.msra.mxu0 %v1230
    %1871 = vmatpush.bf16.msra.mxu0 %v1226
    %1872 = vmatpush.bf16.msra.mxu0 %v1222
    %1873 = vmatpush.bf16.msra.mxu0 %v1218
    %1874 = vmatmul.bf16.gmra.mxu0 %v1838
    %v1875 = vpop.f32.mrf.mxu0
    %v1876 = vadd.f32 0.0, %v1875
    %v1877 = vpop.f32.mrf.mxu0
    %1878 = vdwg.mxu0
    %1879 = vmatpush.bf16.msra.mxu0 %v1278
    %1880 = vmatpush.bf16.msra.mxu0 %v1274
    %1881 = vmatpush.bf16.msra.mxu0 %v1270
    %1882 = vmatpush.bf16.msra.mxu0 %v1266
    %1883 = vmatpush.bf16.msra.mxu0 %v1262
    %1884 = vmatpush.bf16.msra.mxu0 %v1258
    %1885 = vmatpush.bf16.msra.mxu0 %v1254
    %1886 = vmatpush.bf16.msra.mxu0 %v1250
    %1887 = vmatmul.bf16.gmra.mxu0 %v1839
    %v1888 = vpop.f32.mrf.mxu0
    %v1889 = vadd.f32 %v1876, %v1888
    %v1890 = vpop.f32.mrf.mxu0
    %1891 = vdwg.mxu0
    %1892 = vmatpush.bf16.msra.mxu0 %v1247
    %1893 = vmatpush.bf16.msra.mxu0 %v1243
    %1894 = vmatpush.bf16.msra.mxu0 %v1239
    %1895 = vmatpush.bf16.msra.mxu0 %v1235
    %1896 = vmatpush.bf16.msra.mxu0 %v1231
    %1897 = vmatpush.bf16.msra.mxu0 %v1227
    %1898 = vmatpush.bf16.msra.mxu0 %v1223
    %1899 = vmatpush.bf16.msra.mxu0 %v1219
    %1900 = vmatmul.bf16.gmra.mxu0 %v1838
    %v1901 = vpop.f32.mrf.mxu0
    %v1902 = vadd.f32 0.0, %v1901
    %v1903 = vpop.f32.mrf.mxu0
    %1904 = vdwg.mxu0
    %1905 = vmatpush.bf16.msra.mxu0 %v1279
    %1906 = vmatpush.bf16.msra.mxu0 %v1275
    %1907 = vmatpush.bf16.msra.mxu0 %v1271
    %1908 = vmatpush.bf16.msra.mxu0 %v1267
    %1909 = vmatpush.bf16.msra.mxu0 %v1263
    %1910 = vmatpush.bf16.msra.mxu0 %v1259
    %1911 = vmatpush.bf16.msra.mxu0 %v1255
    %1912 = vmatpush.bf16.msra.mxu0 %v1251
    %1913 = vmatmul.bf16.gmra.mxu0 %v1839
    %v1914 = vpop.f32.mrf.mxu0
    %v1915 = vadd.f32 %v1902, %v1914
    %v1916 = vpop.f32.mrf.mxu0
    %1917 = vdwg.mxu0
    %1918 = vmatpush.bf16.msra.mxu0 %v1248
    %1919 = vmatpush.bf16.msra.mxu0 %v1244
    %1920 = vmatpush.bf16.msra.mxu0 %v1240
    %1921 = vmatpush.bf16.msra.mxu0 %v1236
    %1922 = vmatpush.bf16.msra.mxu0 %v1232
    %1923 = vmatpush.bf16.msra.mxu0 %v1228
    %1924 = vmatpush.bf16.msra.mxu0 %v1224
    %1925 = vmatpush.bf16.msra.mxu0 %v1220
    %1926 = vmatmul.bf16.gmra.mxu0 %v1838
    %v1927 = vpop.f32.mrf.mxu0
    %v1928 = vadd.f32 0.0, %v1927
    %v1929 = vpop.f32.mrf.mxu0
    %1930 = vdwg.mxu0
    %1931 = vmatpush.bf16.msra.mxu0 %v1280
    %1932 = vmatpush.bf16.msra.mxu0 %v1276
    %1933 = vmatpush.bf16.msra.mxu0 %v1272
    %1934 = vmatpush.bf16.msra.mxu0 %v1268
    %1935 = vmatpush.bf16.msra.mxu0 %v1264
    %1936 = vmatpush.bf16.msra.mxu0 %v1260
    %1937 = vmatpush.bf16.msra.mxu0 %v1256
    %1938 = vmatpush.bf16.msra.mxu0 %v1252
    %1939 = vmatmul.bf16.gmra.mxu0 %v1839
    %v1940 = vpop.f32.mrf.mxu0
    %v1941 = vadd.f32 %v1928, %v1940
    %v1942 = vpop.f32.mrf.mxu0
    %1943 = vdwg.mxu0
    %v1944 = vadd.f32 %v1863, %v1450
    %v1945 = vadd.f32 %v1889, %v1451
    %v1946 = vsub.f32 0.0, %v1944
    %v1947 = vsub.f32 0.0, %v1945
    %v1948 = vmul.f32 %v1946, 1.442695
    %v1949 = vpow.pop %v1948
    %v1950 = vmul.f32 %v1947, 1.442695
    %v1951 = vpow.pop %v1950
    %v1952 = vadd.f32 %v1949, 1.0
    %v1953 = vadd.f32 %v1951, 1.0
    %v1954 = vrcp.pop %v1952
    %v1955 = vmul.f32 %v1952, %v1954
    %v1956 = vsub.f32 1.0, %v1955
    %v1957 = vmul.f32 %v1954, %v1956
    %v1958 = vadd.f32 %v1954, %v1957
    %vm1959 = vweird.f32 %v1952
    %vm1960 = vweird.f32 %v1954
    %vm1961 = vmor %vm1959, %vm1960
    %v1962 = vsel %vm1961, %v1954, %v1958
    %v1963 = vand.u32 2147483647, %v1952
    %vm1964 = vcmp.eq.f32.partialorder %v1963, 8.507059e+37
    %v1965 = vand.u32 %v1952, 2147483648
    %v1966 = vor.u32 1.1754944e-38, %v1965
    %v1967 = vsel %vm1964, %v1966, %v1962
    %v1968 = vmul.f32 1.0, %v1967
    %v1969 = vrcp.pop %v1953
    %v1970 = vmul.f32 %v1953, %v1969
    %v1971 = vsub.f32 1.0, %v1970
    %v1972 = vmul.f32 %v1969, %v1971
    %v1973 = vadd.f32 %v1969, %v1972
    %vm1974 = vweird.f32 %v1953
    %vm1975 = vweird.f32 %v1969
    %vm1976 = vmor %vm1974, %vm1975
    %v1977 = vsel %vm1976, %v1969, %v1973
    %v1978 = vand.u32 2147483647, %v1953
    %vm1979 = vcmp.eq.f32.partialorder %v1978, 8.507059e+37
    %v1980 = vand.u32 %v1953, 2147483648
    %v1981 = vor.u32 1.1754944e-38, %v1980
    %v1982 = vsel %vm1979, %v1981, %v1977
    %v1983 = vmul.f32 1.0, %v1982
    %v1984 = vadd.f32 %v1915, %v1495
    %v1985 = vadd.f32 %v1941, %v1499
    %v1986 = vmul.f32 %v1968, %v1985
    %v1987 = vadd.f32 %v1984, %v1986
    %v1988 = vtanh.pop %v1987
    %v1989 = vsub.f32 1.0, %v1983
    %v1990 = vmul.f32 %v1989, %v1988
    %v1991 = vmul.f32 %v1983, %v1750
    %v1992 = vadd.f32 %v1990, %v1991
    %1993 = vmatpush.bf16.msra.mxu0 %v906
    %1994 = vmatpush.bf16.msra.mxu0 %v903
    %1995 = vmatpush.bf16.msra.mxu0 %v900
    %1996 = vmatpush.bf16.msra.mxu0 %v897
    %1997 = vmatpush.bf16.msra.mxu0 %v894
    %1998 = vmatpush.bf16.msra.mxu0 %v891
    %1999 = vmatpush.bf16.msra.mxu0 %v888
    %2000 = vmatpush.bf16.msra.mxu0 %v885
    %2001 = vmatmul.bf16.gmra.mxu0 %v1838
    %v2002 = vpop.f32.mrf.mxu0
    %v2003 = vadd.f32 0.0, %v2002
    %v2004 = vpop.f32.mrf.mxu0
    %2005 = vdwg.mxu0
    %2006 = vmatpush.bf16.msra.mxu0 %v907
    %2007 = vmatpush.bf16.msra.mxu0 %v904
    %2008 = vmatpush.bf16.msra.mxu0 %v901
    %2009 = vmatpush.bf16.msra.mxu0 %v898
    %2010 = vmatpush.bf16.msra.mxu0 %v895
    %2011 = vmatpush.bf16.msra.mxu0 %v892
    %2012 = vmatpush.bf16.msra.mxu0 %v889
    %2013 = vmatpush.bf16.msra.mxu0 %v886
    %2014 = vmatmul.bf16.gmra.mxu0 %v1838
    %v2015 = vpop.f32.mrf.mxu0
    %v2016 = vadd.f32 0.0, %v2015
    %v2017 = vpop.f32.mrf.mxu0
    %2018 = vdwg.mxu0
    %2019 = vmatpush.bf16.msra.mxu0 %v908
    %2020 = vmatpush.bf16.msra.mxu0 %v905
    %2021 = vmatpush.bf16.msra.mxu0 %v902
    %2022 = vmatpush.bf16.msra.mxu0 %v899
    %2023 = vmatpush.bf16.msra.mxu0 %v896
    %2024 = vmatpush.bf16.msra.mxu0 %v893
    %2025 = vmatpush.bf16.msra.mxu0 %v890
    %2026 = vmatpush.bf16.msra.mxu0 %v887
    %2027 = vmatmul.bf16.gmra.mxu0 %v1838
    %v2028 = vpop.f32.mrf.mxu0
    %v2029 = vadd.f32 0.0, %v2028
    %v2030 = vpop.f32.mrf.mxu0
    %2031 = vdwg.mxu0
    %v2032 = vadd.f32 %v573, %v2003
    %v2033 = vadd.f32 %v631, %v2016
    %v2034 = vsub.f32 0.0, %v2032
    %v2035 = vsub.f32 0.0, %v2033
    %v2036 = vmul.f32 %v2034, 1.442695
    %v2037 = vpow.pop %v2036
    %v2038 = vmul.f32 %v2035, 1.442695
    %v2039 = vpow.pop %v2038
    %v2040 = vadd.f32 %v2037, 1.0
    %v2041 = vadd.f32 %v2039, 1.0
    %v2042 = vrcp.pop %v2040
    %v2043 = vmul.f32 %v2040, %v2042
    %v2044 = vsub.f32 1.0, %v2043
    %v2045 = vmul.f32 %v2042, %v2044
    %v2046 = vadd.f32 %v2042, %v2045
    %vm2047 = vweird.f32 %v2040
    %vm2048 = vweird.f32 %v2042
    %vm2049 = vmor %vm2047, %vm2048
    %v2050 = vsel %vm2049, %v2042, %v2046
    %v2051 = vand.u32 2147483647, %v2040
    %vm2052 = vcmp.eq.f32.partialorder %v2051, 8.507059e+37
    %v2053 = vand.u32 %v2040, 2147483648
    %v2054 = vor.u32 1.1754944e-38, %v2053
    %v2055 = vsel %vm2052, %v2054, %v2050
    %v2056 = vmul.f32 1.0, %v2055
    %v2057 = vrcp.pop %v2041
    %v2058 = vmul.f32 %v2041, %v2057
    %v2059 = vsub.f32 1.0, %v2058
    %v2060 = vmul.f32 %v2057, %v2059
    %v2061 = vadd.f32 %v2057, %v2060
    %vm2062 = vweird.f32 %v2041
    %vm2063 = vweird.f32 %v2057
    %vm2064 = vmor %vm2062, %vm2063
    %v2065 = vsel %vm2064, %v2057, %v2061
    %v2066 = vand.u32 2147483647, %v2041
    %vm2067 = vcmp.eq.f32.partialorder %v2066, 8.507059e+37
    %v2068 = vand.u32 %v2041, 2147483648
    %v2069 = vor.u32 1.1754944e-38, %v2068
    %v2070 = vsel %vm2067, %v2069, %v2065
    %v2071 = vmul.f32 1.0, %v2070
    %v2072 = vadd.f32 %v2029, %v1013
    %v2073 = vmul.f32 %v2056, %v2072
    %v2074 = vadd.f32 %v689, %v2073
    %v2075 = vtanh.pop %v2074
    %v2076 = vsub.f32 1.0, %v2071
    %v2077 = vmul.f32 %v2076, %v2075
    %v2078 = vmul.f32 %v2071, %v1837
    %v2079 = vadd.f32 %v2077, %v2078
    %v2080 = vpack.c.bf16 %v2079, %v2079
    %v2081 = vpack.c.bf16 %v1992, %v1992
    %2082 = vmatpush.bf16.msra.mxu0 %v1245
    %2083 = vmatpush.bf16.msra.mxu0 %v1241
    %2084 = vmatpush.bf16.msra.mxu0 %v1237
    %2085 = vmatpush.bf16.msra.mxu0 %v1233
    %2086 = vmatpush.bf16.msra.mxu0 %v1229
    %2087 = vmatpush.bf16.msra.mxu0 %v1225
    %2088 = vmatpush.bf16.msra.mxu0 %v1221
    %2089 = vmatpush.bf16.msra.mxu0 %v1217
    %2090 = vmatmul.bf16.gmra.mxu0 %v2080
    %v2091 = vpop.f32.mrf.mxu0
    %v2092 = vadd.f32 0.0, %v2091
    %v2093 = vpop.f32.mrf.mxu0
    %2094 = vdwg.mxu0
    %2095 = vmatpush.bf16.msra.mxu0 %v1277
    %2096 = vmatpush.bf16.msra.mxu0 %v1273
    %2097 = vmatpush.bf16.msra.mxu0 %v1269
    %2098 = vmatpush.bf16.msra.mxu0 %v1265
    %2099 = vmatpush.bf16.msra.mxu0 %v1261
    %2100 = vmatpush.bf16.msra.mxu0 %v1257
    %2101 = vmatpush.bf16.msra.mxu0 %v1253
    %2102 = vmatpush.bf16.msra.mxu0 %v1249
    %2103 = vmatmul.bf16.gmra.mxu0 %v2081
    %v2104 = vpop.f32.mrf.mxu0
    %v2105 = vadd.f32 %v2092, %v2104
    %v2106 = vpop.f32.mrf.mxu0
    %2107 = vdwg.mxu0
    %2108 = vmatpush.bf16.msra.mxu0 %v1246
    %2109 = vmatpush.bf16.msra.mxu0 %v1242
    %2110 = vmatpush.bf16.msra.mxu0 %v1238
    %2111 = vmatpush.bf16.msra.mxu0 %v1234
    %2112 = vmatpush.bf16.msra.mxu0 %v1230
    %2113 = vmatpush.bf16.msra.mxu0 %v1226
    %2114 = vmatpush.bf16.msra.mxu0 %v1222
    %2115 = vmatpush.bf16.msra.mxu0 %v1218
    %2116 = vmatmul.bf16.gmra.mxu0 %v2080
    %v2117 = vpop.f32.mrf.mxu0
    %v2118 = vadd.f32 0.0, %v2117
    %v2119 = vpop.f32.mrf.mxu0
    %2120 = vdwg.mxu0
    %2121 = vmatpush.bf16.msra.mxu0 %v1278
    %2122 = vmatpush.bf16.msra.mxu0 %v1274
    %2123 = vmatpush.bf16.msra.mxu0 %v1270
    %2124 = vmatpush.bf16.msra.mxu0 %v1266
    %2125 = vmatpush.bf16.msra.mxu0 %v1262
    %2126 = vmatpush.bf16.msra.mxu0 %v1258
    %2127 = vmatpush.bf16.msra.mxu0 %v1254
    %2128 = vmatpush.bf16.msra.mxu0 %v1250
    %2129 = vmatmul.bf16.gmra.mxu0 %v2081
    %v2130 = vpop.f32.mrf.mxu0
    %v2131 = vadd.f32 %v2118, %v2130
    %v2132 = vpop.f32.mrf.mxu0
    %2133 = vdwg.mxu0
    %2134 = vmatpush.bf16.msra.mxu0 %v1247
    %2135 = vmatpush.bf16.msra.mxu0 %v1243
    %2136 = vmatpush.bf16.msra.mxu0 %v1239
    %2137 = vmatpush.bf16.msra.mxu0 %v1235
    %2138 = vmatpush.bf16.msra.mxu0 %v1231
    %2139 = vmatpush.bf16.msra.mxu0 %v1227
    %2140 = vmatpush.bf16.msra.mxu0 %v1223
    %2141 = vmatpush.bf16.msra.mxu0 %v1219
    %2142 = vmatmul.bf16.gmra.mxu0 %v2080
    %v2143 = vpop.f32.mrf.mxu0
    %v2144 = vadd.f32 0.0, %v2143
    %v2145 = vpop.f32.mrf.mxu0
    %2146 = vdwg.mxu0
    %2147 = vmatpush.bf16.msra.mxu0 %v1279
    %2148 = vmatpush.bf16.msra.mxu0 %v1275
    %2149 = vmatpush.bf16.msra.mxu0 %v1271
    %2150 = vmatpush.bf16.msra.mxu0 %v1267
    %2151 = vmatpush.bf16.msra.mxu0 %v1263
    %2152 = vmatpush.bf16.msra.mxu0 %v1259
    %2153 = vmatpush.bf16.msra.mxu0 %v1255
    %2154 = vmatpush.bf16.msra.mxu0 %v1251
    %2155 = vmatmul.bf16.gmra.mxu0 %v2081
    %v2156 = vpop.f32.mrf.mxu0
    %v2157 = vadd.f32 %v2144, %v2156
    %v2158 = vpop.f32.mrf.mxu0
    %2159 = vdwg.mxu0
    %2160 = vmatpush.bf16.msra.mxu0 %v1248
    %2161 = vmatpush.bf16.msra.mxu0 %v1244
    %2162 = vmatpush.bf16.msra.mxu0 %v1240
    %2163 = vmatpush.bf16.msra.mxu0 %v1236
    %2164 = vmatpush.bf16.msra.mxu0 %v1232
    %2165 = vmatpush.bf16.msra.mxu0 %v1228
    %2166 = vmatpush.bf16.msra.mxu0 %v1224
    %2167 = vmatpush.bf16.msra.mxu0 %v1220
    %2168 = vmatmul.bf16.gmra.mxu0 %v2080
    %v2169 = vpop.f32.mrf.mxu0
    %v2170 = vadd.f32 0.0, %v2169
    %v2171 = vpop.f32.mrf.mxu0
    %2172 = vdwg.mxu0
    %2173 = vmatpush.bf16.msra.mxu0 %v1280
    %2174 = vmatpush.bf16.msra.mxu0 %v1276
    %2175 = vmatpush.bf16.msra.mxu0 %v1272
    %2176 = vmatpush.bf16.msra.mxu0 %v1268
    %2177 = vmatpush.bf16.msra.mxu0 %v1264
    %2178 = vmatpush.bf16.msra.mxu0 %v1260
    %2179 = vmatpush.bf16.msra.mxu0 %v1256
    %2180 = vmatpush.bf16.msra.mxu0 %v1252
    %2181 = vmatmul.bf16.gmra.mxu0 %v2081
    %v2182 = vpop.f32.mrf.mxu0
    %v2183 = vadd.f32 %v2170, %v2182
    %v2184 = vpop.f32.mrf.mxu0
    %2185 = vdwg.mxu0
    %v2186 = vadd.f32 %v2105, %v1450
    %v2187 = vadd.f32 %v2131, %v1451
    %v2188 = vsub.f32 0.0, %v2186
    %v2189 = vsub.f32 0.0, %v2187
    %v2190 = vmul.f32 %v2188, 1.442695
    %v2191 = vpow.pop %v2190
    %v2192 = vmul.f32 %v2189, 1.442695
    %v2193 = vpow.pop %v2192
    %v2194 = vadd.f32 %v2191, 1.0
    %v2195 = vadd.f32 %v2193, 1.0
    %v2196 = vrcp.pop %v2194
    %v2197 = vmul.f32 %v2194, %v2196
    %v2198 = vsub.f32 1.0, %v2197
    %v2199 = vmul.f32 %v2196, %v2198
    %v2200 = vadd.f32 %v2196, %v2199
    %vm2201 = vweird.f32 %v2194
    %vm2202 = vweird.f32 %v2196
    %vm2203 = vmor %vm2201, %vm2202
    %v2204 = vsel %vm2203, %v2196, %v2200
    %v2205 = vand.u32 2147483647, %v2194
    %vm2206 = vcmp.eq.f32.partialorder %v2205, 8.507059e+37
    %v2207 = vand.u32 %v2194, 2147483648
    %v2208 = vor.u32 1.1754944e-38, %v2207
    %v2209 = vsel %vm2206, %v2208, %v2204
    %v2210 = vmul.f32 1.0, %v2209
    %v2211 = vrcp.pop %v2195
    %v2212 = vmul.f32 %v2195, %v2211
    %v2213 = vsub.f32 1.0, %v2212
    %v2214 = vmul.f32 %v2211, %v2213
    %v2215 = vadd.f32 %v2211, %v2214
    %vm2216 = vweird.f32 %v2195
    %vm2217 = vweird.f32 %v2211
    %vm2218 = vmor %vm2216, %vm2217
    %v2219 = vsel %vm2218, %v2211, %v2215
    %v2220 = vand.u32 2147483647, %v2195
    %vm2221 = vcmp.eq.f32.partialorder %v2220, 8.507059e+37
    %v2222 = vand.u32 %v2195, 2147483648
    %v2223 = vor.u32 1.1754944e-38, %v2222
    %v2224 = vsel %vm2221, %v2223, %v2219
    %v2225 = vmul.f32 1.0, %v2224
    %v2226 = vadd.f32 %v2157, %v1495
    %v2227 = vadd.f32 %v2183, %v1499
    %v2228 = vmul.f32 %v2210, %v2227
    %v2229 = vadd.f32 %v2226, %v2228
    %v2230 = vtanh.pop %v2229
    %v2231 = vsub.f32 1.0, %v2225
    %v2232 = vmul.f32 %v2231, %v2230
    %v2233 = vmul.f32 %v2225, %v1992
    %v2234 = vadd.f32 %v2232, %v2233
    %2235 = vmatpush.bf16.msra.mxu0 %v906
    %2236 = vmatpush.bf16.msra.mxu0 %v903
    %2237 = vmatpush.bf16.msra.mxu0 %v900
    %2238 = vmatpush.bf16.msra.mxu0 %v897
    %2239 = vmatpush.bf16.msra.mxu0 %v894
    %2240 = vmatpush.bf16.msra.mxu0 %v891
    %2241 = vmatpush.bf16.msra.mxu0 %v888
    %2242 = vmatpush.bf16.msra.mxu0 %v885
    %2243 = vmatmul.bf16.gmra.mxu0 %v2080
    %v2244 = vpop.f32.mrf.mxu0
    %v2245 = vadd.f32 0.0, %v2244
    %v2246 = vpop.f32.mrf.mxu0
    %2247 = vdwg.mxu0
    %2248 = vmatpush.bf16.msra.mxu0 %v907
    %2249 = vmatpush.bf16.msra.mxu0 %v904
    %2250 = vmatpush.bf16.msra.mxu0 %v901
    %2251 = vmatpush.bf16.msra.mxu0 %v898
    %2252 = vmatpush.bf16.msra.mxu0 %v895
    %2253 = vmatpush.bf16.msra.mxu0 %v892
    %2254 = vmatpush.bf16.msra.mxu0 %v889
    %2255 = vmatpush.bf16.msra.mxu0 %v886
    %2256 = vmatmul.bf16.gmra.mxu0 %v2080
    %v2257 = vpop.f32.mrf.mxu0
    %v2258 = vadd.f32 0.0, %v2257
    %v2259 = vpop.f32.mrf.mxu0
    %2260 = vdwg.mxu0
    %2261 = vmatpush.bf16.msra.mxu0 %v908
    %2262 = vmatpush.bf16.msra.mxu0 %v905
    %2263 = vmatpush.bf16.msra.mxu0 %v902
    %2264 = vmatpush.bf16.msra.mxu0 %v899
    %2265 = vmatpush.bf16.msra.mxu0 %v896
    %2266 = vmatpush.bf16.msra.mxu0 %v893
    %2267 = vmatpush.bf16.msra.mxu0 %v890
    %2268 = vmatpush.bf16.msra.mxu0 %v887
    %2269 = vmatmul.bf16.gmra.mxu0 %v2080
    %v2270 = vpop.f32.mrf.mxu0
    %v2271 = vadd.f32 0.0, %v2270
    %v2272 = vpop.f32.mrf.mxu0
    %2273 = vdwg.mxu0
    %v2274 = vadd.f32 %v576, %v2245
    %v2275 = vadd.f32 %v634, %v2258
    %v2276 = vsub.f32 0.0, %v2274
    %v2277 = vsub.f32 0.0, %v2275
    %v2278 = vmul.f32 %v2276, 1.442695
    %v2279 = vpow.pop %v2278
    %v2280 = vmul.f32 %v2277, 1.442695
    %v2281 = vpow.pop %v2280
    %v2282 = vadd.f32 %v2279, 1.0
    %v2283 = vadd.f32 %v2281, 1.0
    %v2284 = vrcp.pop %v2282
    %v2285 = vmul.f32 %v2282, %v2284
    %v2286 = vsub.f32 1.0, %v2285
    %v2287 = vmul.f32 %v2284, %v2286
    %v2288 = vadd.f32 %v2284, %v2287
    %vm2289 = vweird.f32 %v2282
    %vm2290 = vweird.f32 %v2284
    %vm2291 = vmor %vm2289, %vm2290
    %v2292 = vsel %vm2291, %v2284, %v2288
    %v2293 = vand.u32 2147483647, %v2282
    %vm2294 = vcmp.eq.f32.partialorder %v2293, 8.507059e+37
    %v2295 = vand.u32 %v2282, 2147483648
    %v2296 = vor.u32 1.1754944e-38, %v2295
    %v2297 = vsel %vm2294, %v2296, %v2292
    %v2298 = vmul.f32 1.0, %v2297
    %v2299 = vrcp.pop %v2283
    %v2300 = vmul.f32 %v2283, %v2299
    %v2301 = vsub.f32 1.0, %v2300
    %v2302 = vmul.f32 %v2299, %v2301
    %v2303 = vadd.f32 %v2299, %v2302
    %vm2304 = vweird.f32 %v2283
    %vm2305 = vweird.f32 %v2299
    %vm2306 = vmor %vm2304, %vm2305
    %v2307 = vsel %vm2306, %v2299, %v2303
    %v2308 = vand.u32 2147483647, %v2283
    %vm2309 = vcmp.eq.f32.partialorder %v2308, 8.507059e+37
    %v2310 = vand.u32 %v2283, 2147483648
    %v2311 = vor.u32 1.1754944e-38, %v2310
    %v2312 = vsel %vm2309, %v2311, %v2307
    %v2313 = vmul.f32 1.0, %v2312
    %v2314 = vadd.f32 %v2271, %v1013
    %v2315 = vmul.f32 %v2298, %v2314
    %v2316 = vadd.f32 %v692, %v2315
    %v2317 = vtanh.pop %v2316
    %v2318 = vsub.f32 1.0, %v2313
    %v2319 = vmul.f32 %v2318, %v2317
    %v2320 = vmul.f32 %v2313, %v2079
    %v2321 = vadd.f32 %v2319, %v2320
    %v2322 = vpack.c.bf16 %v2321, %v2321
    %v2323 = vpack.c.bf16 %v2234, %v2234
    %2324 = vmatpush.bf16.msra.mxu0 %v1245
    %2325 = vmatpush.bf16.msra.mxu0 %v1241
    %2326 = vmatpush.bf16.msra.mxu0 %v1237
    %2327 = vmatpush.bf16.msra.mxu0 %v1233
    %2328 = vmatpush.bf16.msra.mxu0 %v1229
    %2329 = vmatpush.bf16.msra.mxu0 %v1225
    %2330 = vmatpush.bf16.msra.mxu0 %v1221
    %2331 = vmatpush.bf16.msra.mxu0 %v1217
    %2332 = vmatmul.bf16.gmra.mxu0 %v2322
    %v2333 = vpop.f32.mrf.mxu0
    %v2334 = vadd.f32 0.0, %v2333
    %v2335 = vpop.f32.mrf.mxu0
    %2336 = vdwg.mxu0
    %2337 = vmatpush.bf16.msra.mxu0 %v1277
    %2338 = vmatpush.bf16.msra.mxu0 %v1273
    %2339 = vmatpush.bf16.msra.mxu0 %v1269
    %2340 = vmatpush.bf16.msra.mxu0 %v1265
    %2341 = vmatpush.bf16.msra.mxu0 %v1261
    %2342 = vmatpush.bf16.msra.mxu0 %v1257
    %2343 = vmatpush.bf16.msra.mxu0 %v1253
    %2344 = vmatpush.bf16.msra.mxu0 %v1249
    %2345 = vmatmul.bf16.gmra.mxu0 %v2323
    %v2346 = vpop.f32.mrf.mxu0
    %v2347 = vadd.f32 %v2334, %v2346
    %v2348 = vpop.f32.mrf.mxu0
    %2349 = vdwg.mxu0
    %2350 = vmatpush.bf16.msra.mxu0 %v1246
    %2351 = vmatpush.bf16.msra.mxu0 %v1242
    %2352 = vmatpush.bf16.msra.mxu0 %v1238
    %2353 = vmatpush.bf16.msra.mxu0 %v1234
    %2354 = vmatpush.bf16.msra.mxu0 %v1230
    %2355 = vmatpush.bf16.msra.mxu0 %v1226
    %2356 = vmatpush.bf16.msra.mxu0 %v1222
    %2357 = vmatpush.bf16.msra.mxu0 %v1218
    %2358 = vmatmul.bf16.gmra.mxu0 %v2322
    %v2359 = vpop.f32.mrf.mxu0
    %v2360 = vadd.f32 0.0, %v2359
    %v2361 = vpop.f32.mrf.mxu0
    %2362 = vdwg.mxu0
    %2363 = vmatpush.bf16.msra.mxu0 %v1278
    %2364 = vmatpush.bf16.msra.mxu0 %v1274
    %2365 = vmatpush.bf16.msra.mxu0 %v1270
    %2366 = vmatpush.bf16.msra.mxu0 %v1266
    %2367 = vmatpush.bf16.msra.mxu0 %v1262
    %2368 = vmatpush.bf16.msra.mxu0 %v1258
    %2369 = vmatpush.bf16.msra.mxu0 %v1254
    %2370 = vmatpush.bf16.msra.mxu0 %v1250
    %2371 = vmatmul.bf16.gmra.mxu0 %v2323
    %v2372 = vpop.f32.mrf.mxu0
    %v2373 = vadd.f32 %v2360, %v2372
    %v2374 = vpop.f32.mrf.mxu0
    %2375 = vdwg.mxu0
    %2376 = vmatpush.bf16.msra.mxu0 %v1247
    %2377 = vmatpush.bf16.msra.mxu0 %v1243
    %2378 = vmatpush.bf16.msra.mxu0 %v1239
    %2379 = vmatpush.bf16.msra.mxu0 %v1235
    %2380 = vmatpush.bf16.msra.mxu0 %v1231
    %2381 = vmatpush.bf16.msra.mxu0 %v1227
    %2382 = vmatpush.bf16.msra.mxu0 %v1223
    %2383 = vmatpush.bf16.msra.mxu0 %v1219
    %2384 = vmatmul.bf16.gmra.mxu0 %v2322
    %v2385 = vpop.f32.mrf.mxu0
    %v2386 = vadd.f32 0.0, %v2385
    %v2387 = vpop.f32.mrf.mxu0
    %2388 = vdwg.mxu0
    %2389 = vmatpush.bf16.msra.mxu0 %v1279
    %2390 = vmatpush.bf16.msra.mxu0 %v1275
    %2391 = vmatpush.bf16.msra.mxu0 %v1271
    %2392 = vmatpush.bf16.msra.mxu0 %v1267
    %2393 = vmatpush.bf16.msra.mxu0 %v1263
    %2394 = vmatpush.bf16.msra.mxu0 %v1259
    %2395 = vmatpush.bf16.msra.mxu0 %v1255
    %2396 = vmatpush.bf16.msra.mxu0 %v1251
    %2397 = vmatmul.bf16.gmra.mxu0 %v2323
    %v2398 = vpop.f32.mrf.mxu0
    %v2399 = vadd.f32 %v2386, %v2398
    %v2400 = vpop.f32.mrf.mxu0
    %2401 = vdwg.mxu0
    %2402 = vmatpush.bf16.msra.mxu0 %v1248
    %2403 = vmatpush.bf16.msra.mxu0 %v1244
    %2404 = vmatpush.bf16.msra.mxu0 %v1240
    %2405 = vmatpush.bf16.msra.mxu0 %v1236
    %2406 = vmatpush.bf16.msra.mxu0 %v1232
    %2407 = vmatpush.bf16.msra.mxu0 %v1228
    %2408 = vmatpush.bf16.msra.mxu0 %v1224
    %2409 = vmatpush.bf16.msra.mxu0 %v1220
    %2410 = vmatmul.bf16.gmra.mxu0 %v2322
    %v2411 = vpop.f32.mrf.mxu0
    %v2412 = vadd.f32 0.0, %v2411
    %v2413 = vpop.f32.mrf.mxu0
    %2414 = vdwg.mxu0
    %2415 = vmatpush.bf16.msra.mxu0 %v1280
    %2416 = vmatpush.bf16.msra.mxu0 %v1276
    %2417 = vmatpush.bf16.msra.mxu0 %v1272
    %2418 = vmatpush.bf16.msra.mxu0 %v1268
    %2419 = vmatpush.bf16.msra.mxu0 %v1264
    %2420 = vmatpush.bf16.msra.mxu0 %v1260
    %2421 = vmatpush.bf16.msra.mxu0 %v1256
    %2422 = vmatpush.bf16.msra.mxu0 %v1252
    %2423 = vmatmul.bf16.gmra.mxu0 %v2323
    %v2424 = vpop.f32.mrf.mxu0
    %v2425 = vadd.f32 %v2412, %v2424
    %v2426 = vpop.f32.mrf.mxu0
    %2427 = vdwg.mxu0
    %v2428 = vadd.f32 %v2347, %v1450
    %v2429 = vadd.f32 %v2373, %v1451
    %v2430 = vsub.f32 0.0, %v2428
    %v2431 = vsub.f32 0.0, %v2429
    %v2432 = vmul.f32 %v2430, 1.442695
    %v2433 = vpow.pop %v2432
    %v2434 = vmul.f32 %v2431, 1.442695
    %v2435 = vpow.pop %v2434
    %v2436 = vadd.f32 %v2433, 1.0
    %v2437 = vadd.f32 %v2435, 1.0
    %v2438 = vrcp.pop %v2436
    %v2439 = vmul.f32 %v2436, %v2438
    %v2440 = vsub.f32 1.0, %v2439
    %v2441 = vmul.f32 %v2438, %v2440
    %v2442 = vadd.f32 %v2438, %v2441
    %vm2443 = vweird.f32 %v2436
    %vm2444 = vweird.f32 %v2438
    %vm2445 = vmor %vm2443, %vm2444
    %v2446 = vsel %vm2445, %v2438, %v2442
    %v2447 = vand.u32 2147483647, %v2436
    %vm2448 = vcmp.eq.f32.partialorder %v2447, 8.507059e+37
    %v2449 = vand.u32 %v2436, 2147483648
    %v2450 = vor.u32 1.1754944e-38, %v2449
    %v2451 = vsel %vm2448, %v2450, %v2446
    %v2452 = vmul.f32 1.0, %v2451
    %v2453 = vrcp.pop %v2437
    %v2454 = vmul.f32 %v2437, %v2453
    %v2455 = vsub.f32 1.0, %v2454
    %v2456 = vmul.f32 %v2453, %v2455
    %v2457 = vadd.f32 %v2453, %v2456
    %vm2458 = vweird.f32 %v2437
    %vm2459 = vweird.f32 %v2453
    %vm2460 = vmor %vm2458, %vm2459
    %v2461 = vsel %vm2460, %v2453, %v2457
    %v2462 = vand.u32 2147483647, %v2437
    %vm2463 = vcmp.eq.f32.partialorder %v2462, 8.507059e+37
    %v2464 = vand.u32 %v2437, 2147483648
    %v2465 = vor.u32 1.1754944e-38, %v2464
    %v2466 = vsel %vm2463, %v2465, %v2461
    %v2467 = vmul.f32 1.0, %v2466
    %v2468 = vadd.f32 %v2399, %v1495
    %v2469 = vadd.f32 %v2425, %v1499
    %v2470 = vmul.f32 %v2452, %v2469
    %v2471 = vadd.f32 %v2468, %v2470
    %v2472 = vtanh.pop %v2471
    %v2473 = vsub.f32 1.0, %v2467
    %v2474 = vmul.f32 %v2473, %v2472
    %v2475 = vmul.f32 %v2467, %v2234
    %v2476 = vadd.f32 %v2474, %v2475
    %2477 = vmatpush.bf16.msra.mxu0 %v906
    %2478 = vmatpush.bf16.msra.mxu0 %v903
    %2479 = vmatpush.bf16.msra.mxu0 %v900
    %2480 = vmatpush.bf16.msra.mxu0 %v897
    %2481 = vmatpush.bf16.msra.mxu0 %v894
    %2482 = vmatpush.bf16.msra.mxu0 %v891
    %2483 = vmatpush.bf16.msra.mxu0 %v888
    %2484 = vmatpush.bf16.msra.mxu0 %v885
    %2485 = vmatmul.bf16.gmra.mxu0 %v2322
    %v2486 = vpop.f32.mrf.mxu0
    %v2487 = vadd.f32 0.0, %v2486
    %v2488 = vpop.f32.mrf.mxu0
    %2489 = vdwg.mxu0
    %2490 = vmatpush.bf16.msra.mxu0 %v907
    %2491 = vmatpush.bf16.msra.mxu0 %v904
    %2492 = vmatpush.bf16.msra.mxu0 %v901
    %2493 = vmatpush.bf16.msra.mxu0 %v898
    %2494 = vmatpush.bf16.msra.mxu0 %v895
    %2495 = vmatpush.bf16.msra.mxu0 %v892
    %2496 = vmatpush.bf16.msra.mxu0 %v889
    %2497 = vmatpush.bf16.msra.mxu0 %v886
    %2498 = vmatmul.bf16.gmra.mxu0 %v2322
    %v2499 = vpop.f32.mrf.mxu0
    %v2500 = vadd.f32 0.0, %v2499
    %v2501 = vpop.f32.mrf.mxu0
    %2502 = vdwg.mxu0
    %2503 = vmatpush.bf16.msra.mxu0 %v908
    %2504 = vmatpush.bf16.msra.mxu0 %v905
    %2505 = vmatpush.bf16.msra.mxu0 %v902
    %2506 = vmatpush.bf16.msra.mxu0 %v899
    %2507 = vmatpush.bf16.msra.mxu0 %v896
    %2508 = vmatpush.bf16.msra.mxu0 %v893
    %2509 = vmatpush.bf16.msra.mxu0 %v890
    %2510 = vmatpush.bf16.msra.mxu0 %v887
    %2511 = vmatmul.bf16.gmra.mxu0 %v2322
    %v2512 = vpop.f32.mrf.mxu0
    %v2513 = vadd.f32 0.0, %v2512
    %v2514 = vpop.f32.mrf.mxu0
    %2515 = vdwg.mxu0
    %v2516 = vadd.f32 %v578, %v2487
    %v2517 = vadd.f32 %v636, %v2500
    %v2518 = vsub.f32 0.0, %v2516
    %v2519 = vsub.f32 0.0, %v2517
    %v2520 = vmul.f32 %v2518, 1.442695
    %v2521 = vpow.pop %v2520
    %v2522 = vmul.f32 %v2519, 1.442695
    %v2523 = vpow.pop %v2522
    %v2524 = vadd.f32 %v2521, 1.0
    %v2525 = vadd.f32 %v2523, 1.0
    %v2526 = vrcp.pop %v2524
    %v2527 = vmul.f32 %v2524, %v2526
    %v2528 = vsub.f32 1.0, %v2527
    %v2529 = vmul.f32 %v2526, %v2528
    %v2530 = vadd.f32 %v2526, %v2529
    %vm2531 = vweird.f32 %v2524
    %vm2532 = vweird.f32 %v2526
    %vm2533 = vmor %vm2531, %vm2532
    %v2534 = vsel %vm2533, %v2526, %v2530
    %v2535 = vand.u32 2147483647, %v2524
    %vm2536 = vcmp.eq.f32.partialorder %v2535, 8.507059e+37
    %v2537 = vand.u32 %v2524, 2147483648
    %v2538 = vor.u32 1.1754944e-38, %v2537
    %v2539 = vsel %vm2536, %v2538, %v2534
    %v2540 = vmul.f32 1.0, %v2539
    %v2541 = vrcp.pop %v2525
    %v2542 = vmul.f32 %v2525, %v2541
    %v2543 = vsub.f32 1.0, %v2542
    %v2544 = vmul.f32 %v2541, %v2543
    %v2545 = vadd.f32 %v2541, %v2544
    %vm2546 = vweird.f32 %v2525
    %vm2547 = vweird.f32 %v2541
    %vm2548 = vmor %vm2546, %vm2547
    %v2549 = vsel %vm2548, %v2541, %v2545
    %v2550 = vand.u32 2147483647, %v2525
    %vm2551 = vcmp.eq.f32.partialorder %v2550, 8.507059e+37
    %v2552 = vand.u32 %v2525, 2147483648
    %v2553 = vor.u32 1.1754944e-38, %v2552
    %v2554 = vsel %vm2551, %v2553, %v2549
    %v2555 = vmul.f32 1.0, %v2554
    %v2556 = vadd.f32 %v2513, %v1013
    %v2557 = vmul.f32 %v2540, %v2556
    %v2558 = vadd.f32 %v694, %v2557
    %v2559 = vtanh.pop %v2558
    %v2560 = vsub.f32 1.0, %v2555
    %v2561 = vmul.f32 %v2560, %v2559
    %v2562 = vmul.f32 %v2555, %v2321
    %v2563 = vadd.f32 %v2561, %v2562
    %v2564 = vpack.c.bf16 %v2563, %v2563
    %v2565 = vpack.c.bf16 %v2476, %v2476
    %2566 = vmatpush.bf16.msra.mxu0 %v1245
    %2567 = vmatpush.bf16.msra.mxu0 %v1241
    %2568 = vmatpush.bf16.msra.mxu0 %v1237
    %2569 = vmatpush.bf16.msra.mxu0 %v1233
    %2570 = vmatpush.bf16.msra.mxu0 %v1229
    %2571 = vmatpush.bf16.msra.mxu0 %v1225
    %2572 = vmatpush.bf16.msra.mxu0 %v1221
    %2573 = vmatpush.bf16.msra.mxu0 %v1217
    %2574 = vmatmul.bf16.gmra.mxu0 %v2564
    %v2575 = vpop.f32.mrf.mxu0
    %v2576 = vadd.f32 0.0, %v2575
    %v2577 = vpop.f32.mrf.mxu0
    %2578 = vdwg.mxu0
    %2579 = vmatpush.bf16.msra.mxu0 %v1277
    %2580 = vmatpush.bf16.msra.mxu0 %v1273
    %2581 = vmatpush.bf16.msra.mxu0 %v1269
    %2582 = vmatpush.bf16.msra.mxu0 %v1265
    %2583 = vmatpush.bf16.msra.mxu0 %v1261
    %2584 = vmatpush.bf16.msra.mxu0 %v1257
    %2585 = vmatpush.bf16.msra.mxu0 %v1253
    %2586 = vmatpush.bf16.msra.mxu0 %v1249
    %2587 = vmatmul.bf16.gmra.mxu0 %v2565
    %v2588 = vpop.f32.mrf.mxu0
    %v2589 = vadd.f32 %v2576, %v2588
    %v2590 = vpop.f32.mrf.mxu0
    %2591 = vdwg.mxu0
    %2592 = vmatpush.bf16.msra.mxu0 %v1246
    %2593 = vmatpush.bf16.msra.mxu0 %v1242
    %2594 = vmatpush.bf16.msra.mxu0 %v1238
    %2595 = vmatpush.bf16.msra.mxu0 %v1234
    %2596 = vmatpush.bf16.msra.mxu0 %v1230
    %2597 = vmatpush.bf16.msra.mxu0 %v1226
    %2598 = vmatpush.bf16.msra.mxu0 %v1222
    %2599 = vmatpush.bf16.msra.mxu0 %v1218
    %2600 = vmatmul.bf16.gmra.mxu0 %v2564
    %v2601 = vpop.f32.mrf.mxu0
    %v2602 = vadd.f32 0.0, %v2601
    %v2603 = vpop.f32.mrf.mxu0
    %2604 = vdwg.mxu0
    %2605 = vmatpush.bf16.msra.mxu0 %v1278
    %2606 = vmatpush.bf16.msra.mxu0 %v1274
    %2607 = vmatpush.bf16.msra.mxu0 %v1270
    %2608 = vmatpush.bf16.msra.mxu0 %v1266
    %2609 = vmatpush.bf16.msra.mxu0 %v1262
    %2610 = vmatpush.bf16.msra.mxu0 %v1258
    %2611 = vmatpush.bf16.msra.mxu0 %v1254
    %2612 = vmatpush.bf16.msra.mxu0 %v1250
    %2613 = vmatmul.bf16.gmra.mxu0 %v2565
    %v2614 = vpop.f32.mrf.mxu0
    %v2615 = vadd.f32 %v2602, %v2614
    %v2616 = vpop.f32.mrf.mxu0
    %2617 = vdwg.mxu0
    %2618 = vmatpush.bf16.msra.mxu0 %v1247
    %2619 = vmatpush.bf16.msra.mxu0 %v1243
    %2620 = vmatpush.bf16.msra.mxu0 %v1239
    %2621 = vmatpush.bf16.msra.mxu0 %v1235
    %2622 = vmatpush.bf16.msra.mxu0 %v1231
    %2623 = vmatpush.bf16.msra.mxu0 %v1227
    %2624 = vmatpush.bf16.msra.mxu0 %v1223
    %2625 = vmatpush.bf16.msra.mxu0 %v1219
    %2626 = vmatmul.bf16.gmra.mxu0 %v2564
    %v2627 = vpop.f32.mrf.mxu0
    %v2628 = vadd.f32 0.0, %v2627
    %v2629 = vpop.f32.mrf.mxu0
    %2630 = vdwg.mxu0
    %2631 = vmatpush.bf16.msra.mxu0 %v1279
    %2632 = vmatpush.bf16.msra.mxu0 %v1275
    %2633 = vmatpush.bf16.msra.mxu0 %v1271
    %2634 = vmatpush.bf16.msra.mxu0 %v1267
    %2635 = vmatpush.bf16.msra.mxu0 %v1263
    %2636 = vmatpush.bf16.msra.mxu0 %v1259
    %2637 = vmatpush.bf16.msra.mxu0 %v1255
    %2638 = vmatpush.bf16.msra.mxu0 %v1251
    %2639 = vmatmul.bf16.gmra.mxu0 %v2565
    %v2640 = vpop.f32.mrf.mxu0
    %v2641 = vadd.f32 %v2628, %v2640
    %v2642 = vpop.f32.mrf.mxu0
    %2643 = vdwg.mxu0
    %2644 = vmatpush.bf16.msra.mxu0 %v1248
    %2645 = vmatpush.bf16.msra.mxu0 %v1244
    %2646 = vmatpush.bf16.msra.mxu0 %v1240
    %2647 = vmatpush.bf16.msra.mxu0 %v1236
    %2648 = vmatpush.bf16.msra.mxu0 %v1232
    %2649 = vmatpush.bf16.msra.mxu0 %v1228
    %2650 = vmatpush.bf16.msra.mxu0 %v1224
    %2651 = vmatpush.bf16.msra.mxu0 %v1220
    %2652 = vmatmul.bf16.gmra.mxu0 %v2564
    %v2653 = vpop.f32.mrf.mxu0
    %v2654 = vadd.f32 0.0, %v2653
    %v2655 = vpop.f32.mrf.mxu0
    %2656 = vdwg.mxu0
    %2657 = vmatpush.bf16.msra.mxu0 %v1280
    %2658 = vmatpush.bf16.msra.mxu0 %v1276
    %2659 = vmatpush.bf16.msra.mxu0 %v1272
    %2660 = vmatpush.bf16.msra.mxu0 %v1268
    %2661 = vmatpush.bf16.msra.mxu0 %v1264
    %2662 = vmatpush.bf16.msra.mxu0 %v1260
    %2663 = vmatpush.bf16.msra.mxu0 %v1256
    %2664 = vmatpush.bf16.msra.mxu0 %v1252
    %2665 = vmatmul.bf16.gmra.mxu0 %v2565
    %v2666 = vpop.f32.mrf.mxu0
    %v2667 = vadd.f32 %v2654, %v2666
    %v2668 = vpop.f32.mrf.mxu0
    %2669 = vdwg.mxu0
    %v2670 = vadd.f32 %v2589, %v1450
    %v2671 = vadd.f32 %v2615, %v1451
    %v2672 = vsub.f32 0.0, %v2670
    %v2673 = vsub.f32 0.0, %v2671
    %v2674 = vmul.f32 %v2672, 1.442695
    %v2675 = vpow.pop %v2674
    %v2676 = vmul.f32 %v2673, 1.442695
    %v2677 = vpow.pop %v2676
    %v2678 = vadd.f32 %v2675, 1.0
    %v2679 = vadd.f32 %v2677, 1.0
    %v2680 = vrcp.pop %v2678
    %v2681 = vmul.f32 %v2678, %v2680
    %v2682 = vsub.f32 1.0, %v2681
    %v2683 = vmul.f32 %v2680, %v2682
    %v2684 = vadd.f32 %v2680, %v2683
    %vm2685 = vweird.f32 %v2678
    %vm2686 = vweird.f32 %v2680
    %vm2687 = vmor %vm2685, %vm2686
    %v2688 = vsel %vm2687, %v2680, %v2684
    %v2689 = vand.u32 2147483647, %v2678
    %vm2690 = vcmp.eq.f32.partialorder %v2689, 8.507059e+37
    %v2691 = vand.u32 %v2678, 2147483648
    %v2692 = vor.u32 1.1754944e-38, %v2691
    %v2693 = vsel %vm2690, %v2692, %v2688
    %v2694 = vmul.f32 1.0, %v2693
    %v2695 = vrcp.pop %v2679
    %v2696 = vmul.f32 %v2679, %v2695
    %v2697 = vsub.f32 1.0, %v2696
    %v2698 = vmul.f32 %v2695, %v2697
    %v2699 = vadd.f32 %v2695, %v2698
    %vm2700 = vweird.f32 %v2679
    %vm2701 = vweird.f32 %v2695
    %vm2702 = vmor %vm2700, %vm2701
    %v2703 = vsel %vm2702, %v2695, %v2699
    %v2704 = vand.u32 2147483647, %v2679
    %vm2705 = vcmp.eq.f32.partialorder %v2704, 8.507059e+37
    %v2706 = vand.u32 %v2679, 2147483648
    %v2707 = vor.u32 1.1754944e-38, %v2706
    %v2708 = vsel %vm2705, %v2707, %v2703
    %v2709 = vmul.f32 1.0, %v2708
    %v2710 = vadd.f32 %v2641, %v1495
    %v2711 = vadd.f32 %v2667, %v1499
    %v2712 = vmul.f32 %v2694, %v2711
    %v2713 = vadd.f32 %v2710, %v2712
    %v2714 = vtanh.pop %v2713
    %v2715 = vsub.f32 1.0, %v2709
    %v2716 = vmul.f32 %v2715, %v2714
    %v2717 = vmul.f32 %v2709, %v2476
    %v2718 = vadd.f32 %v2716, %v2717
    %2719 = vmatpush.bf16.msra.mxu0 %v906
    %2720 = vmatpush.bf16.msra.mxu0 %v903
    %2721 = vmatpush.bf16.msra.mxu0 %v900
    %2722 = vmatpush.bf16.msra.mxu0 %v897
    %2723 = vmatpush.bf16.msra.mxu0 %v894
    %2724 = vmatpush.bf16.msra.mxu0 %v891
    %2725 = vmatpush.bf16.msra.mxu0 %v888
    %2726 = vmatpush.bf16.msra.mxu0 %v885
    %2727 = vmatmul.bf16.gmra.mxu0 %v2564
    %v2728 = vpop.f32.mrf.mxu0
    %v2729 = vadd.f32 0.0, %v2728
    %v2730 = vpop.f32.mrf.mxu0
    %2731 = vdwg.mxu0
    %2732 = vmatpush.bf16.msra.mxu0 %v907
    %2733 = vmatpush.bf16.msra.mxu0 %v904
    %2734 = vmatpush.bf16.msra.mxu0 %v901
    %2735 = vmatpush.bf16.msra.mxu0 %v898
    %2736 = vmatpush.bf16.msra.mxu0 %v895
    %2737 = vmatpush.bf16.msra.mxu0 %v892
    %2738 = vmatpush.bf16.msra.mxu0 %v889
    %2739 = vmatpush.bf16.msra.mxu0 %v886
    %2740 = vmatmul.bf16.gmra.mxu0 %v2564
    %v2741 = vpop.f32.mrf.mxu0
    %v2742 = vadd.f32 0.0, %v2741
    %v2743 = vpop.f32.mrf.mxu0
    %2744 = vdwg.mxu0
    %2745 = vmatpush.bf16.msra.mxu0 %v908
    %2746 = vmatpush.bf16.msra.mxu0 %v905
    %2747 = vmatpush.bf16.msra.mxu0 %v902
    %2748 = vmatpush.bf16.msra.mxu0 %v899
    %2749 = vmatpush.bf16.msra.mxu0 %v896
    %2750 = vmatpush.bf16.msra.mxu0 %v893
    %2751 = vmatpush.bf16.msra.mxu0 %v890
    %2752 = vmatpush.bf16.msra.mxu0 %v887
    %2753 = vmatmul.bf16.gmra.mxu0 %v2564
    %v2754 = vpop.f32.mrf.mxu0
    %v2755 = vadd.f32 0.0, %v2754
    %v2756 = vpop.f32.mrf.mxu0
    %2757 = vdwg.mxu0
    %v2758 = vadd.f32 %v581, %v2729
    %v2759 = vadd.f32 %v639, %v2742
    %v2760 = vsub.f32 0.0, %v2758
    %v2761 = vsub.f32 0.0, %v2759
    %v2762 = vmul.f32 %v2760, 1.442695
    %v2763 = vpow.pop %v2762
    %v2764 = vmul.f32 %v2761, 1.442695
    %v2765 = vpow.pop %v2764
    %v2766 = vadd.f32 %v2763, 1.0
    %v2767 = vadd.f32 %v2765, 1.0
    %v2768 = vrcp.pop %v2766
    %v2769 = vmul.f32 %v2766, %v2768
    %v2770 = vsub.f32 1.0, %v2769
    %v2771 = vmul.f32 %v2768, %v2770
    %v2772 = vadd.f32 %v2768, %v2771
    %vm2773 = vweird.f32 %v2766
    %vm2774 = vweird.f32 %v2768
    %vm2775 = vmor %vm2773, %vm2774
    %v2776 = vsel %vm2775, %v2768, %v2772
    %v2777 = vand.u32 2147483647, %v2766
    %vm2778 = vcmp.eq.f32.partialorder %v2777, 8.507059e+37
    %v2779 = vand.u32 %v2766, 2147483648
    %v2780 = vor.u32 1.1754944e-38, %v2779
    %v2781 = vsel %vm2778, %v2780, %v2776
    %v2782 = vmul.f32 1.0, %v2781
    %v2783 = vrcp.pop %v2767
    %v2784 = vmul.f32 %v2767, %v2783
    %v2785 = vsub.f32 1.0, %v2784
    %v2786 = vmul.f32 %v2783, %v2785
    %v2787 = vadd.f32 %v2783, %v2786
    %vm2788 = vweird.f32 %v2767
    %vm2789 = vweird.f32 %v2783
    %vm2790 = vmor %vm2788, %vm2789
    %v2791 = vsel %vm2790, %v2783, %v2787
    %v2792 = vand.u32 2147483647, %v2767
    %vm2793 = vcmp.eq.f32.partialorder %v2792, 8.507059e+37
    %v2794 = vand.u32 %v2767, 2147483648
    %v2795 = vor.u32 1.1754944e-38, %v2794
    %v2796 = vsel %vm2793, %v2795, %v2791
    %v2797 = vmul.f32 1.0, %v2796
    %v2798 = vadd.f32 %v2755, %v1013
    %v2799 = vmul.f32 %v2782, %v2798
    %v2800 = vadd.f32 %v697, %v2799
    %v2801 = vtanh.pop %v2800
    %v2802 = vsub.f32 1.0, %v2797
    %v2803 = vmul.f32 %v2802, %v2801
    %v2804 = vmul.f32 %v2797, %v2563
    %v2805 = vadd.f32 %v2803, %v2804
    %v2806 = vpack.c.bf16 %v2805, %v2805
    %v2807 = vpack.c.bf16 %v2718, %v2718
    %2808 = vmatpush.bf16.msra.mxu0 %v1245
    %2809 = vmatpush.bf16.msra.mxu0 %v1241
    %2810 = vmatpush.bf16.msra.mxu0 %v1237
    %2811 = vmatpush.bf16.msra.mxu0 %v1233
    %2812 = vmatpush.bf16.msra.mxu0 %v1229
    %2813 = vmatpush.bf16.msra.mxu0 %v1225
    %2814 = vmatpush.bf16.msra.mxu0 %v1221
    %2815 = vmatpush.bf16.msra.mxu0 %v1217
    %2816 = vmatmul.bf16.gmra.mxu0 %v2806
    %v2817 = vpop.f32.mrf.mxu0
    %v2818 = vadd.f32 0.0, %v2817
    %v2819 = vpop.f32.mrf.mxu0
    %2820 = vdwg.mxu0
    %2821 = vmatpush.bf16.msra.mxu0 %v1277
    %2822 = vmatpush.bf16.msra.mxu0 %v1273
    %2823 = vmatpush.bf16.msra.mxu0 %v1269
    %2824 = vmatpush.bf16.msra.mxu0 %v1265
    %2825 = vmatpush.bf16.msra.mxu0 %v1261
    %2826 = vmatpush.bf16.msra.mxu0 %v1257
    %2827 = vmatpush.bf16.msra.mxu0 %v1253
    %2828 = vmatpush.bf16.msra.mxu0 %v1249
    %2829 = vmatmul.bf16.gmra.mxu0 %v2807
    %v2830 = vpop.f32.mrf.mxu0
    %v2831 = vadd.f32 %v2818, %v2830
    %v2832 = vpop.f32.mrf.mxu0
    %2833 = vdwg.mxu0
    %2834 = vmatpush.bf16.msra.mxu0 %v1246
    %2835 = vmatpush.bf16.msra.mxu0 %v1242
    %2836 = vmatpush.bf16.msra.mxu0 %v1238
    %2837 = vmatpush.bf16.msra.mxu0 %v1234
    %2838 = vmatpush.bf16.msra.mxu0 %v1230
    %2839 = vmatpush.bf16.msra.mxu0 %v1226
    %2840 = vmatpush.bf16.msra.mxu0 %v1222
    %2841 = vmatpush.bf16.msra.mxu0 %v1218
    %2842 = vmatmul.bf16.gmra.mxu0 %v2806
    %v2843 = vpop.f32.mrf.mxu0
    %v2844 = vadd.f32 0.0, %v2843
    %v2845 = vpop.f32.mrf.mxu0
    %2846 = vdwg.mxu0
    %2847 = vmatpush.bf16.msra.mxu0 %v1278
    %2848 = vmatpush.bf16.msra.mxu0 %v1274
    %2849 = vmatpush.bf16.msra.mxu0 %v1270
    %2850 = vmatpush.bf16.msra.mxu0 %v1266
    %2851 = vmatpush.bf16.msra.mxu0 %v1262
    %2852 = vmatpush.bf16.msra.mxu0 %v1258
    %2853 = vmatpush.bf16.msra.mxu0 %v1254
    %2854 = vmatpush.bf16.msra.mxu0 %v1250
    %2855 = vmatmul.bf16.gmra.mxu0 %v2807
    %v2856 = vpop.f32.mrf.mxu0
    %v2857 = vadd.f32 %v2844, %v2856
    %v2858 = vpop.f32.mrf.mxu0
    %2859 = vdwg.mxu0
    %2860 = vmatpush.bf16.msra.mxu0 %v1247
    %2861 = vmatpush.bf16.msra.mxu0 %v1243
    %2862 = vmatpush.bf16.msra.mxu0 %v1239
    %2863 = vmatpush.bf16.msra.mxu0 %v1235
    %2864 = vmatpush.bf16.msra.mxu0 %v1231
    %2865 = vmatpush.bf16.msra.mxu0 %v1227
    %2866 = vmatpush.bf16.msra.mxu0 %v1223
    %2867 = vmatpush.bf16.msra.mxu0 %v1219
    %2868 = vmatmul.bf16.gmra.mxu0 %v2806
    %v2869 = vpop.f32.mrf.mxu0
    %v2870 = vadd.f32 0.0, %v2869
    %v2871 = vpop.f32.mrf.mxu0
    %2872 = vdwg.mxu0
    %2873 = vmatpush.bf16.msra.mxu0 %v1279
    %2874 = vmatpush.bf16.msra.mxu0 %v1275
    %2875 = vmatpush.bf16.msra.mxu0 %v1271
    %2876 = vmatpush.bf16.msra.mxu0 %v1267
    %2877 = vmatpush.bf16.msra.mxu0 %v1263
    %2878 = vmatpush.bf16.msra.mxu0 %v1259
    %2879 = vmatpush.bf16.msra.mxu0 %v1255
    %2880 = vmatpush.bf16.msra.mxu0 %v1251
    %2881 = vmatmul.bf16.gmra.mxu0 %v2807
    %v2882 = vpop.f32.mrf.mxu0
    %v2883 = vadd.f32 %v2870, %v2882
    %v2884 = vpop.f32.mrf.mxu0
    %2885 = vdwg.mxu0
    %2886 = vmatpush.bf16.msra.mxu0 %v1248
    %2887 = vmatpush.bf16.msra.mxu0 %v1244
    %2888 = vmatpush.bf16.msra.mxu0 %v1240
    %2889 = vmatpush.bf16.msra.mxu0 %v1236
    %2890 = vmatpush.bf16.msra.mxu0 %v1232
    %2891 = vmatpush.bf16.msra.mxu0 %v1228
    %2892 = vmatpush.bf16.msra.mxu0 %v1224
    %2893 = vmatpush.bf16.msra.mxu0 %v1220
    %2894 = vmatmul.bf16.gmra.mxu0 %v2806
    %v2895 = vpop.f32.mrf.mxu0
    %v2896 = vadd.f32 0.0, %v2895
    %v2897 = vpop.f32.mrf.mxu0
    %2898 = vdwg.mxu0
    %2899 = vmatpush.bf16.msra.mxu0 %v1280
    %2900 = vmatpush.bf16.msra.mxu0 %v1276
    %2901 = vmatpush.bf16.msra.mxu0 %v1272
    %2902 = vmatpush.bf16.msra.mxu0 %v1268
    %2903 = vmatpush.bf16.msra.mxu0 %v1264
    %2904 = vmatpush.bf16.msra.mxu0 %v1260
    %2905 = vmatpush.bf16.msra.mxu0 %v1256
    %2906 = vmatpush.bf16.msra.mxu0 %v1252
    %2907 = vmatmul.bf16.gmra.mxu0 %v2807
    %v2908 = vpop.f32.mrf.mxu0
    %v2909 = vadd.f32 %v2896, %v2908
    %v2910 = vpop.f32.mrf.mxu0
    %2911 = vdwg.mxu0
    %v2912 = vadd.f32 %v2831, %v1450
    %v2913 = vadd.f32 %v2857, %v1451
    %v2914 = vsub.f32 0.0, %v2912
    %v2915 = vsub.f32 0.0, %v2913
    %v2916 = vmul.f32 %v2914, 1.442695
    %v2917 = vpow.pop %v2916
    %v2918 = vmul.f32 %v2915, 1.442695
    %v2919 = vpow.pop %v2918
    %v2920 = vadd.f32 %v2917, 1.0
    %v2921 = vadd.f32 %v2919, 1.0
    %v2922 = vrcp.pop %v2920
    %v2923 = vmul.f32 %v2920, %v2922
    %v2924 = vsub.f32 1.0, %v2923
    %v2925 = vmul.f32 %v2922, %v2924
    %v2926 = vadd.f32 %v2922, %v2925
    %vm2927 = vweird.f32 %v2920
    %vm2928 = vweird.f32 %v2922
    %vm2929 = vmor %vm2927, %vm2928
    %v2930 = vsel %vm2929, %v2922, %v2926
    %v2931 = vand.u32 2147483647, %v2920
    %vm2932 = vcmp.eq.f32.partialorder %v2931, 8.507059e+37
    %v2933 = vand.u32 %v2920, 2147483648
    %v2934 = vor.u32 1.1754944e-38, %v2933
    %v2935 = vsel %vm2932, %v2934, %v2930
    %v2936 = vmul.f32 1.0, %v2935
    %v2937 = vrcp.pop %v2921
    %v2938 = vmul.f32 %v2921, %v2937
    %v2939 = vsub.f32 1.0, %v2938
    %v2940 = vmul.f32 %v2937, %v2939
    %v2941 = vadd.f32 %v2937, %v2940
    %vm2942 = vweird.f32 %v2921
    %vm2943 = vweird.f32 %v2937
    %vm2944 = vmor %vm2942, %vm2943
    %v2945 = vsel %vm2944, %v2937, %v2941
    %v2946 = vand.u32 2147483647, %v2921
    %vm2947 = vcmp.eq.f32.partialorder %v2946, 8.507059e+37
    %v2948 = vand.u32 %v2921, 2147483648
    %v2949 = vor.u32 1.1754944e-38, %v2948
    %v2950 = vsel %vm2947, %v2949, %v2945
    %v2951 = vmul.f32 1.0, %v2950
    %v2952 = vadd.f32 %v2883, %v1495
    %v2953 = vadd.f32 %v2909, %v1499
    %v2954 = vmul.f32 %v2936, %v2953
    %v2955 = vadd.f32 %v2952, %v2954
    %v2956 = vtanh.pop %v2955
    %v2957 = vsub.f32 1.0, %v2951
    %v2958 = vmul.f32 %v2957, %v2956
    %v2959 = vmul.f32 %v2951, %v2718
    %v2960 = vadd.f32 %v2958, %v2959
    %2961 = vmatpush.bf16.msra.mxu0 %v906
    %2962 = vmatpush.bf16.msra.mxu0 %v903
    %2963 = vmatpush.bf16.msra.mxu0 %v900
    %2964 = vmatpush.bf16.msra.mxu0 %v897
    %2965 = vmatpush.bf16.msra.mxu0 %v894
    %2966 = vmatpush.bf16.msra.mxu0 %v891
    %2967 = vmatpush.bf16.msra.mxu0 %v888
    %2968 = vmatpush.bf16.msra.mxu0 %v885
    %2969 = vmatmul.bf16.gmra.mxu0 %v2806
    %v2970 = vpop.f32.mrf.mxu0
    %v2971 = vadd.f32 0.0, %v2970
    %v2972 = vpop.f32.mrf.mxu0
    %2973 = vdwg.mxu0
    %2974 = vmatpush.bf16.msra.mxu0 %v907
    %2975 = vmatpush.bf16.msra.mxu0 %v904
    %2976 = vmatpush.bf16.msra.mxu0 %v901
    %2977 = vmatpush.bf16.msra.mxu0 %v898
    %2978 = vmatpush.bf16.msra.mxu0 %v895
    %2979 = vmatpush.bf16.msra.mxu0 %v892
    %2980 = vmatpush.bf16.msra.mxu0 %v889
    %2981 = vmatpush.bf16.msra.mxu0 %v886
    %2982 = vmatmul.bf16.gmra.mxu0 %v2806
    %v2983 = vpop.f32.mrf.mxu0
    %v2984 = vadd.f32 0.0, %v2983
    %v2985 = vpop.f32.mrf.mxu0
    %2986 = vdwg.mxu0
    %2987 = vmatpush.bf16.msra.mxu0 %v908
    %2988 = vmatpush.bf16.msra.mxu0 %v905
    %2989 = vmatpush.bf16.msra.mxu0 %v902
    %2990 = vmatpush.bf16.msra.mxu0 %v899
    %2991 = vmatpush.bf16.msra.mxu0 %v896
    %2992 = vmatpush.bf16.msra.mxu0 %v893
    %2993 = vmatpush.bf16.msra.mxu0 %v890
    %2994 = vmatpush.bf16.msra.mxu0 %v887
    %2995 = vmatmul.bf16.gmra.mxu0 %v2806
    %v2996 = vpop.f32.mrf.mxu0
    %v2997 = vadd.f32 0.0, %v2996
    %v2998 = vpop.f32.mrf.mxu0
    %2999 = vdwg.mxu0
    %v3000 = vadd.f32 %v583, %v2971
    %v3001 = vadd.f32 %v641, %v2984
    %v3002 = vsub.f32 0.0, %v3000
    %v3003 = vsub.f32 0.0, %v3001
    %v3004 = vmul.f32 %v3002, 1.442695
    %v3005 = vpow.pop %v3004
    %v3006 = vmul.f32 %v3003, 1.442695
    %v3007 = vpow.pop %v3006
    %v3008 = vadd.f32 %v3005, 1.0
    %v3009 = vadd.f32 %v3007, 1.0
    %v3010 = vrcp.pop %v3008
    %v3011 = vmul.f32 %v3008, %v3010
    %v3012 = vsub.f32 1.0, %v3011
    %v3013 = vmul.f32 %v3010, %v3012
    %v3014 = vadd.f32 %v3010, %v3013
    %vm3015 = vweird.f32 %v3008
    %vm3016 = vweird.f32 %v3010
    %vm3017 = vmor %vm3015, %vm3016
    %v3018 = vsel %vm3017, %v3010, %v3014
    %v3019 = vand.u32 2147483647, %v3008
    %vm3020 = vcmp.eq.f32.partialorder %v3019, 8.507059e+37
    %v3021 = vand.u32 %v3008, 2147483648
    %v3022 = vor.u32 1.1754944e-38, %v3021
    %v3023 = vsel %vm3020, %v3022, %v3018
    %v3024 = vmul.f32 1.0, %v3023
    %v3025 = vrcp.pop %v3009
    %v3026 = vmul.f32 %v3009, %v3025
    %v3027 = vsub.f32 1.0, %v3026
    %v3028 = vmul.f32 %v3025, %v3027
    %v3029 = vadd.f32 %v3025, %v3028
    %vm3030 = vweird.f32 %v3009
    %vm3031 = vweird.f32 %v3025
    %vm3032 = vmor %vm3030, %vm3031
    %v3033 = vsel %vm3032, %v3025, %v3029
    %v3034 = vand.u32 2147483647, %v3009
    %vm3035 = vcmp.eq.f32.partialorder %v3034, 8.507059e+37
    %v3036 = vand.u32 %v3009, 2147483648
    %v3037 = vor.u32 1.1754944e-38, %v3036
    %v3038 = vsel %vm3035, %v3037, %v3033
    %v3039 = vmul.f32 1.0, %v3038
    %v3040 = vadd.f32 %v2997, %v1013
    %v3041 = vmul.f32 %v3024, %v3040
    %v3042 = vadd.f32 %v699, %v3041
    %v3043 = vtanh.pop %v3042
    %v3044 = vsub.f32 1.0, %v3039
    %v3045 = vmul.f32 %v3044, %v3043
    %v3046 = vmul.f32 %v3039, %v2805
    %v3047 = vadd.f32 %v3045, %v3046
    %v3048 = vpack.c.bf16 %v3047, %v3047
    %v3049 = vpack.c.bf16 %v2960, %v2960
    %3050 = vmatpush.bf16.msra.mxu0 %v1245
    %3051 = vmatpush.bf16.msra.mxu0 %v1241
    %3052 = vmatpush.bf16.msra.mxu0 %v1237
    %3053 = vmatpush.bf16.msra.mxu0 %v1233
    %3054 = vmatpush.bf16.msra.mxu0 %v1229
    %3055 = vmatpush.bf16.msra.mxu0 %v1225
    %3056 = vmatpush.bf16.msra.mxu0 %v1221
    %3057 = vmatpush.bf16.msra.mxu0 %v1217
    %3058 = vmatmul.bf16.gmra.mxu0 %v3048
    %v3059 = vpop.f32.mrf.mxu0
    %v3060 = vadd.f32 0.0, %v3059
    %v3061 = vpop.f32.mrf.mxu0
    %3062 = vdwg.mxu0
    %3063 = vmatpush.bf16.msra.mxu0 %v1277
    %3064 = vmatpush.bf16.msra.mxu0 %v1273
    %3065 = vmatpush.bf16.msra.mxu0 %v1269
    %3066 = vmatpush.bf16.msra.mxu0 %v1265
    %3067 = vmatpush.bf16.msra.mxu0 %v1261
    %3068 = vmatpush.bf16.msra.mxu0 %v1257
    %3069 = vmatpush.bf16.msra.mxu0 %v1253
    %3070 = vmatpush.bf16.msra.mxu0 %v1249
    %3071 = vmatmul.bf16.gmra.mxu0 %v3049
    %v3072 = vpop.f32.mrf.mxu0
    %v3073 = vadd.f32 %v3060, %v3072
    %v3074 = vpop.f32.mrf.mxu0
    %3075 = vdwg.mxu0
    %3076 = vmatpush.bf16.msra.mxu0 %v1246
    %3077 = vmatpush.bf16.msra.mxu0 %v1242
    %3078 = vmatpush.bf16.msra.mxu0 %v1238
    %3079 = vmatpush.bf16.msra.mxu0 %v1234
    %3080 = vmatpush.bf16.msra.mxu0 %v1230
    %3081 = vmatpush.bf16.msra.mxu0 %v1226
    %3082 = vmatpush.bf16.msra.mxu0 %v1222
    %3083 = vmatpush.bf16.msra.mxu0 %v1218
    %3084 = vmatmul.bf16.gmra.mxu0 %v3048
    %v3085 = vpop.f32.mrf.mxu0
    %v3086 = vadd.f32 0.0, %v3085
    %v3087 = vpop.f32.mrf.mxu0
    %3088 = vdwg.mxu0
    %3089 = vmatpush.bf16.msra.mxu0 %v1278
    %3090 = vmatpush.bf16.msra.mxu0 %v1274
    %3091 = vmatpush.bf16.msra.mxu0 %v1270
    %3092 = vmatpush.bf16.msra.mxu0 %v1266
    %3093 = vmatpush.bf16.msra.mxu0 %v1262
    %3094 = vmatpush.bf16.msra.mxu0 %v1258
    %3095 = vmatpush.bf16.msra.mxu0 %v1254
    %3096 = vmatpush.bf16.msra.mxu0 %v1250
    %3097 = vmatmul.bf16.gmra.mxu0 %v3049
    %v3098 = vpop.f32.mrf.mxu0
    %v3099 = vadd.f32 %v3086, %v3098
    %v3100 = vpop.f32.mrf.mxu0
    %3101 = vdwg.mxu0
    %3102 = vmatpush.bf16.msra.mxu0 %v1247
    %3103 = vmatpush.bf16.msra.mxu0 %v1243
    %3104 = vmatpush.bf16.msra.mxu0 %v1239
    %3105 = vmatpush.bf16.msra.mxu0 %v1235
    %3106 = vmatpush.bf16.msra.mxu0 %v1231
    %3107 = vmatpush.bf16.msra.mxu0 %v1227
    %3108 = vmatpush.bf16.msra.mxu0 %v1223
    %3109 = vmatpush.bf16.msra.mxu0 %v1219
    %3110 = vmatmul.bf16.gmra.mxu0 %v3048
    %v3111 = vpop.f32.mrf.mxu0
    %v3112 = vadd.f32 0.0, %v3111
    %v3113 = vpop.f32.mrf.mxu0
    %3114 = vdwg.mxu0
    %3115 = vmatpush.bf16.msra.mxu0 %v1279
    %3116 = vmatpush.bf16.msra.mxu0 %v1275
    %3117 = vmatpush.bf16.msra.mxu0 %v1271
    %3118 = vmatpush.bf16.msra.mxu0 %v1267
    %3119 = vmatpush.bf16.msra.mxu0 %v1263
    %3120 = vmatpush.bf16.msra.mxu0 %v1259
    %3121 = vmatpush.bf16.msra.mxu0 %v1255
    %3122 = vmatpush.bf16.msra.mxu0 %v1251
    %3123 = vmatmul.bf16.gmra.mxu0 %v3049
    %v3124 = vpop.f32.mrf.mxu0
    %v3125 = vadd.f32 %v3112, %v3124
    %v3126 = vpop.f32.mrf.mxu0
    %3127 = vdwg.mxu0
    %3128 = vmatpush.bf16.msra.mxu0 %v1248
    %3129 = vmatpush.bf16.msra.mxu0 %v1244
    %3130 = vmatpush.bf16.msra.mxu0 %v1240
    %3131 = vmatpush.bf16.msra.mxu0 %v1236
    %3132 = vmatpush.bf16.msra.mxu0 %v1232
    %3133 = vmatpush.bf16.msra.mxu0 %v1228
    %3134 = vmatpush.bf16.msra.mxu0 %v1224
    %3135 = vmatpush.bf16.msra.mxu0 %v1220
    %3136 = vmatmul.bf16.gmra.mxu0 %v3048
    %v3137 = vpop.f32.mrf.mxu0
    %v3138 = vadd.f32 0.0, %v3137
    %v3139 = vpop.f32.mrf.mxu0
    %3140 = vdwg.mxu0
    %3141 = vmatpush.bf16.msra.mxu0 %v1280
    %3142 = vmatpush.bf16.msra.mxu0 %v1276
    %3143 = vmatpush.bf16.msra.mxu0 %v1272
    %3144 = vmatpush.bf16.msra.mxu0 %v1268
    %3145 = vmatpush.bf16.msra.mxu0 %v1264
    %3146 = vmatpush.bf16.msra.mxu0 %v1260
    %3147 = vmatpush.bf16.msra.mxu0 %v1256
    %3148 = vmatpush.bf16.msra.mxu0 %v1252
    %3149 = vmatmul.bf16.gmra.mxu0 %v3049
    %v3150 = vpop.f32.mrf.mxu0
    %v3151 = vadd.f32 %v3138, %v3150
    %v3152 = vpop.f32.mrf.mxu0
    %3153 = vdwg.mxu0
    %v3154 = vadd.f32 %v3073, %v1450
    %v3155 = vadd.f32 %v3099, %v1451
    %v3156 = vsub.f32 0.0, %v3154
    %v3157 = vsub.f32 0.0, %v3155
    %v3158 = vmul.f32 %v3156, 1.442695
    %v3159 = vpow.pop %v3158
    %v3160 = vmul.f32 %v3157, 1.442695
    %v3161 = vpow.pop %v3160
    %v3162 = vadd.f32 %v3159, 1.0
    %v3163 = vadd.f32 %v3161, 1.0
    %v3164 = vrcp.pop %v3162
    %v3165 = vmul.f32 %v3162, %v3164
    %v3166 = vsub.f32 1.0, %v3165
    %v3167 = vmul.f32 %v3164, %v3166
    %v3168 = vadd.f32 %v3164, %v3167
    %vm3169 = vweird.f32 %v3162
    %vm3170 = vweird.f32 %v3164
    %vm3171 = vmor %vm3169, %vm3170
    %v3172 = vsel %vm3171, %v3164, %v3168
    %v3173 = vand.u32 2147483647, %v3162
    %vm3174 = vcmp.eq.f32.partialorder %v3173, 8.507059e+37
    %v3175 = vand.u32 %v3162, 2147483648
    %v3176 = vor.u32 1.1754944e-38, %v3175
    %v3177 = vsel %vm3174, %v3176, %v3172
    %v3178 = vmul.f32 1.0, %v3177
    %v3179 = vrcp.pop %v3163
    %v3180 = vmul.f32 %v3163, %v3179
    %v3181 = vsub.f32 1.0, %v3180
    %v3182 = vmul.f32 %v3179, %v3181
    %v3183 = vadd.f32 %v3179, %v3182
    %vm3184 = vweird.f32 %v3163
    %vm3185 = vweird.f32 %v3179
    %vm3186 = vmor %vm3184, %vm3185
    %v3187 = vsel %vm3186, %v3179, %v3183
    %v3188 = vand.u32 2147483647, %v3163
    %vm3189 = vcmp.eq.f32.partialorder %v3188, 8.507059e+37
    %v3190 = vand.u32 %v3163, 2147483648
    %v3191 = vor.u32 1.1754944e-38, %v3190
    %v3192 = vsel %vm3189, %v3191, %v3187
    %v3193 = vmul.f32 1.0, %v3192
    %v3194 = vadd.f32 %v3125, %v1495
    %v3195 = vadd.f32 %v3151, %v1499
    %v3196 = vmul.f32 %v3178, %v3195
    %v3197 = vadd.f32 %v3194, %v3196
    %v3198 = vtanh.pop %v3197
    %v3199 = vsub.f32 1.0, %v3193
    %v3200 = vmul.f32 %v3199, %v3198
    %v3201 = vmul.f32 %v3193, %v2960
    %v3202 = vadd.f32 %v3200, %v3201
    %v3203 = vpack.c.bf16 %v1750, %v1508
    %v3204 = vpack.c.bf16 %v2234, %v1992
    %v3205 = vpack.c.bf16 %v2718, %v2476
    %v3206 = vpack.c.bf16 %v3202, %v2960
    %v3207 = vld [vmem:[#allocation8] sm:$0xff]
    %v3208 = vld [vmem:[#allocation8 + $0x8] sm:$0xff]
    %v3209 = vld [vmem:[#allocation8 + $0x10] sm:$0xff]
    %v3210 = vld [vmem:[#allocation8 + $0x18] sm:$0xff]
    %v3211 = vld [vmem:[#allocation8 + $0x20] sm:$0xff]
    %v3212 = vld [vmem:[#allocation8 + $0x28] sm:$0xff]
    %v3213 = vld [vmem:[#allocation8 + $0x30] sm:$0xff]
    %v3214 = vld [vmem:[#allocation8 + $0x38] sm:$0xff]
    %v3215 = vld [vmem:[#allocation8 + $0x40] sm:$0xff]
    %v3216 = vld [vmem:[#allocation8 + $0x48] sm:$0xff]
    %v3217 = vld [vmem:[#allocation8 + $0x50] sm:$0xff]
    %v3218 = vld [vmem:[#allocation8 + $0x58] sm:$0xff]
    %v3219 = vld [vmem:[#allocation8 + $0x60] sm:$0xff]
    %v3220 = vld [vmem:[#allocation8 + $0x68] sm:$0xff]
    %v3221 = vld [vmem:[#allocation8 + $0x70] sm:$0xff]
    %v3222 = vld [vmem:[#allocation8 + $0x78] sm:$0xff]
    %v3223 = vld [vmem:[%s11] sm:$0x3]
    %v3225 = vperm.slane %v3223, 0
    %v3226 = vperm.slane %v3223, 1
    %v3245 = vunpack.c.l.b16 %v3207
    %v3246 = vunpack.c.h.b16 %v3207
    %v3247 = vunpack.c.l.b16 %v3208
    %v3248 = vunpack.c.h.b16 %v3208
    %v3249 = vunpack.c.l.b16 %v3209
    %v3250 = vunpack.c.h.b16 %v3209
    %v3251 = vunpack.c.l.b16 %v3210
    %v3252 = vunpack.c.h.b16 %v3210
    %v3253 = vunpack.c.l.b16 %v3211
    %v3254 = vunpack.c.h.b16 %v3211
    %v3255 = vunpack.c.l.b16 %v3212
    %v3256 = vunpack.c.h.b16 %v3212
    %v3257 = vunpack.c.l.b16 %v3213
    %v3258 = vunpack.c.h.b16 %v3213
    %v3259 = vunpack.c.l.b16 %v3214
    %v3260 = vunpack.c.h.b16 %v3214
    %v3261 = vunpack.c.l.b16 %v3215
    %v3262 = vunpack.c.h.b16 %v3215
    %v3263 = vunpack.c.l.b16 %v3216
    %v3264 = vunpack.c.h.b16 %v3216
    %v3265 = vunpack.c.l.b16 %v3217
    %v3266 = vunpack.c.h.b16 %v3217
    %v3267 = vunpack.c.l.b16 %v3218
    %v3268 = vunpack.c.h.b16 %v3218
    %v3269 = vunpack.c.l.b16 %v3219
    %v3270 = vunpack.c.h.b16 %v3219
    %v3271 = vunpack.c.l.b16 %v3220
    %v3272 = vunpack.c.h.b16 %v3220
    %v3273 = vunpack.c.l.b16 %v3221
    %v3274 = vunpack.c.h.b16 %v3221
    %v3275 = vunpack.c.l.b16 %v3222
    %v3276 = vunpack.c.h.b16 %v3222
    %v3277 = vpack.c.b16 %v3247, %v3245
    %v3278 = vpack.c.b16 %v3248, %v3246
    %v3279 = vpack.c.b16 %v3251, %v3249
    %v3280 = vpack.c.b16 %v3252, %v3250
    %v3281 = vpack.c.b16 %v3255, %v3253
    %v3282 = vpack.c.b16 %v3256, %v3254
    %v3283 = vpack.c.b16 %v3259, %v3257
    %v3284 = vpack.c.b16 %v3260, %v3258
    %v3285 = vpack.c.b16 %v3263, %v3261
    %v3286 = vpack.c.b16 %v3264, %v3262
    %v3287 = vpack.c.b16 %v3267, %v3265
    %v3288 = vpack.c.b16 %v3268, %v3266
    %v3289 = vpack.c.b16 %v3271, %v3269
    %v3290 = vpack.c.b16 %v3272, %v3270
    %v3291 = vpack.c.b16 %v3275, %v3273
    %v3292 = vpack.c.b16 %v3276, %v3274
    %3309 = vmatpush.bf16.msra.mxu0 %v3291
    %3310 = vmatpush.bf16.msra.mxu0 %v3289
    %3311 = vmatpush.bf16.msra.mxu0 %v3287
    %3312 = vmatpush.bf16.msra.mxu0 %v3285
    %3313 = vmatpush.bf16.msra.mxu0 %v3283
    %3314 = vmatpush.bf16.msra.mxu0 %v3281
    %3315 = vmatpush.bf16.msra.mxu0 %v3279
    %3316 = vmatpush.bf16.msra.mxu0 %v3277
    %3317 = vmatmul.bf16.gmra.mxu0 %v3203
    %v3318 = vpop.f32.mrf.mxu0
    %v3319 = vadd.f32 %v3225, %v3318
    %v3320 = vpop.f32.mrf.mxu0
    %v3321 = vadd.f32 %v3225, %v3320
    %3322 = vmatmul.bf16.gmra.mxu0 %v3204
    %v3323 = vpop.f32.mrf.mxu0
    %v3324 = vadd.f32 %v3225, %v3323
    %v3325 = vpop.f32.mrf.mxu0
    %v3326 = vadd.f32 %v3225, %v3325
    %3327 = vmatmul.bf16.gmra.mxu0 %v3205
    %v3328 = vpop.f32.mrf.mxu0
    %v3329 = vadd.f32 %v3225, %v3328
    %v3330 = vpop.f32.mrf.mxu0
    %v3331 = vadd.f32 %v3225, %v3330
    %3332 = vmatmul.bf16.gmra.mxu0 %v3206
    %v3333 = vpop.f32.mrf.mxu0
    %v3334 = vadd.f32 %v3225, %v3333
    %v3335 = vpop.f32.mrf.mxu0
    %v3336 = vadd.f32 %v3225, %v3335
    %3337 = vdwg.mxu0
    %3338 = vmatpush.bf16.msra.mxu0 %v3292
    %3339 = vmatpush.bf16.msra.mxu0 %v3290
    %3340 = vmatpush.bf16.msra.mxu0 %v3288
    %3341 = vmatpush.bf16.msra.mxu0 %v3286
    %3342 = vmatpush.bf16.msra.mxu0 %v3284
    %3343 = vmatpush.bf16.msra.mxu0 %v3282
    %3344 = vmatpush.bf16.msra.mxu0 %v3280
    %3345 = vmatpush.bf16.msra.mxu0 %v3278
    %3346 = vmatmul.bf16.gmra.mxu0 %v3203
    %v3347 = vpop.f32.mrf.mxu0
    %v3348 = vadd.f32 %v3226, %v3347
    %v3349 = vpop.f32.mrf.mxu0
    %v3350 = vadd.f32 %v3226, %v3349
    %3351 = vmatmul.bf16.gmra.mxu0 %v3204
    %v3352 = vpop.f32.mrf.mxu0
    %v3353 = vadd.f32 %v3226, %v3352
    %v3354 = vpop.f32.mrf.mxu0
    %v3355 = vadd.f32 %v3226, %v3354
    %3356 = vmatmul.bf16.gmra.mxu0 %v3205
    %v3357 = vpop.f32.mrf.mxu0
    %v3358 = vadd.f32 %v3226, %v3357
    %v3359 = vpop.f32.mrf.mxu0
    %v3360 = vadd.f32 %v3226, %v3359
    %3361 = vmatmul.bf16.gmra.mxu0 %v3206
    %v3362 = vpop.f32.mrf.mxu0
    %v3363 = vadd.f32 %v3226, %v3362
    %v3364 = vpop.f32.mrf.mxu0
    %v3365 = vadd.f32 %v3226, %v3364
    %3366 = vdwg.mxu0
    %3367 = vst [vmem:[#allocation10] sm:$0xff] %v3319
    %3368 = vst [vmem:[#allocation10 + $0x8] sm:$0xff] %v3348
    %3369 = vst [vmem:[#allocation10 + $0x10] sm:$0xff] %v3321
    %3370 = vst [vmem:[#allocation10 + $0x18] sm:$0xff] %v3350
    %3371 = vst [vmem:[#allocation10 + $0x20] sm:$0xff] %v3324
    %3372 = vst [vmem:[#allocation10 + $0x28] sm:$0xff] %v3353
    %3373 = vst [vmem:[#allocation10 + $0x30] sm:$0xff] %v3326
    %3374 = vst [vmem:[#allocation10 + $0x38] sm:$0xff] %v3355
    %3375 = vst [vmem:[#allocation10 + $0x40] sm:$0xff] %v3329
    %3376 = vst [vmem:[#allocation10 + $0x48] sm:$0xff] %v3358
    %3377 = vst [vmem:[#allocation10 + $0x50] sm:$0xff] %v3331
    %3378 = vst [vmem:[#allocation10 + $0x58] sm:$0xff] %v3360
    %3379 = vst [vmem:[#allocation10 + $0x60] sm:$0xff] %v3334
    %3380 = vst [vmem:[#allocation10 + $0x68] sm:$0xff] %v3363
    %3381 = vst [vmem:[#allocation10 + $0x70] sm:$0xff] %v3336
    %3382 = vst [vmem:[#allocation10 + $0x78] sm:$0xff] %v3365
    %3383 = vst [vmem:[#allocation11] sm:$0xff] %v3047
    %s3384 = scalar_lea.vmem [#allocation11], 8
    %3385 = vst [vmem:[%s3384] sm:$0xff] %v3202
    // Predicated region
    $region66: #{rnn_decoder_decode.1} parent=1 // pred_check
      _
    $region67: #{rnn_decoder_decode.1} parent=1 // pred_check_branch
      %3387 = sbr.rel (0) target = $region69
    $region68: #{rnn_decoder_decode.1} parent=1 // pred_region
      %3389 = vsyncadd [#allocation4], 0
      %s3390 = sshll.u32 [#allocation10], 4
      %s3391 = int_to_ptr.vmem [resolvable:$true] %s3390
      %s3392 = sshll.u32 %s12, 4
      %s3393 = int_to_ptr.hbm [resolvable:$true] %s3392
      %3398 = dma.vmem_to_hbm [thread:$0]  %s3391, 2048, %s3393, [#allocation4], 256, 256, 16
    $region69: #{rnn_decoder_decode.1} parent=1 // pred_fallthru
      _
    // Predicated region
    $region70: #{rnn_decoder_decode.1} parent=1 // pred_check
      _
    $region71: #{rnn_decoder_decode.1} parent=1 // pred_check_branch
      %3400 = sbr.rel (0) target = $region73
    $region72: #{rnn_decoder_decode.1} parent=1 // pred_region
      %3402 = vsyncadd [#allocation12], 0
      %s3403 = sshll.u32 [#allocation11], 4
      %s3404 = int_to_ptr.vmem [resolvable:$true] %s3403
      %s3405 = sshll.u32 %s13, 4
      %s3406 = int_to_ptr.hbm [resolvable:$true] %s3405
      %3411 = dma.vmem_to_hbm [thread:$0]  %s3404, 256, %s3406, [#allocation12], 128, 128, 8
    $region73: #{rnn_decoder_decode.1} parent=1 // pred_fallthru
      _
    // Predicated region
    $region74: #{rnn_decoder_decode.1} parent=1 // pred_check
      _
    $region75: #{rnn_decoder_decode.1} parent=1 // pred_check_branch
      %3413 = sbr.rel (0) target = $region77
    $region76: #{rnn_decoder_decode.1} parent=1 // pred_region
      %3415 = dma.done [#allocation4], 2048
    $region77: #{rnn_decoder_decode.1} parent=1 // pred_fallthru
      _
    // Predicated region
    $region78: #{rnn_decoder_decode.1} parent=1 // pred_check
      _
    $region79: #{rnn_decoder_decode.1} parent=1 // pred_check_branch
      %3417 = sbr.rel (0) target = $region81
    $region80: #{rnn_decoder_decode.1} parent=1 // pred_region
      %3419 = dma.done [#allocation12], 256
    $region81: #{rnn_decoder_decode.1} parent=1 // pred_fallthru
      _
    %3420 = vsyncpa [#allocation3], 1
    %3421 = vsyncpa [#allocation6], 1
    %3422 = vsyncpa [#allocation9], 1
    %3423 = vsyncpa [#allocation4], 1
    %3424 = vsyncpa [#allocation12], 1

</llo_original>
